<compile_context>
chip_gen: v6e
topology: v6e:2x2x1
jax: 0.10.0
libtpu: 0.0.40
codegen_flags: <defaults>
</compile_context>

<pallas_src>
import jax
import jax.numpy as jnp
from jax import lax
from jax.experimental import pallas as pl
from jax.experimental.pallas import tpu as pltpu


# ----------------------------------------------------------------------------
# Fused kernel: head-batched QKV projections + joint attention + out projection
# ----------------------------------------------------------------------------
def _make_fused_kernel(num_inputs, seq_lens, dims, heads, dim_head,
                       batch_block, d_pad, mxu_dtype):
    offsets = []
    off = 0
    for n in seq_lens:
        offsets.append(off)
        off += n

    def kernel(*refs):
        m = num_inputs
        x_refs = refs[0 * m: 1 * m]      # (Bb, n_i, d_i)
        wq_refs = refs[1 * m: 2 * m]     # (H, d_i, Dh)   bf16, scale pre-folded
        wk_refs = refs[2 * m: 3 * m]     # (H, d_i, Dh)   bf16
        wv_refs = refs[3 * m: 4 * m]     # (H, d_i, Dh)   bf16
        wo_refs = refs[4 * m: 5 * m]     # (H, Dh, d_pad) bf16, zero-padded cols
        out_ref = refs[5 * m]            # (Bb, N_total, d_pad)
        k_scr = refs[5 * m + 1]          # (H*Bb, N_total, Dh) f32 scratch
        v_scr = refs[5 * m + 2]          # (H*Bb, N_total, Dh) f32 scratch

        Bb, H, Dh = batch_block, heads, dim_head

        # ---- phase 1: per-modality, head-batched QKV projections -----------
        # One batched dot_general per projection (batch dim = heads); K/V are
        # scattered into the joint scratch with sublane-aligned row stores.
        q_per_mod = []
        for i in range(m):
            n_i, d_i, off_i = seq_lens[i], dims[i], offsets[i]
            xf = x_refs[i][...].reshape(Bb * n_i, d_i).astype(mxu_dtype)
            xb = jnp.broadcast_to(xf[None], (H, Bb * n_i, d_i))   # hoisted, reused 3x
            dn = (((2,), (1,)), ((0,), (0,)))                     # contract d_i, batch H
            q_i = lax.dot_general(xb, wq_refs[i][...], dn,
                                  preferred_element_type=jnp.float32)
            k_i = lax.dot_general(xb, wk_refs[i][...], dn,
                                  preferred_element_type=jnp.float32)
            v_i = lax.dot_general(xb, wv_refs[i][...], dn,
                                  preferred_element_type=jnp.float32)
            # (H, Bb*n_i, Dh) -> (H*Bb, n_i, Dh): order-preserving, n_i % 8 == 0
            k_scr[:, off_i:off_i + n_i, :] = k_i.reshape(H * Bb, n_i, Dh)
            v_scr[:, off_i:off_i + n_i, :] = v_i.reshape(H * Bb, n_i, Dh)
            q_per_mod.append(q_i)

        # joint K/V read once; MXU operands cast to bf16, accumulation in f32
        k_all = k_scr[...].astype(mxu_dtype)
        v_all = v_scr[...].astype(mxu_dtype)

        # ---- phase 2: joint attention + per-head out projection -------------
        # masks=None path: all-True mask == no masking -> plain softmax.
        for i in range(m):
            n_i, off_i = seq_lens[i], offsets[i]
            qh = q_per_mod[i].reshape(H * Bb, n_i, Dh).astype(mxu_dtype)
            # scores: contract last dims directly (no explicit k transpose);
            # softmax scale already folded into W_q.
            s = lax.dot_general(qh, k_all, (((2,), (2,)), ((0,), (0,))),
                                preferred_element_type=jnp.float32)   # (H*Bb, n_i, N)
            s = s - jnp.max(s, axis=-1, keepdims=True)
            p = jnp.exp(s)
            inv_l = pl.reciprocal(jnp.sum(p, axis=-1, keepdims=True), approx=True)
            o = lax.dot_general(p.astype(mxu_dtype), v_all,
                                (((2,), (1,)), ((0,), (0,))),
                                preferred_element_type=jnp.float32)   # (H*Bb, n_i, Dh)
            o = o * inv_l                                             # normalize (rows, Dh)
            # merge heads via per-head out-projection + sum over the head axis
            # (mathematically identical to concat(heads) @ W_out, no lane relayout)
            o = o.reshape(H, Bb * n_i, Dh).astype(mxu_dtype)
            y = lax.dot_general(o, wo_refs[i][...], (((2,), (1,)), ((0,), (0,))),
                                preferred_element_type=jnp.float32)   # (H, Bb*n_i, d_pad)
            y = jnp.sum(y, axis=0)                                    # (Bb*n_i, d_pad)
            # lane-dense full-width store into the merged output slab
            out_ref[:, off_i:off_i + n_i, :] = (
                y.reshape(Bb, n_i, d_pad).astype(out_ref.dtype))

    return kernel


def _choose_batch_block(B, n_total, *, target_rows=256, min_rows_for_split=128):
    """Fold batch elements into the matmul M dimension.

    Picks the largest divisor of B whose folded row count stays near
    `target_rows`.  When B is large enough that each step would still feed the
    MXU >= `min_rows_for_split` rows, keep >=2 grid steps so both v7x
    TensorCores get work; otherwise prefer the bigger M per step.
    """
    want = max(1, target_rows // max(n_total, 1))
    bb = max(d for d in range(1, B + 1) if B % d == 0 and d <= want)
    if B // bb < 2 and B >= 2:
        alts = [d for d in range(1, B) if B % d == 0 and B // d >= 2]
        if alts and max(alts) * n_total >= min_rows_for_split:
            bb = max(alts)
    return bb


def joint_attention_forward(inputs, prepared, *, dim_head, heads,
                            batch_block=None, mxu_dtype=jnp.bfloat16):
    """inputs: tuple of (B, n_i, d_i) arrays; prepared: kernel-layout weights."""
    B = int(inputs[0].shape[0])
    m = len(inputs)
    seq_lens = tuple(int(x.shape[1]) for x in inputs)
    dims = tuple(int(x.shape[2]) for x in inputs)
    n_total = sum(seq_lens)
    d_pad = int(prepared["d_pad"])
    out_dtype = inputs[0].dtype

    if batch_block is None:
        batch_block = _choose_batch_block(B, n_total)
    assert B % batch_block == 0
    num_blocks = B // batch_block

    kernel = _make_fused_kernel(m, seq_lens, dims, heads, dim_head,
                                batch_block, d_pad, mxu_dtype)

    in_specs = []
    # activations: one batch block per grid step
    for n_i, d_i in zip(seq_lens, dims):
        in_specs.append(pl.BlockSpec((batch_block, n_i, d_i), lambda b: (b, 0, 0)))
    # weights: full blocks, batch-invariant (same block index every step)
    weight_args = (list(prepared["w_q"]) + list(prepared["w_k"])
                   + list(prepared["w_v"]) + list(prepared["w_out"]))
    for w in weight_args:
        in_specs.append(pl.BlockSpec(w.shape, lambda b: (0, 0, 0)))

    out_shape = jax.ShapeDtypeStruct((B, n_total, d_pad), out_dtype)
    out_specs = pl.BlockSpec((batch_block, n_total, d_pad), lambda b: (b, 0, 0))

    scratch_shapes = [
        pltpu.VMEM((heads * batch_block, n_total, dim_head), jnp.float32),  # joint K
        pltpu.VMEM((heads * batch_block, n_total, dim_head), jnp.float32),  # joint V
    ]

    slab = pl.pallas_call(
        kernel,
        out_shape=out_shape,
        grid=(num_blocks,),
        in_specs=in_specs,
        out_specs=out_specs,
        scratch_shapes=scratch_shapes,
        compiler_params=pltpu.CompilerParams(
            # batch-block axis is independent -> shards across v7x's 2 TensorCores
            dimension_semantics=("parallel",),
            vmem_limit_bytes=32 * 1024 * 1024,
        ),
    )(*(list(inputs) + weight_args))

    # split the lane-dense slab back into the per-modality outputs
    outs, off = [], 0
    for n_i, d_i in zip(seq_lens, dims):
        outs.append(slab[:, off:off + n_i, :d_i])
        off += n_i
    return tuple(outs)


# ----------------------------------------------------------------------------
# Parameter init (PyTorch nn.Linear layout) + one-time kernel-layout prep
# ----------------------------------------------------------------------------
def init_joint_attention_params(key, dim_inputs, dim_head, heads):
    dim_inner = dim_head * heads
    w_qkv, w_out = [], []
    for dim_in in dim_inputs:
        key, k1, k2 = jax.random.split(key, 3)
        # nn.Linear(dim_in, 3*dim_inner, bias=False): weight (out_features, in_features)
        w_qkv.append(jax.random.normal(k1, (3 * dim_inner, dim_in), jnp.float32)
                     * (dim_in ** -0.5))
        # nn.Linear(dim_inner, dim_in, bias=False)
        w_out.append(jax.random.normal(k2, (dim_in, dim_inner), jnp.float32)
                     * (dim_inner ** -0.5))
    return {"w_qkv": w_qkv, "w_out": w_out}


def prepare_params_for_kernel(params, *, dim_head, heads,
                              weight_dtype=jnp.bfloat16, lane_multiple=128):
    """One-time weight relayout (no per-call transposes in the forward path).

    PyTorch layout: w_qkv (3*H*Dh, d_in) with output rows ordered (qkv, h, d);
                    w_out (d_in, H*Dh) with input columns ordered (h, d).
    Kernel layout:  w_q/w_k/w_v per head -> (H, d_in, Dh), softmax scale folded
                    into w_q; w_out per head -> (H, Dh, d_pad), zero-padded to a
                    128-lane multiple so kernel output stores are lane-dense.
    """
    scale = dim_head ** -0.5
    d_outs = [int(w.shape[0]) for w in params["w_out"]]
    d_pad = -(-max(d_outs) // lane_multiple) * lane_multiple

    w_q, w_k, w_v, w_o = [], [], [], []
    for wqkv, wo in zip(params["w_qkv"], params["w_out"]):
        d_in = int(wqkv.shape[1])
        w3 = jnp.asarray(wqkv).reshape(3, heads, dim_head, d_in)      # (qkv, h, d, in)
        w_q.append((jnp.transpose(w3[0], (0, 2, 1)) * scale).astype(weight_dtype))
        w_k.append(jnp.transpose(w3[1], (0, 2, 1)).astype(weight_dtype))
        w_v.append(jnp.transpose(w3[2], (0, 2, 1)).astype(weight_dtype))
        wo_h = jnp.asarray(wo).T.reshape(heads, dim_head, d_in)       # (h, d, out)
        wo_h = jnp.pad(wo_h, ((0, 0), (0, 0), (0, d_pad - d_in)))
        w_o.append(wo_h.astype(weight_dtype))
    return {"w_q": w_q, "w_k": w_k, "w_v": w_v, "w_out": w_o, "d_pad": d_pad}


# ----------------------------------------------------------------------------
# Pure-JAX reference (PyTorch-layout f32 weights) for the correctness check
# ----------------------------------------------------------------------------
def joint_attention_ref(inputs, params, *, dim_head, heads):
    dim_inner = dim_head * heads
    qs, ks, vs = [], [], []
    for x, w in zip(inputs, params["w_qkv"]):
        b, n, d = x.shape
        y = (x @ w.T).reshape(b, n, 3, heads, dim_head)
        y = jnp.transpose(y, (2, 0, 3, 1, 4))                      # (3, b, h, n, d)
        qs.append(y[0]); ks.append(y[1]); vs.append(y[2])
    q = jnp.concatenate(qs, axis=2)
    k = jnp.concatenate(ks, axis=2)
    v = jnp.concatenate(vs, axis=2)
    s = jnp.einsum("bhid,bhjd->bhij", q, k) * (dim_head ** -0.5)
    p = jax.nn.softmax(s, axis=-1)
    o = jnp.einsum("bhij,bhjd->bhid", p, v)
    o = jnp.transpose(o, (0, 2, 1, 3)).reshape(q.shape[0], -1, dim_inner)
    outs, start = [], 0
    for x, w in zip(inputs, params["w_out"]):
        n = x.shape[1]
        outs.append(o[:, start:start + n] @ w.T)
        start += n
    return tuple(outs)


# ----------------------------------------------------------------------------
if __name__ == "__main__":
    B = 2
    heads = 4
    dim_head = 16
    dim_inputs = (32, 16)
    seq_lens = (8, 8)

    key = jax.random.PRNGKey(0)
    key, kp = jax.random.split(key)
    params = init_joint_attention_params(kp, dim_inputs, dim_head, heads)
    prepared = prepare_params_for_kernel(params, dim_head=dim_head, heads=heads)

    inputs = []
    for d, n in zip(dim_inputs, seq_lens):
        key, kx = jax.random.split(key)
        inputs.append(jax.random.normal(kx, (B, n, d), jnp.float32))
    inputs = tuple(inputs)

    outs = joint_attention_forward(inputs, prepared, dim_head=dim_head, heads=heads)
    outs = jax.block_until_ready(outs)

    refs = joint_attention_ref(inputs, params, dim_head=dim_head, heads=heads)
    for o, r in zip(outs, refs):
        assert o.shape == r.shape, (o.shape, r.shape)
        err = float(jnp.max(jnp.abs(o - r)))
        scale = float(jnp.max(jnp.abs(r)))
        # bf16 MXU operands + EUP approximate reciprocal -> relative tolerance
        assert err <= 2e-2 * max(scale, 1e-3), f"max abs err {err} (out scale {scale})"

    print("KERNEL_OK")
</pallas_src>

<mosaic_0001>
module attributes {stable_mosaic.version = 11 : i64} {
  func.func @kernel(%arg0: i32, %arg1: memref<2x8x32xf32, #tpu.memory_space<vmem>>, %arg2: memref<2x8x16xf32, #tpu.memory_space<vmem>>, %arg3: memref<4x32x16xbf16, #tpu.memory_space<vmem>>, %arg4: memref<4x16x16xbf16, #tpu.memory_space<vmem>>, %arg5: memref<4x32x16xbf16, #tpu.memory_space<vmem>>, %arg6: memref<4x16x16xbf16, #tpu.memory_space<vmem>>, %arg7: memref<4x32x16xbf16, #tpu.memory_space<vmem>>, %arg8: memref<4x16x16xbf16, #tpu.memory_space<vmem>>, %arg9: memref<4x16x128xbf16, #tpu.memory_space<vmem>>, %arg10: memref<4x16x128xbf16, #tpu.memory_space<vmem>>, %arg11: memref<2x16x128xf32, #tpu.memory_space<vmem>>, %arg12: memref<8x16x16xf32, #tpu.memory_space<vmem>>, %arg13: memref<8x16x16xf32, #tpu.memory_space<vmem>>) attributes {dimension_semantics = [#tpu.dimension_semantics<parallel>], iteration_bounds = array<i64: 1>, scalar_prefetch = 0 : i64, scratch_operands = 2 : i64, tpu.core_type = #tpu.core_type<tc>, window_params = [{transform_indices = @transform_0, window_bounds = array<i64: 2, 8, 32>}, {transform_indices = @transform_1, window_bounds = array<i64: 2, 8, 16>}, {pipeline_mode = #tpu.pipeline_mode<synchronous>, transform_indices = @transform_2, window_bounds = array<i64: 4, 32, 16>}, {pipeline_mode = #tpu.pipeline_mode<synchronous>, transform_indices = @transform_3, window_bounds = array<i64: 4, 16, 16>}, {pipeline_mode = #tpu.pipeline_mode<synchronous>, transform_indices = @transform_4, window_bounds = array<i64: 4, 32, 16>}, {pipeline_mode = #tpu.pipeline_mode<synchronous>, transform_indices = @transform_5, window_bounds = array<i64: 4, 16, 16>}, {pipeline_mode = #tpu.pipeline_mode<synchronous>, transform_indices = @transform_6, window_bounds = array<i64: 4, 32, 16>}, {pipeline_mode = #tpu.pipeline_mode<synchronous>, transform_indices = @transform_7, window_bounds = array<i64: 4, 16, 16>}, {pipeline_mode = #tpu.pipeline_mode<synchronous>, transform_indices = @transform_8, window_bounds = array<i64: 4, 16, 128>}, {pipeline_mode = #tpu.pipeline_mode<synchronous>, transform_indices = @transform_9, window_bounds = array<i64: 4, 16, 128>}, {transform_indices = @transform_10, window_bounds = array<i64: 2, 16, 128>}]} {
    %c0 = arith.constant 0 : index
    %c0_0 = arith.constant 0 : index
    %c0_1 = arith.constant 0 : index
    %0 = vector.load %arg1[%c0, %c0_0, %c0_1] : memref<2x8x32xf32, #tpu.memory_space<vmem>>, vector<2x8x32xf32>
    %1 = vector.shape_cast %0 : vector<2x8x32xf32> to vector<16x32xf32>
    %2 = arith.truncf %1 : vector<16x32xf32> to vector<16x32xbf16>
    %3 = vector.shape_cast %2 : vector<16x32xbf16> to vector<1x16x32xbf16>
    %4 = vector.shape_cast %3 : vector<1x16x32xbf16> to vector<1x16x32xbf16>
    %5 = vector.broadcast %4 : vector<1x16x32xbf16> to vector<4x16x32xbf16>
    %c0_2 = arith.constant 0 : index
    %c0_3 = arith.constant 0 : index
    %c0_4 = arith.constant 0 : index
    %6 = vector.load %arg3[%c0_2, %c0_3, %c0_4] : memref<4x32x16xbf16, #tpu.memory_space<vmem>>, vector<4x32x16xbf16>
    %cst = arith.constant dense<0.000000e+00> : vector<4x16x16xf32>
    %7 = tpu.matmul %5, %6, %cst {dimension_numbers = #tpu.dot_dimension_numbers<[2], [1], [1], [2], [0, 0, 0, 1, 1, 2], [0], [0]>} : vector<4x16x32xbf16>, vector<4x32x16xbf16>, vector<4x16x16xf32> -> vector<4x16x16xf32>
    %c0_5 = arith.constant 0 : index
    %c0_6 = arith.constant 0 : index
    %c0_7 = arith.constant 0 : index
    %8 = vector.load %arg5[%c0_5, %c0_6, %c0_7] : memref<4x32x16xbf16, #tpu.memory_space<vmem>>, vector<4x32x16xbf16>
    %cst_8 = arith.constant dense<0.000000e+00> : vector<4x16x16xf32>
    %9 = tpu.matmul %5, %8, %cst_8 {dimension_numbers = #tpu.dot_dimension_numbers<[2], [1], [1], [2], [0, 0, 0, 1, 1, 2], [0], [0]>} : vector<4x16x32xbf16>, vector<4x32x16xbf16>, vector<4x16x16xf32> -> vector<4x16x16xf32>
    %c0_9 = arith.constant 0 : index
    %c0_10 = arith.constant 0 : index
    %c0_11 = arith.constant 0 : index
    %10 = vector.load %arg7[%c0_9, %c0_10, %c0_11] : memref<4x32x16xbf16, #tpu.memory_space<vmem>>, vector<4x32x16xbf16>
    %cst_12 = arith.constant dense<0.000000e+00> : vector<4x16x16xf32>
    %11 = tpu.matmul %5, %10, %cst_12 {dimension_numbers = #tpu.dot_dimension_numbers<[2], [1], [1], [2], [0, 0, 0, 1, 1, 2], [0], [0]>} : vector<4x16x32xbf16>, vector<4x32x16xbf16>, vector<4x16x16xf32> -> vector<4x16x16xf32>
    %12 = vector.shape_cast %9 : vector<4x16x16xf32> to vector<8x8x16xf32>
    %c0_13 = arith.constant 0 : index
    %c0_14 = arith.constant 0 : index
    %c0_15 = arith.constant 0 : index
    %13 = vector.load %arg12[%c0_13, %c0_14, %c0_15] : memref<8x16x16xf32, #tpu.memory_space<vmem>>, vector<8x8x16xf32>
    tpu.vector_store %arg12[%c0_13, %c0_14, %c0_15], %12 {strides = array<i32>} : memref<8x16x16xf32, #tpu.memory_space<vmem>>, vector<8x8x16xf32>,
    %14 = vector.shape_cast %11 : vector<4x16x16xf32> to vector<8x8x16xf32>
    %c0_16 = arith.constant 0 : index
    %c0_17 = arith.constant 0 : index
    %c0_18 = arith.constant 0 : index
    %15 = vector.load %arg13[%c0_16, %c0_17, %c0_18] : memref<8x16x16xf32, #tpu.memory_space<vmem>>, vector<8x8x16xf32>
    tpu.vector_store %arg13[%c0_16, %c0_17, %c0_18], %14 {strides = array<i32>} : memref<8x16x16xf32, #tpu.memory_space<vmem>>, vector<8x8x16xf32>,
    %c0_19 = arith.constant 0 : index
    %c0_20 = arith.constant 0 : index
    %c0_21 = arith.constant 0 : index
    %16 = vector.load %arg2[%c0_19, %c0_20, %c0_21] : memref<2x8x16xf32, #tpu.memory_space<vmem>>, vector<2x8x16xf32>
    %17 = vector.shape_cast %16 : vector<2x8x16xf32> to vector<16x16xf32>
    %18 = arith.truncf %17 : vector<16x16xf32> to vector<16x16xbf16>
    %19 = vector.shape_cast %18 : vector<16x16xbf16> to vector<1x16x16xbf16>
    %20 = vector.shape_cast %19 : vector<1x16x16xbf16> to vector<1x16x16xbf16>
    %21 = vector.broadcast %20 : vector<1x16x16xbf16> to vector<4x16x16xbf16>
    %c0_22 = arith.constant 0 : index
    %c0_23 = arith.constant 0 : index
    %c0_24 = arith.constant 0 : index
    %22 = vector.load %arg4[%c0_22, %c0_23, %c0_24] : memref<4x16x16xbf16, #tpu.memory_space<vmem>>, vector<4x16x16xbf16>
    %cst_25 = arith.constant dense<0.000000e+00> : vector<4x16x16xf32>
    %23 = tpu.matmul %21, %22, %cst_25 {dimension_numbers = #tpu.dot_dimension_numbers<[2], [1], [1], [2], [0, 0, 0, 1, 1, 2], [0], [0]>} : vector<4x16x16xbf16>, vector<4x16x16xbf16>, vector<4x16x16xf32> -> vector<4x16x16xf32>
    %c0_26 = arith.constant 0 : index
    %c0_27 = arith.constant 0 : index
    %c0_28 = arith.constant 0 : index
    %24 = vector.load %arg6[%c0_26, %c0_27, %c0_28] : memref<4x16x16xbf16, #tpu.memory_space<vmem>>, vector<4x16x16xbf16>
    %cst_29 = arith.constant dense<0.000000e+00> : vector<4x16x16xf32>
    %25 = tpu.matmul %21, %24, %cst_29 {dimension_numbers = #tpu.dot_dimension_numbers<[2], [1], [1], [2], [0, 0, 0, 1, 1, 2], [0], [0]>} : vector<4x16x16xbf16>, vector<4x16x16xbf16>, vector<4x16x16xf32> -> vector<4x16x16xf32>
    %c0_30 = arith.constant 0 : index
    %c0_31 = arith.constant 0 : index
    %c0_32 = arith.constant 0 : index
    %26 = vector.load %arg8[%c0_30, %c0_31, %c0_32] : memref<4x16x16xbf16, #tpu.memory_space<vmem>>, vector<4x16x16xbf16>
    %cst_33 = arith.constant dense<0.000000e+00> : vector<4x16x16xf32>
    %27 = tpu.matmul %21, %26, %cst_33 {dimension_numbers = #tpu.dot_dimension_numbers<[2], [1], [1], [2], [0, 0, 0, 1, 1, 2], [0], [0]>} : vector<4x16x16xbf16>, vector<4x16x16xbf16>, vector<4x16x16xf32> -> vector<4x16x16xf32>
    %28 = vector.shape_cast %25 : vector<4x16x16xf32> to vector<8x8x16xf32>
    %c0_34 = arith.constant 0 : index
    %c8 = arith.constant 8 : index
    %c0_35 = arith.constant 0 : index
    %29 = vector.load %arg12[%c0_34, %c8, %c0_35] : memref<8x16x16xf32, #tpu.memory_space<vmem>>, vector<8x8x16xf32>
    tpu.vector_store %arg12[%c0_34, %c8, %c0_35], %28 {strides = array<i32>} : memref<8x16x16xf32, #tpu.memory_space<vmem>>, vector<8x8x16xf32>,
    %30 = vector.shape_cast %27 : vector<4x16x16xf32> to vector<8x8x16xf32>
    %c0_36 = arith.constant 0 : index
    %c8_37 = arith.constant 8 : index
    %c0_38 = arith.constant 0 : index
    %31 = vector.load %arg13[%c0_36, %c8_37, %c0_38] : memref<8x16x16xf32, #tpu.memory_space<vmem>>, vector<8x8x16xf32>
    tpu.vector_store %arg13[%c0_36, %c8_37, %c0_38], %30 {strides = array<i32>} : memref<8x16x16xf32, #tpu.memory_space<vmem>>, vector<8x8x16xf32>,
    %c0_39 = arith.constant 0 : index
    %c0_40 = arith.constant 0 : index
    %c0_41 = arith.constant 0 : index
    %32 = vector.load %arg12[%c0_39, %c0_40, %c0_41] : memref<8x16x16xf32, #tpu.memory_space<vmem>>, vector<8x16x16xf32>
    %33 = arith.truncf %32 : vector<8x16x16xf32> to vector<8x16x16xbf16>
    %c0_42 = arith.constant 0 : index
    %c0_43 = arith.constant 0 : index
    %c0_44 = arith.constant 0 : index
    %34 = vector.load %arg13[%c0_42, %c0_43, %c0_44] : memref<8x16x16xf32, #tpu.memory_space<vmem>>, vector<8x16x16xf32>
    %35 = arith.truncf %34 : vector<8x16x16xf32> to vector<8x16x16xbf16>
    %36 = vector.shape_cast %7 : vector<4x16x16xf32> to vector<8x8x16xf32>
    %37 = arith.truncf %36 : vector<8x8x16xf32> to vector<8x8x16xbf16>
    %cst_45 = arith.constant dense<0.000000e+00> : vector<8x8x16xf32>
    %38 = tpu.matmul %37, %33, %cst_45 {dimension_numbers = #tpu.dot_dimension_numbers<[2], [2], [1], [1], [0, 0, 0, 1, 1, 1], [0], [0]>} : vector<8x8x16xbf16>, vector<8x16x16xbf16>, vector<8x8x16xf32> -> vector<8x8x16xf32>
    %cst_46 = arith.constant dense<0xFF800000> : vector<8x8xf32>
    %39 = vector.multi_reduction <maximumf>, %38, %cst_46 [2] : vector<8x8x16xf32> to vector<8x8xf32>
    %40 = vector.shape_cast %39 : vector<8x8xf32> to vector<8x8x1xf32>
    %41 = vector.broadcast %40 : vector<8x8x1xf32> to vector<8x8x16xf32>
    %42 = arith.subf %38, %41 : vector<8x8x16xf32>
    %43 = math.exp %42 : vector<8x8x16xf32>
    %cst_47 = arith.constant dense<0.000000e+00> : vector<8x8xf32>
    %44 = vector.multi_reduction <add>, %43, %cst_47 [2] : vector<8x8x16xf32> to vector<8x8xf32>
    %45 = vector.shape_cast %44 : vector<8x8xf32> to vector<8x8x1xf32>
    %46 = tpu.reciprocal %45 {approx = true} : vector<8x8x1xf32> -> vector<8x8x1xf32>
    %47 = arith.truncf %43 : vector<8x8x16xf32> to vector<8x8x16xbf16>
    %cst_48 = arith.constant dense<0.000000e+00> : vector<8x8x16xf32>
    %48 = tpu.matmul %47, %35, %cst_48 {dimension_numbers = #tpu.dot_dimension_numbers<[2], [1], [1], [2], [0, 0, 0, 1, 1, 2], [0], [0]>} : vector<8x8x16xbf16>, vector<8x16x16xbf16>, vector<8x8x16xf32> -> vector<8x8x16xf32>
    %49 = vector.broadcast %46 : vector<8x8x1xf32> to vector<8x8x16xf32>
    %50 = arith.mulf %48, %49 : vector<8x8x16xf32>
    %51 = vector.shape_cast %50 : vector<8x8x16xf32> to vector<4x16x16xf32>
    %52 = arith.truncf %51 : vector<4x16x16xf32> to vector<4x16x16xbf16>
    %c0_49 = arith.constant 0 : index
    %c0_50 = arith.constant 0 : index
    %c0_51 = arith.constant 0 : index
    %53 = vector.load %arg9[%c0_49, %c0_50, %c0_51] : memref<4x16x128xbf16, #tpu.memory_space<vmem>>, vector<4x16x128xbf16>
    %cst_52 = arith.constant dense<0.000000e+00> : vector<4x16x128xf32>
    %54 = tpu.matmul %52, %53, %cst_52 {dimension_numbers = #tpu.dot_dimension_numbers<[2], [1], [1], [2], [0, 0, 0, 1, 1, 2], [0], [0]>} : vector<4x16x16xbf16>, vector<4x16x128xbf16>, vector<4x16x128xf32> -> vector<4x16x128xf32>
    %cst_53 = arith.constant dense<0.000000e+00> : vector<16x128xf32>
    %55 = vector.multi_reduction <add>, %54, %cst_53 [0] : vector<4x16x128xf32> to vector<16x128xf32>
    %56 = vector.shape_cast %55 : vector<16x128xf32> to vector<2x8x128xf32>
    %c0_54 = arith.constant 0 : index
    %c0_55 = arith.constant 0 : index
    %c0_56 = arith.constant 0 : index
    %57 = vector.load %arg11[%c0_54, %c0_55, %c0_56] : memref<2x16x128xf32, #tpu.memory_space<vmem>>, vector<2x8x128xf32>
    tpu.vector_store %arg11[%c0_54, %c0_55, %c0_56], %56 {strides = array<i32>} : memref<2x16x128xf32, #tpu.memory_space<vmem>>, vector<2x8x128xf32>,
    %58 = vector.shape_cast %23 : vector<4x16x16xf32> to vector<8x8x16xf32>
    %59 = arith.truncf %58 : vector<8x8x16xf32> to vector<8x8x16xbf16>
    %cst_57 = arith.constant dense<0.000000e+00> : vector<8x8x16xf32>
    %60 = tpu.matmul %59, %33, %cst_57 {dimension_numbers = #tpu.dot_dimension_numbers<[2], [2], [1], [1], [0, 0, 0, 1, 1, 1], [0], [0]>} : vector<8x8x16xbf16>, vector<8x16x16xbf16>, vector<8x8x16xf32> -> vector<8x8x16xf32>
    %cst_58 = arith.constant dense<0xFF800000> : vector<8x8xf32>
    %61 = vector.multi_reduction <maximumf>, %60, %cst_58 [2] : vector<8x8x16xf32> to vector<8x8xf32>
    %62 = vector.shape_cast %61 : vector<8x8xf32> to vector<8x8x1xf32>
    %63 = vector.broadcast %62 : vector<8x8x1xf32> to vector<8x8x16xf32>
    %64 = arith.subf %60, %63 : vector<8x8x16xf32>
    %65 = math.exp %64 : vector<8x8x16xf32>
    %cst_59 = arith.constant dense<0.000000e+00> : vector<8x8xf32>
    %66 = vector.multi_reduction <add>, %65, %cst_59 [2] : vector<8x8x16xf32> to vector<8x8xf32>
    %67 = vector.shape_cast %66 : vector<8x8xf32> to vector<8x8x1xf32>
    %68 = tpu.reciprocal %67 {approx = true} : vector<8x8x1xf32> -> vector<8x8x1xf32>
    %69 = arith.truncf %65 : vector<8x8x16xf32> to vector<8x8x16xbf16>
    %cst_60 = arith.constant dense<0.000000e+00> : vector<8x8x16xf32>
    %70 = tpu.matmul %69, %35, %cst_60 {dimension_numbers = #tpu.dot_dimension_numbers<[2], [1], [1], [2], [0, 0, 0, 1, 1, 2], [0], [0]>} : vector<8x8x16xbf16>, vector<8x16x16xbf16>, vector<8x8x16xf32> -> vector<8x8x16xf32>
    %71 = vector.broadcast %68 : vector<8x8x1xf32> to vector<8x8x16xf32>
    %72 = arith.mulf %70, %71 : vector<8x8x16xf32>
    %73 = vector.shape_cast %72 : vector<8x8x16xf32> to vector<4x16x16xf32>
    %74 = arith.truncf %73 : vector<4x16x16xf32> to vector<4x16x16xbf16>
    %c0_61 = arith.constant 0 : index
    %c0_62 = arith.constant 0 : index
    %c0_63 = arith.constant 0 : index
    %75 = vector.load %arg10[%c0_61, %c0_62, %c0_63] : memref<4x16x128xbf16, #tpu.memory_space<vmem>>, vector<4x16x128xbf16>
    %cst_64 = arith.constant dense<0.000000e+00> : vector<4x16x128xf32>
    %76 = tpu.matmul %74, %75, %cst_64 {dimension_numbers = #tpu.dot_dimension_numbers<[2], [1], [1], [2], [0, 0, 0, 1, 1, 2], [0], [0]>} : vector<4x16x16xbf16>, vector<4x16x128xbf16>, vector<4x16x128xf32> -> vector<4x16x128xf32>
    %cst_65 = arith.constant dense<0.000000e+00> : vector<16x128xf32>
    %77 = vector.multi_reduction <add>, %76, %cst_65 [0] : vector<4x16x128xf32> to vector<16x128xf32>
    %78 = vector.shape_cast %77 : vector<16x128xf32> to vector<2x8x128xf32>
    %c0_66 = arith.constant 0 : index
    %c8_67 = arith.constant 8 : index
    %c0_68 = arith.constant 0 : index
    %79 = vector.load %arg11[%c0_66, %c8_67, %c0_68] : memref<2x16x128xf32, #tpu.memory_space<vmem>>, vector<2x8x128xf32>
    tpu.vector_store %arg11[%c0_66, %c8_67, %c0_68], %78 {strides = array<i32>} : memref<2x16x128xf32, #tpu.memory_space<vmem>>, vector<2x8x128xf32>,
    return
  }
  func.func @transform_0(%arg0: i32) -> (i32, i32, i32) {
    %c0_i32 = arith.constant 0 : i32
    %c0_i32_0 = arith.constant 0 : i32
    %c0_i32_1 = arith.constant 0 : i32
    return %arg0, %c0_i32, %c0_i32_0 : i32, i32, i32
  }
  func.func @transform_1(%arg0: i32) -> (i32, i32, i32) {
    %c0_i32 = arith.constant 0 : i32
    %c0_i32_0 = arith.constant 0 : i32
    %c0_i32_1 = arith.constant 0 : i32
    return %arg0, %c0_i32, %c0_i32_0 : i32, i32, i32
  }
  func.func @transform_2(%arg0: i32) -> (i32, i32, i32) {
    %c0_i32 = arith.constant 0 : i32
    %c0_i32_0 = arith.constant 0 : i32
    %c0_i32_1 = arith.constant 0 : i32
    %c0_i32_2 = arith.constant 0 : i32
    return %c0_i32, %c0_i32_0, %c0_i32_1 : i32, i32, i32
  }
  func.func @transform_3(%arg0: i32) -> (i32, i32, i32) {
    %c0_i32 = arith.constant 0 : i32
    %c0_i32_0 = arith.constant 0 : i32
    %c0_i32_1 = arith.constant 0 : i32
    %c0_i32_2 = arith.constant 0 : i32
    return %c0_i32, %c0_i32_0, %c0_i32_1 : i32, i32, i32
  }
  func.func @transform_4(%arg0: i32) -> (i32, i32, i32) {
    %c0_i32 = arith.constant 0 : i32
    %c0_i32_0 = arith.constant 0 : i32
    %c0_i32_1 = arith.constant 0 : i32
    %c0_i32_2 = arith.constant 0 : i32
    return %c0_i32, %c0_i32_0, %c0_i32_1 : i32, i32, i32
  }
  func.func @transform_5(%arg0: i32) -> (i32, i32, i32) {
    %c0_i32 = arith.constant 0 : i32
    %c0_i32_0 = arith.constant 0 : i32
    %c0_i32_1 = arith.constant 0 : i32
    %c0_i32_2 = arith.constant 0 : i32
    return %c0_i32, %c0_i32_0, %c0_i32_1 : i32, i32, i32
  }
  func.func @transform_6(%arg0: i32) -> (i32, i32, i32) {
    %c0_i32 = arith.constant 0 : i32
    %c0_i32_0 = arith.constant 0 : i32
    %c0_i32_1 = arith.constant 0 : i32
    %c0_i32_2 = arith.constant 0 : i32
    return %c0_i32, %c0_i32_0, %c0_i32_1 : i32, i32, i32
  }
  func.func @transform_7(%arg0: i32) -> (i32, i32, i32) {
    %c0_i32 = arith.constant 0 : i32
    %c0_i32_0 = arith.constant 0 : i32
    %c0_i32_1 = arith.constant 0 : i32
    %c0_i32_2 = arith.constant 0 : i32
    return %c0_i32, %c0_i32_0, %c0_i32_1 : i32, i32, i32
  }
  func.func @transform_8(%arg0: i32) -> (i32, i32, i32) {
    %c0_i32 = arith.constant 0 : i32
    %c0_i32_0 = arith.constant 0 : i32
    %c0_i32_1 = arith.constant 0 : i32
    %c0_i32_2 = arith.constant 0 : i32
    return %c0_i32, %c0_i32_0, %c0_i32_1 : i32, i32, i32
  }
  func.func @transform_9(%arg0: i32) -> (i32, i32, i32) {
    %c0_i32 = arith.constant 0 : i32
    %c0_i32_0 = arith.constant 0 : i32
    %c0_i32_1 = arith.constant 0 : i32
    %c0_i32_2 = arith.constant 0 : i32
    return %c0_i32, %c0_i32_0, %c0_i32_1 : i32, i32, i32
  }
  func.func @transform_10(%arg0: i32) -> (i32, i32, i32) {
    %c0_i32 = arith.constant 0 : i32
    %c0_i32_0 = arith.constant 0 : i32
    %c0_i32_1 = arith.constant 0 : i32
    return %arg0, %c0_i32, %c0_i32_0 : i32, i32, i32
  }
}

</mosaic_0001>

<llo_original>
// kernel: tpu_custom_call.1
$region0: #{tpu_custom_call.1}
  #allocation0 [shape = 'u32[]', space=smem, size = 0x4, offset = 0x4, fixed_abs, tag = 'smem constant byte address 0x4 - core index']
  #allocation1 [shape = 'u32[144,128]{1,0:T(1,128)}', space=vmem, size = 0x12000, scoped, tag = 'internal scratch']
  #allocation2 [shape = 'f32[8,16,16]{2,1,0:T(8,128)}', space=vmem, size = 0x10000, scoped, tag = 'scratch operand']
  #allocation3 [shape = 'f32[8,16,16]{2,1,0:T(8,128)}', space=vmem, size = 0x10000, scoped, tag = 'scratch operand']
  %s0 = inlined_call_operand.vmem [shape: f32[2,8,32], index: 0, kind: input, shape index: {}]
  %s1 = inlined_call_operand.vmem [shape: f32[2,8,16], index: 1, kind: input, shape index: {}]
  %s2 = inlined_call_operand.vmem [shape: bf16[4,32,16], index: 2, kind: input, shape index: {}]
  %s3 = inlined_call_operand.vmem [shape: bf16[4,16,16], index: 3, kind: input, shape index: {}]
  %s4 = inlined_call_operand.vmem [shape: bf16[4,32,16], index: 4, kind: input, shape index: {}]
  %s5 = inlined_call_operand.vmem [shape: bf16[4,16,16], index: 5, kind: input, shape index: {}]
  %s6 = inlined_call_operand.vmem [shape: bf16[4,32,16], index: 6, kind: input, shape index: {}]
  %s7 = inlined_call_operand.vmem [shape: bf16[4,16,16], index: 7, kind: input, shape index: {}]
  %s8 = inlined_call_operand.vmem [shape: bf16[4,16,128], index: 8, kind: input, shape index: {}]
  %s9 = inlined_call_operand.vmem [shape: bf16[4,16,128], index: 9, kind: input, shape index: {}]
  %s10 = inlined_call_operand.hbm [shape: f32[2,16,128], index: 10, kind: output, shape index: {}]
  %s11 = sld [smem:[#allocation0]]
  $region50: #{tpu_custom_call.1} parent=0
    _
  %s13 = ssub.s32 1, %s11
  %s14 = scalar_select 0, %s13, %s11
  $region1: #{tpu_custom_call.1} parent=0
    #allocation4 [shape = 'u8[16384]{0}', space=vmem, size = 0x4000, scoped, tag = 'output window, operand 0, single buffered']
    #allocation5 [shape = 's32[1]{0}', space=sflag, size = 0x4, scoped, tag = 'scoped memory for tpu_custom_call.1']
    %15 = vsyncpa [#allocation5], 0
    // Predicated region
    $region2: #{tpu_custom_call.1} parent=1 // pred_check
      _
    $region3: #{tpu_custom_call.1} parent=1 // pred_check_branch
      %17 = sbr.rel (0) target = $region5
    $region4: #{tpu_custom_call.1} parent=1 // pred_region
      _
    $region5: #{tpu_custom_call.1} parent=1 // pred_fallthru
      _
    // Predicated region
    $region6: #{tpu_custom_call.1} parent=1 // pred_check
      _
    $region7: #{tpu_custom_call.1} parent=1 // pred_check_branch
      %19 = sbr.rel (0) target = $region9
    $region8: #{tpu_custom_call.1} parent=1 // pred_region
      _
    $region9: #{tpu_custom_call.1} parent=1 // pred_fallthru
      _
    // Predicated region
    $region10: #{tpu_custom_call.1} parent=1 // pred_check
      _
    $region11: #{tpu_custom_call.1} parent=1 // pred_check_branch
      %21 = sbr.rel (0) target = $region13
    $region12: #{tpu_custom_call.1} parent=1 // pred_region
      _
    $region13: #{tpu_custom_call.1} parent=1 // pred_fallthru
      _
    // Predicated region
    $region14: #{tpu_custom_call.1} parent=1 // pred_check
      _
    $region15: #{tpu_custom_call.1} parent=1 // pred_check_branch
      %23 = sbr.rel (0) target = $region17
    $region16: #{tpu_custom_call.1} parent=1 // pred_region
      _
    $region17: #{tpu_custom_call.1} parent=1 // pred_fallthru
      _
    // Predicated region
    $region18: #{tpu_custom_call.1} parent=1 // pred_check
      _
    $region19: #{tpu_custom_call.1} parent=1 // pred_check_branch
      %25 = sbr.rel (0) target = $region21
    $region20: #{tpu_custom_call.1} parent=1 // pred_region
      _
    $region21: #{tpu_custom_call.1} parent=1 // pred_fallthru
      _
    // Predicated region
    $region22: #{tpu_custom_call.1} parent=1 // pred_check
      _
    $region23: #{tpu_custom_call.1} parent=1 // pred_check_branch
      %27 = sbr.rel (0) target = $region25
    $region24: #{tpu_custom_call.1} parent=1 // pred_region
      _
    $region25: #{tpu_custom_call.1} parent=1 // pred_fallthru
      _
    // Predicated region
    $region26: #{tpu_custom_call.1} parent=1 // pred_check
      _
    $region27: #{tpu_custom_call.1} parent=1 // pred_check_branch
      %29 = sbr.rel (0) target = $region29
    $region28: #{tpu_custom_call.1} parent=1 // pred_region
      _
    $region29: #{tpu_custom_call.1} parent=1 // pred_fallthru
      _
    // Predicated region
    $region30: #{tpu_custom_call.1} parent=1 // pred_check
      _
    $region31: #{tpu_custom_call.1} parent=1 // pred_check_branch
      %31 = sbr.rel (0) target = $region33
    $region32: #{tpu_custom_call.1} parent=1 // pred_region
      _
    $region33: #{tpu_custom_call.1} parent=1 // pred_fallthru
      _
    // Predicated region
    $region34: #{tpu_custom_call.1} parent=1 // pred_check
      _
    $region35: #{tpu_custom_call.1} parent=1 // pred_check_branch
      %33 = sbr.rel (0) target = $region37
    $region36: #{tpu_custom_call.1} parent=1 // pred_region
      _
    $region37: #{tpu_custom_call.1} parent=1 // pred_fallthru
      _
    // Predicated region
    $region38: #{tpu_custom_call.1} parent=1 // pred_check
      _
    $region39: #{tpu_custom_call.1} parent=1 // pred_check_branch
      %35 = sbr.rel (0) target = $region41
    $region40: #{tpu_custom_call.1} parent=1 // pred_region
      _
    $region41: #{tpu_custom_call.1} parent=1 // pred_fallthru
      _
    %v37 = vld [vmem:[%s0] sm:$0xff]
    %v38 = vld [vmem:[%s0 + $0x8] sm:$0xff]
    %v39 = vpack.c.bf16 %v38, %v37
    %v40 = vld [vmem:[%s2] sm:$0xf]
    %v41 = vld [vmem:[%s2 + $0x4] sm:$0xf]
    %v42 = vld [vmem:[%s2 + $0x8] sm:$0xf]
    %v43 = vld [vmem:[%s2 + $0xc] sm:$0xf]
    %v44 = vld [vmem:[%s2 + $0x10] sm:$0xf]
    %v45 = vld [vmem:[%s2 + $0x14] sm:$0xf]
    %v46 = vld [vmem:[%s2 + $0x18] sm:$0xf]
    %v47 = vld [vmem:[%s2 + $0x1c] sm:$0xf]
    %v48 = vld [vmem:[%s2 + $0x20] sm:$0xf]
    %v49 = vld [vmem:[%s2 + $0x24] sm:$0xf]
    %v50 = vld [vmem:[%s2 + $0x28] sm:$0xf]
    %v51 = vld [vmem:[%s2 + $0x2c] sm:$0xf]
    %v52 = vld [vmem:[%s2 + $0x30] sm:$0xf]
    %v53 = vld [vmem:[%s2 + $0x34] sm:$0xf]
    %v54 = vld [vmem:[%s2 + $0x38] sm:$0xf]
    %v55 = vld [vmem:[%s2 + $0x3c] sm:$0xf]
    %v60 = vunpack.c.l.b16 %v40
    %v61 = vunpack.c.l.b16 %v41
    %v62 = vunpack.c.l.b16 %v42
    %v63 = vunpack.c.l.b16 %v43
    %v64 = vpack.c.b16 %v61, %v60
    %v65 = vpack.c.b16 %v63, %v62
    %vm68 = vcmask 261120
    %v70 = vsel %vm68, %v39, 0
    %72 = vmatprep.subr.bf16.mxu0 0
    %73 = vmatpush1.bf16.msra.mxu0 0
    %74 = vmatprep.subr.bf16.mxu0 0
    %75 = vmatpush1.bf16.msra.mxu0 0
    %76 = vmatprep.subr.bf16.mxu0 0
    %77 = vmatpush1.bf16.msra.mxu0 0
    %78 = vmatprep.subr.bf16.mxu0 0
    %79 = vmatpush1.bf16.msra.mxu0 0
    %80 = vmatprep.subr.bf16.mxu0 0
    %81 = vmatpush1.bf16.msra.mxu0 0
    %82 = vmatprep.subr.bf16.mxu0 0
    %83 = vmatpush1.bf16.msra.mxu0 0
    %84 = vmatprep.subr.bf16.mxu0 0
    %85 = vmatpush1.bf16.msra.mxu0 %v65
    %86 = vmatprep.subr.bf16.mxu0 0
    %87 = vmatpush1.bf16.msra.mxu0 %v64
    %88 = vmatprep.subr.bf16.mxu0 0
    %89 = vmatpush2.bf16.msra.mxu0 0
    %90 = vmatprep.subr.bf16.mxu0 0
    %91 = vmatpush2.bf16.msra.mxu0 0
    %92 = vmatprep.subr.bf16.mxu0 0
    %93 = vmatpush2.bf16.msra.mxu0 0
    %94 = vmatprep.subr.bf16.mxu0 0
    %95 = vmatpush2.bf16.msra.mxu0 0
    %96 = vmatprep.subr.bf16.mxu0 0
    %97 = vmatpush2.bf16.msra.mxu0 0
    %98 = vmatprep.subr.bf16.mxu0 0
    %99 = vmatpush2.bf16.msra.mxu0 0
    %100 = vmatprep.subr.bf16.mxu0 0
    %101 = vmatpush2.bf16.msra.mxu0 0
    %102 = vmatprep.subr.bf16.mxu0 0
    %103 = vmatpush2.bf16.msra.mxu0 0
    %104 = vmatprep.mubr.bf16.mxu0 0
    %105 = vmatmul.mubr.bf16.gmra.mxu0 %v70
    %v106 = vpop.f32.mrf.mxu0
    %v107 = vadd.f32 0.0, %v106
    %v108 = vpop.f32.mrf.mxu0
    %v109 = vpop.f32.mrf.mxu0
    %v110 = vadd.f32 0.0, %v109
    %v111 = vpop.f32.mrf.mxu0
    %112 = vdwg.mxu0
    %v117 = vunpack.c.l.b16 %v44
    %v118 = vunpack.c.l.b16 %v45
    %v119 = vunpack.c.l.b16 %v46
    %v120 = vunpack.c.l.b16 %v47
    %v121 = vpack.c.b16 %v118, %v117
    %v122 = vpack.c.b16 %v120, %v119
    %125 = vmatprep.subr.bf16.mxu0 0
    %126 = vmatpush1.bf16.msra.mxu0 0
    %127 = vmatprep.subr.bf16.mxu0 0
    %128 = vmatpush1.bf16.msra.mxu0 0
    %129 = vmatprep.subr.bf16.mxu0 0
    %130 = vmatpush1.bf16.msra.mxu0 0
    %131 = vmatprep.subr.bf16.mxu0 0
    %132 = vmatpush1.bf16.msra.mxu0 0
    %133 = vmatprep.subr.bf16.mxu0 0
    %134 = vmatpush1.bf16.msra.mxu0 0
    %135 = vmatprep.subr.bf16.mxu0 0
    %136 = vmatpush1.bf16.msra.mxu0 0
    %137 = vmatprep.subr.bf16.mxu0 0
    %138 = vmatpush1.bf16.msra.mxu0 %v122
    %139 = vmatprep.subr.bf16.mxu0 0
    %140 = vmatpush1.bf16.msra.mxu0 %v121
    %141 = vmatprep.subr.bf16.mxu0 0
    %142 = vmatpush2.bf16.msra.mxu0 0
    %143 = vmatprep.subr.bf16.mxu0 0
    %144 = vmatpush2.bf16.msra.mxu0 0
    %145 = vmatprep.subr.bf16.mxu0 0
    %146 = vmatpush2.bf16.msra.mxu0 0
    %147 = vmatprep.subr.bf16.mxu0 0
    %148 = vmatpush2.bf16.msra.mxu0 0
    %149 = vmatprep.subr.bf16.mxu0 0
    %150 = vmatpush2.bf16.msra.mxu0 0
    %151 = vmatprep.subr.bf16.mxu0 0
    %152 = vmatpush2.bf16.msra.mxu0 0
    %153 = vmatprep.subr.bf16.mxu0 0
    %154 = vmatpush2.bf16.msra.mxu0 0
    %155 = vmatprep.subr.bf16.mxu0 0
    %156 = vmatpush2.bf16.msra.mxu0 0
    %157 = vmatprep.mubr.bf16.mxu0 0
    %158 = vmatmul.mubr.bf16.gmra.mxu0 %v70
    %v159 = vpop.f32.mrf.mxu0
    %v160 = vadd.f32 0.0, %v159
    %v161 = vpop.f32.mrf.mxu0
    %v162 = vpop.f32.mrf.mxu0
    %v163 = vadd.f32 0.0, %v162
    %v164 = vpop.f32.mrf.mxu0
    %165 = vdwg.mxu0
    %v170 = vunpack.c.l.b16 %v48
    %v171 = vunpack.c.l.b16 %v49
    %v172 = vunpack.c.l.b16 %v50
    %v173 = vunpack.c.l.b16 %v51
    %v174 = vpack.c.b16 %v171, %v170
    %v175 = vpack.c.b16 %v173, %v172
    %178 = vmatprep.subr.bf16.mxu0 0
    %179 = vmatpush1.bf16.msra.mxu0 0
    %180 = vmatprep.subr.bf16.mxu0 0
    %181 = vmatpush1.bf16.msra.mxu0 0
    %182 = vmatprep.subr.bf16.mxu0 0
    %183 = vmatpush1.bf16.msra.mxu0 0
    %184 = vmatprep.subr.bf16.mxu0 0
    %185 = vmatpush1.bf16.msra.mxu0 0
    %186 = vmatprep.subr.bf16.mxu0 0
    %187 = vmatpush1.bf16.msra.mxu0 0
    %188 = vmatprep.subr.bf16.mxu0 0
    %189 = vmatpush1.bf16.msra.mxu0 0
    %190 = vmatprep.subr.bf16.mxu0 0
    %191 = vmatpush1.bf16.msra.mxu0 %v175
    %192 = vmatprep.subr.bf16.mxu0 0
    %193 = vmatpush1.bf16.msra.mxu0 %v174
    %194 = vmatprep.subr.bf16.mxu0 0
    %195 = vmatpush2.bf16.msra.mxu0 0
    %196 = vmatprep.subr.bf16.mxu0 0
    %197 = vmatpush2.bf16.msra.mxu0 0
    %198 = vmatprep.subr.bf16.mxu0 0
    %199 = vmatpush2.bf16.msra.mxu0 0
    %200 = vmatprep.subr.bf16.mxu0 0
    %201 = vmatpush2.bf16.msra.mxu0 0
    %202 = vmatprep.subr.bf16.mxu0 0
    %203 = vmatpush2.bf16.msra.mxu0 0
    %204 = vmatprep.subr.bf16.mxu0 0
    %205 = vmatpush2.bf16.msra.mxu0 0
    %206 = vmatprep.subr.bf16.mxu0 0
    %207 = vmatpush2.bf16.msra.mxu0 0
    %208 = vmatprep.subr.bf16.mxu0 0
    %209 = vmatpush2.bf16.msra.mxu0 0
    %210 = vmatprep.mubr.bf16.mxu0 0
    %211 = vmatmul.mubr.bf16.gmra.mxu0 %v70
    %v212 = vpop.f32.mrf.mxu0
    %v213 = vadd.f32 0.0, %v212
    %v214 = vpop.f32.mrf.mxu0
    %v215 = vpop.f32.mrf.mxu0
    %v216 = vadd.f32 0.0, %v215
    %v217 = vpop.f32.mrf.mxu0
    %218 = vdwg.mxu0
    %v223 = vunpack.c.l.b16 %v52
    %v224 = vunpack.c.l.b16 %v53
    %v225 = vunpack.c.l.b16 %v54
    %v226 = vunpack.c.l.b16 %v55
    %v227 = vpack.c.b16 %v224, %v223
    %v228 = vpack.c.b16 %v226, %v225
    %231 = vmatprep.subr.bf16.mxu0 0
    %232 = vmatpush1.bf16.msra.mxu0 0
    %233 = vmatprep.subr.bf16.mxu0 0
    %234 = vmatpush1.bf16.msra.mxu0 0
    %235 = vmatprep.subr.bf16.mxu0 0
    %236 = vmatpush1.bf16.msra.mxu0 0
    %237 = vmatprep.subr.bf16.mxu0 0
    %238 = vmatpush1.bf16.msra.mxu0 0
    %239 = vmatprep.subr.bf16.mxu0 0
    %240 = vmatpush1.bf16.msra.mxu0 0
    %241 = vmatprep.subr.bf16.mxu0 0
    %242 = vmatpush1.bf16.msra.mxu0 0
    %243 = vmatprep.subr.bf16.mxu0 0
    %244 = vmatpush1.bf16.msra.mxu0 %v228
    %245 = vmatprep.subr.bf16.mxu0 0
    %246 = vmatpush1.bf16.msra.mxu0 %v227
    %247 = vmatprep.subr.bf16.mxu0 0
    %248 = vmatpush2.bf16.msra.mxu0 0
    %249 = vmatprep.subr.bf16.mxu0 0
    %250 = vmatpush2.bf16.msra.mxu0 0
    %251 = vmatprep.subr.bf16.mxu0 0
    %252 = vmatpush2.bf16.msra.mxu0 0
    %253 = vmatprep.subr.bf16.mxu0 0
    %254 = vmatpush2.bf16.msra.mxu0 0
    %255 = vmatprep.subr.bf16.mxu0 0
    %256 = vmatpush2.bf16.msra.mxu0 0
    %257 = vmatprep.subr.bf16.mxu0 0
    %258 = vmatpush2.bf16.msra.mxu0 0
    %259 = vmatprep.subr.bf16.mxu0 0
    %260 = vmatpush2.bf16.msra.mxu0 0
    %261 = vmatprep.subr.bf16.mxu0 0
    %262 = vmatpush2.bf16.msra.mxu0 0
    %263 = vmatprep.mubr.bf16.mxu0 0
    %264 = vmatmul.mubr.bf16.gmra.mxu0 %v70
    %v265 = vpop.f32.mrf.mxu0
    %v266 = vadd.f32 0.0, %v265
    %v267 = vpop.f32.mrf.mxu0
    %v268 = vpop.f32.mrf.mxu0
    %v269 = vadd.f32 0.0, %v268
    %v270 = vpop.f32.mrf.mxu0
    %271 = vdwg.mxu0
    %v272 = vld [vmem:[%s4] sm:$0xf]
    %v273 = vld [vmem:[%s4 + $0x4] sm:$0xf]
    %v274 = vld [vmem:[%s4 + $0x8] sm:$0xf]
    %v275 = vld [vmem:[%s4 + $0xc] sm:$0xf]
    %v276 = vld [vmem:[%s4 + $0x10] sm:$0xf]
    %v277 = vld [vmem:[%s4 + $0x14] sm:$0xf]
    %v278 = vld [vmem:[%s4 + $0x18] sm:$0xf]
    %v279 = vld [vmem:[%s4 + $0x1c] sm:$0xf]
    %v280 = vld [vmem:[%s4 + $0x20] sm:$0xf]
    %v281 = vld [vmem:[%s4 + $0x24] sm:$0xf]
    %v282 = vld [vmem:[%s4 + $0x28] sm:$0xf]
    %v283 = vld [vmem:[%s4 + $0x2c] sm:$0xf]
    %v284 = vld [vmem:[%s4 + $0x30] sm:$0xf]
    %v285 = vld [vmem:[%s4 + $0x34] sm:$0xf]
    %v286 = vld [vmem:[%s4 + $0x38] sm:$0xf]
    %v287 = vld [vmem:[%s4 + $0x3c] sm:$0xf]
    %v292 = vunpack.c.l.b16 %v272
    %v293 = vunpack.c.l.b16 %v273
    %v294 = vunpack.c.l.b16 %v274
    %v295 = vunpack.c.l.b16 %v275
    %v296 = vpack.c.b16 %v293, %v292
    %v297 = vpack.c.b16 %v295, %v294
    %300 = vmatprep.subr.bf16.mxu0 0
    %301 = vmatpush1.bf16.msra.mxu0 0
    %302 = vmatprep.subr.bf16.mxu0 0
    %303 = vmatpush1.bf16.msra.mxu0 0
    %304 = vmatprep.subr.bf16.mxu0 0
    %305 = vmatpush1.bf16.msra.mxu0 0
    %306 = vmatprep.subr.bf16.mxu0 0
    %307 = vmatpush1.bf16.msra.mxu0 0
    %308 = vmatprep.subr.bf16.mxu0 0
    %309 = vmatpush1.bf16.msra.mxu0 0
    %310 = vmatprep.subr.bf16.mxu0 0
    %311 = vmatpush1.bf16.msra.mxu0 0
    %312 = vmatprep.subr.bf16.mxu0 0
    %313 = vmatpush1.bf16.msra.mxu0 %v297
    %314 = vmatprep.subr.bf16.mxu0 0
    %315 = vmatpush1.bf16.msra.mxu0 %v296
    %316 = vmatprep.subr.bf16.mxu0 0
    %317 = vmatpush2.bf16.msra.mxu0 0
    %318 = vmatprep.subr.bf16.mxu0 0
    %319 = vmatpush2.bf16.msra.mxu0 0
    %320 = vmatprep.subr.bf16.mxu0 0
    %321 = vmatpush2.bf16.msra.mxu0 0
    %322 = vmatprep.subr.bf16.mxu0 0
    %323 = vmatpush2.bf16.msra.mxu0 0
    %324 = vmatprep.subr.bf16.mxu0 0
    %325 = vmatpush2.bf16.msra.mxu0 0
    %326 = vmatprep.subr.bf16.mxu0 0
    %327 = vmatpush2.bf16.msra.mxu0 0
    %328 = vmatprep.subr.bf16.mxu0 0
    %329 = vmatpush2.bf16.msra.mxu0 0
    %330 = vmatprep.subr.bf16.mxu0 0
    %331 = vmatpush2.bf16.msra.mxu0 0
    %332 = vmatprep.mubr.bf16.mxu0 0
    %333 = vmatmul.mubr.bf16.gmra.mxu0 %v70
    %v334 = vpop.f32.mrf.mxu0
    %v335 = vadd.f32 0.0, %v334
    %v336 = vpop.f32.mrf.mxu0
    %v337 = vpop.f32.mrf.mxu0
    %v338 = vadd.f32 0.0, %v337
    %v339 = vpop.f32.mrf.mxu0
    %340 = vdwg.mxu0
    %v345 = vunpack.c.l.b16 %v276
    %v346 = vunpack.c.l.b16 %v277
    %v347 = vunpack.c.l.b16 %v278
    %v348 = vunpack.c.l.b16 %v279
    %v349 = vpack.c.b16 %v346, %v345
    %v350 = vpack.c.b16 %v348, %v347
    %353 = vmatprep.subr.bf16.mxu0 0
    %354 = vmatpush1.bf16.msra.mxu0 0
    %355 = vmatprep.subr.bf16.mxu0 0
    %356 = vmatpush1.bf16.msra.mxu0 0
    %357 = vmatprep.subr.bf16.mxu0 0
    %358 = vmatpush1.bf16.msra.mxu0 0
    %359 = vmatprep.subr.bf16.mxu0 0
    %360 = vmatpush1.bf16.msra.mxu0 0
    %361 = vmatprep.subr.bf16.mxu0 0
    %362 = vmatpush1.bf16.msra.mxu0 0
    %363 = vmatprep.subr.bf16.mxu0 0
    %364 = vmatpush1.bf16.msra.mxu0 0
    %365 = vmatprep.subr.bf16.mxu0 0
    %366 = vmatpush1.bf16.msra.mxu0 %v350
    %367 = vmatprep.subr.bf16.mxu0 0
    %368 = vmatpush1.bf16.msra.mxu0 %v349
    %369 = vmatprep.subr.bf16.mxu0 0
    %370 = vmatpush2.bf16.msra.mxu0 0
    %371 = vmatprep.subr.bf16.mxu0 0
    %372 = vmatpush2.bf16.msra.mxu0 0
    %373 = vmatprep.subr.bf16.mxu0 0
    %374 = vmatpush2.bf16.msra.mxu0 0
    %375 = vmatprep.subr.bf16.mxu0 0
    %376 = vmatpush2.bf16.msra.mxu0 0
    %377 = vmatprep.subr.bf16.mxu0 0
    %378 = vmatpush2.bf16.msra.mxu0 0
    %379 = vmatprep.subr.bf16.mxu0 0
    %380 = vmatpush2.bf16.msra.mxu0 0
    %381 = vmatprep.subr.bf16.mxu0 0
    %382 = vmatpush2.bf16.msra.mxu0 0
    %383 = vmatprep.subr.bf16.mxu0 0
    %384 = vmatpush2.bf16.msra.mxu0 0
    %385 = vmatprep.mubr.bf16.mxu0 0
    %386 = vmatmul.mubr.bf16.gmra.mxu0 %v70
    %v387 = vpop.f32.mrf.mxu0
    %v388 = vadd.f32 0.0, %v387
    %v389 = vpop.f32.mrf.mxu0
    %v390 = vpop.f32.mrf.mxu0
    %v391 = vadd.f32 0.0, %v390
    %v392 = vpop.f32.mrf.mxu0
    %393 = vdwg.mxu0
    %v398 = vunpack.c.l.b16 %v280
    %v399 = vunpack.c.l.b16 %v281
    %v400 = vunpack.c.l.b16 %v282
    %v401 = vunpack.c.l.b16 %v283
    %v402 = vpack.c.b16 %v399, %v398
    %v403 = vpack.c.b16 %v401, %v400
    %406 = vmatprep.subr.bf16.mxu0 0
    %407 = vmatpush1.bf16.msra.mxu0 0
    %408 = vmatprep.subr.bf16.mxu0 0
    %409 = vmatpush1.bf16.msra.mxu0 0
    %410 = vmatprep.subr.bf16.mxu0 0
    %411 = vmatpush1.bf16.msra.mxu0 0
    %412 = vmatprep.subr.bf16.mxu0 0
    %413 = vmatpush1.bf16.msra.mxu0 0
    %414 = vmatprep.subr.bf16.mxu0 0
    %415 = vmatpush1.bf16.msra.mxu0 0
    %416 = vmatprep.subr.bf16.mxu0 0
    %417 = vmatpush1.bf16.msra.mxu0 0
    %418 = vmatprep.subr.bf16.mxu0 0
    %419 = vmatpush1.bf16.msra.mxu0 %v403
    %420 = vmatprep.subr.bf16.mxu0 0
    %421 = vmatpush1.bf16.msra.mxu0 %v402
    %422 = vmatprep.subr.bf16.mxu0 0
    %423 = vmatpush2.bf16.msra.mxu0 0
    %424 = vmatprep.subr.bf16.mxu0 0
    %425 = vmatpush2.bf16.msra.mxu0 0
    %426 = vmatprep.subr.bf16.mxu0 0
    %427 = vmatpush2.bf16.msra.mxu0 0
    %428 = vmatprep.subr.bf16.mxu0 0
    %429 = vmatpush2.bf16.msra.mxu0 0
    %430 = vmatprep.subr.bf16.mxu0 0
    %431 = vmatpush2.bf16.msra.mxu0 0
    %432 = vmatprep.subr.bf16.mxu0 0
    %433 = vmatpush2.bf16.msra.mxu0 0
    %434 = vmatprep.subr.bf16.mxu0 0
    %435 = vmatpush2.bf16.msra.mxu0 0
    %436 = vmatprep.subr.bf16.mxu0 0
    %437 = vmatpush2.bf16.msra.mxu0 0
    %438 = vmatprep.mubr.bf16.mxu0 0
    %439 = vmatmul.mubr.bf16.gmra.mxu0 %v70
    %v440 = vpop.f32.mrf.mxu0
    %v441 = vadd.f32 0.0, %v440
    %v442 = vpop.f32.mrf.mxu0
    %v443 = vpop.f32.mrf.mxu0
    %v444 = vadd.f32 0.0, %v443
    %v445 = vpop.f32.mrf.mxu0
    %446 = vdwg.mxu0
    %v451 = vunpack.c.l.b16 %v284
    %v452 = vunpack.c.l.b16 %v285
    %v453 = vunpack.c.l.b16 %v286
    %v454 = vunpack.c.l.b16 %v287
    %v455 = vpack.c.b16 %v452, %v451
    %v456 = vpack.c.b16 %v454, %v453
    %459 = vmatprep.subr.bf16.mxu0 0
    %460 = vmatpush1.bf16.msra.mxu0 0
    %461 = vmatprep.subr.bf16.mxu0 0
    %462 = vmatpush1.bf16.msra.mxu0 0
    %463 = vmatprep.subr.bf16.mxu0 0
    %464 = vmatpush1.bf16.msra.mxu0 0
    %465 = vmatprep.subr.bf16.mxu0 0
    %466 = vmatpush1.bf16.msra.mxu0 0
    %467 = vmatprep.subr.bf16.mxu0 0
    %468 = vmatpush1.bf16.msra.mxu0 0
    %469 = vmatprep.subr.bf16.mxu0 0
    %470 = vmatpush1.bf16.msra.mxu0 0
    %471 = vmatprep.subr.bf16.mxu0 0
    %472 = vmatpush1.bf16.msra.mxu0 %v456
    %473 = vmatprep.subr.bf16.mxu0 0
    %474 = vmatpush1.bf16.msra.mxu0 %v455
    %475 = vmatprep.subr.bf16.mxu0 0
    %476 = vmatpush2.bf16.msra.mxu0 0
    %477 = vmatprep.subr.bf16.mxu0 0
    %478 = vmatpush2.bf16.msra.mxu0 0
    %479 = vmatprep.subr.bf16.mxu0 0
    %480 = vmatpush2.bf16.msra.mxu0 0
    %481 = vmatprep.subr.bf16.mxu0 0
    %482 = vmatpush2.bf16.msra.mxu0 0
    %483 = vmatprep.subr.bf16.mxu0 0
    %484 = vmatpush2.bf16.msra.mxu0 0
    %485 = vmatprep.subr.bf16.mxu0 0
    %486 = vmatpush2.bf16.msra.mxu0 0
    %487 = vmatprep.subr.bf16.mxu0 0
    %488 = vmatpush2.bf16.msra.mxu0 0
    %489 = vmatprep.subr.bf16.mxu0 0
    %490 = vmatpush2.bf16.msra.mxu0 0
    %491 = vmatprep.mubr.bf16.mxu0 0
    %492 = vmatmul.mubr.bf16.gmra.mxu0 %v70
    %v493 = vpop.f32.mrf.mxu0
    %v494 = vadd.f32 0.0, %v493
    %v495 = vpop.f32.mrf.mxu0
    %v496 = vpop.f32.mrf.mxu0
    %v497 = vadd.f32 0.0, %v496
    %v498 = vpop.f32.mrf.mxu0
    %499 = vdwg.mxu0
    %v500 = vld [vmem:[%s6] sm:$0xf]
    %v501 = vld [vmem:[%s6 + $0x4] sm:$0xf]
    %v502 = vld [vmem:[%s6 + $0x8] sm:$0xf]
    %v503 = vld [vmem:[%s6 + $0xc] sm:$0xf]
    %v504 = vld [vmem:[%s6 + $0x10] sm:$0xf]
    %v505 = vld [vmem:[%s6 + $0x14] sm:$0xf]
    %v506 = vld [vmem:[%s6 + $0x18] sm:$0xf]
    %v507 = vld [vmem:[%s6 + $0x1c] sm:$0xf]
    %v508 = vld [vmem:[%s6 + $0x20] sm:$0xf]
    %v509 = vld [vmem:[%s6 + $0x24] sm:$0xf]
    %v510 = vld [vmem:[%s6 + $0x28] sm:$0xf]
    %v511 = vld [vmem:[%s6 + $0x2c] sm:$0xf]
    %v512 = vld [vmem:[%s6 + $0x30] sm:$0xf]
    %v513 = vld [vmem:[%s6 + $0x34] sm:$0xf]
    %v514 = vld [vmem:[%s6 + $0x38] sm:$0xf]
    %v515 = vld [vmem:[%s6 + $0x3c] sm:$0xf]
    %v520 = vunpack.c.l.b16 %v500
    %v521 = vunpack.c.l.b16 %v501
    %v522 = vunpack.c.l.b16 %v502
    %v523 = vunpack.c.l.b16 %v503
    %v524 = vpack.c.b16 %v521, %v520
    %v525 = vpack.c.b16 %v523, %v522
    %528 = vmatprep.subr.bf16.mxu0 0
    %529 = vmatpush1.bf16.msra.mxu0 0
    %530 = vmatprep.subr.bf16.mxu0 0
    %531 = vmatpush1.bf16.msra.mxu0 0
    %532 = vmatprep.subr.bf16.mxu0 0
    %533 = vmatpush1.bf16.msra.mxu0 0
    %534 = vmatprep.subr.bf16.mxu0 0
    %535 = vmatpush1.bf16.msra.mxu0 0
    %536 = vmatprep.subr.bf16.mxu0 0
    %537 = vmatpush1.bf16.msra.mxu0 0
    %538 = vmatprep.subr.bf16.mxu0 0
    %539 = vmatpush1.bf16.msra.mxu0 0
    %540 = vmatprep.subr.bf16.mxu0 0
    %541 = vmatpush1.bf16.msra.mxu0 %v525
    %542 = vmatprep.subr.bf16.mxu0 0
    %543 = vmatpush1.bf16.msra.mxu0 %v524
    %544 = vmatprep.subr.bf16.mxu0 0
    %545 = vmatpush2.bf16.msra.mxu0 0
    %546 = vmatprep.subr.bf16.mxu0 0
    %547 = vmatpush2.bf16.msra.mxu0 0
    %548 = vmatprep.subr.bf16.mxu0 0
    %549 = vmatpush2.bf16.msra.mxu0 0
    %550 = vmatprep.subr.bf16.mxu0 0
    %551 = vmatpush2.bf16.msra.mxu0 0
    %552 = vmatprep.subr.bf16.mxu0 0
    %553 = vmatpush2.bf16.msra.mxu0 0
    %554 = vmatprep.subr.bf16.mxu0 0
    %555 = vmatpush2.bf16.msra.mxu0 0
    %556 = vmatprep.subr.bf16.mxu0 0
    %557 = vmatpush2.bf16.msra.mxu0 0
    %558 = vmatprep.subr.bf16.mxu0 0
    %559 = vmatpush2.bf16.msra.mxu0 0
    %560 = vmatprep.mubr.bf16.mxu0 0
    %561 = vmatmul.mubr.bf16.gmra.mxu0 %v70
    %v562 = vpop.f32.mrf.mxu0
    %v563 = vadd.f32 0.0, %v562
    %v564 = vpop.f32.mrf.mxu0
    %v565 = vpop.f32.mrf.mxu0
    %v566 = vadd.f32 0.0, %v565
    %v567 = vpop.f32.mrf.mxu0
    %568 = vdwg.mxu0
    %v573 = vunpack.c.l.b16 %v504
    %v574 = vunpack.c.l.b16 %v505
    %v575 = vunpack.c.l.b16 %v506
    %v576 = vunpack.c.l.b16 %v507
    %v577 = vpack.c.b16 %v574, %v573
    %v578 = vpack.c.b16 %v576, %v575
    %581 = vmatprep.subr.bf16.mxu0 0
    %582 = vmatpush1.bf16.msra.mxu0 0
    %583 = vmatprep.subr.bf16.mxu0 0
    %584 = vmatpush1.bf16.msra.mxu0 0
    %585 = vmatprep.subr.bf16.mxu0 0
    %586 = vmatpush1.bf16.msra.mxu0 0
    %587 = vmatprep.subr.bf16.mxu0 0
    %588 = vmatpush1.bf16.msra.mxu0 0
    %589 = vmatprep.subr.bf16.mxu0 0
    %590 = vmatpush1.bf16.msra.mxu0 0
    %591 = vmatprep.subr.bf16.mxu0 0
    %592 = vmatpush1.bf16.msra.mxu0 0
    %593 = vmatprep.subr.bf16.mxu0 0
    %594 = vmatpush1.bf16.msra.mxu0 %v578
    %595 = vmatprep.subr.bf16.mxu0 0
    %596 = vmatpush1.bf16.msra.mxu0 %v577
    %597 = vmatprep.subr.bf16.mxu0 0
    %598 = vmatpush2.bf16.msra.mxu0 0
    %599 = vmatprep.subr.bf16.mxu0 0
    %600 = vmatpush2.bf16.msra.mxu0 0
    %601 = vmatprep.subr.bf16.mxu0 0
    %602 = vmatpush2.bf16.msra.mxu0 0
    %603 = vmatprep.subr.bf16.mxu0 0
    %604 = vmatpush2.bf16.msra.mxu0 0
    %605 = vmatprep.subr.bf16.mxu0 0
    %606 = vmatpush2.bf16.msra.mxu0 0
    %607 = vmatprep.subr.bf16.mxu0 0
    %608 = vmatpush2.bf16.msra.mxu0 0
    %609 = vmatprep.subr.bf16.mxu0 0
    %610 = vmatpush2.bf16.msra.mxu0 0
    %611 = vmatprep.subr.bf16.mxu0 0
    %612 = vmatpush2.bf16.msra.mxu0 0
    %613 = vmatprep.mubr.bf16.mxu0 0
    %614 = vmatmul.mubr.bf16.gmra.mxu0 %v70
    %v615 = vpop.f32.mrf.mxu0
    %v616 = vadd.f32 0.0, %v615
    %v617 = vpop.f32.mrf.mxu0
    %v618 = vpop.f32.mrf.mxu0
    %v619 = vadd.f32 0.0, %v618
    %v620 = vpop.f32.mrf.mxu0
    %621 = vdwg.mxu0
    %v626 = vunpack.c.l.b16 %v508
    %v627 = vunpack.c.l.b16 %v509
    %v628 = vunpack.c.l.b16 %v510
    %v629 = vunpack.c.l.b16 %v511
    %v630 = vpack.c.b16 %v627, %v626
    %v631 = vpack.c.b16 %v629, %v628
    %634 = vmatprep.subr.bf16.mxu0 0
    %635 = vmatpush1.bf16.msra.mxu0 0
    %636 = vmatprep.subr.bf16.mxu0 0
    %637 = vmatpush1.bf16.msra.mxu0 0
    %638 = vmatprep.subr.bf16.mxu0 0
    %639 = vmatpush1.bf16.msra.mxu0 0
    %640 = vmatprep.subr.bf16.mxu0 0
    %641 = vmatpush1.bf16.msra.mxu0 0
    %642 = vmatprep.subr.bf16.mxu0 0
    %643 = vmatpush1.bf16.msra.mxu0 0
    %644 = vmatprep.subr.bf16.mxu0 0
    %645 = vmatpush1.bf16.msra.mxu0 0
    %646 = vmatprep.subr.bf16.mxu0 0
    %647 = vmatpush1.bf16.msra.mxu0 %v631
    %648 = vmatprep.subr.bf16.mxu0 0
    %649 = vmatpush1.bf16.msra.mxu0 %v630
    %650 = vmatprep.subr.bf16.mxu0 0
    %651 = vmatpush2.bf16.msra.mxu0 0
    %652 = vmatprep.subr.bf16.mxu0 0
    %653 = vmatpush2.bf16.msra.mxu0 0
    %654 = vmatprep.subr.bf16.mxu0 0
    %655 = vmatpush2.bf16.msra.mxu0 0
    %656 = vmatprep.subr.bf16.mxu0 0
    %657 = vmatpush2.bf16.msra.mxu0 0
    %658 = vmatprep.subr.bf16.mxu0 0
    %659 = vmatpush2.bf16.msra.mxu0 0
    %660 = vmatprep.subr.bf16.mxu0 0
    %661 = vmatpush2.bf16.msra.mxu0 0
    %662 = vmatprep.subr.bf16.mxu0 0
    %663 = vmatpush2.bf16.msra.mxu0 0
    %664 = vmatprep.subr.bf16.mxu0 0
    %665 = vmatpush2.bf16.msra.mxu0 0
    %666 = vmatprep.mubr.bf16.mxu0 0
    %667 = vmatmul.mubr.bf16.gmra.mxu0 %v70
    %v668 = vpop.f32.mrf.mxu0
    %v669 = vadd.f32 0.0, %v668
    %v670 = vpop.f32.mrf.mxu0
    %v671 = vpop.f32.mrf.mxu0
    %v672 = vadd.f32 0.0, %v671
    %v673 = vpop.f32.mrf.mxu0
    %674 = vdwg.mxu0
    %v679 = vunpack.c.l.b16 %v512
    %v680 = vunpack.c.l.b16 %v513
    %v681 = vunpack.c.l.b16 %v514
    %v682 = vunpack.c.l.b16 %v515
    %v683 = vpack.c.b16 %v680, %v679
    %v684 = vpack.c.b16 %v682, %v681
    %687 = vmatprep.subr.bf16.mxu0 0
    %688 = vmatpush1.bf16.msra.mxu0 0
    %689 = vmatprep.subr.bf16.mxu0 0
    %690 = vmatpush1.bf16.msra.mxu0 0
    %691 = vmatprep.subr.bf16.mxu0 0
    %692 = vmatpush1.bf16.msra.mxu0 0
    %693 = vmatprep.subr.bf16.mxu0 0
    %694 = vmatpush1.bf16.msra.mxu0 0
    %695 = vmatprep.subr.bf16.mxu0 0
    %696 = vmatpush1.bf16.msra.mxu0 0
    %697 = vmatprep.subr.bf16.mxu0 0
    %698 = vmatpush1.bf16.msra.mxu0 0
    %699 = vmatprep.subr.bf16.mxu0 0
    %700 = vmatpush1.bf16.msra.mxu0 %v684
    %701 = vmatprep.subr.bf16.mxu0 0
    %702 = vmatpush1.bf16.msra.mxu0 %v683
    %703 = vmatprep.subr.bf16.mxu0 0
    %704 = vmatpush2.bf16.msra.mxu0 0
    %705 = vmatprep.subr.bf16.mxu0 0
    %706 = vmatpush2.bf16.msra.mxu0 0
    %707 = vmatprep.subr.bf16.mxu0 0
    %708 = vmatpush2.bf16.msra.mxu0 0
    %709 = vmatprep.subr.bf16.mxu0 0
    %710 = vmatpush2.bf16.msra.mxu0 0
    %711 = vmatprep.subr.bf16.mxu0 0
    %712 = vmatpush2.bf16.msra.mxu0 0
    %713 = vmatprep.subr.bf16.mxu0 0
    %714 = vmatpush2.bf16.msra.mxu0 0
    %715 = vmatprep.subr.bf16.mxu0 0
    %716 = vmatpush2.bf16.msra.mxu0 0
    %717 = vmatprep.subr.bf16.mxu0 0
    %718 = vmatpush2.bf16.msra.mxu0 0
    %719 = vmatprep.mubr.bf16.mxu0 0
    %720 = vmatmul.mubr.bf16.gmra.mxu0 %v70
    %v721 = vpop.f32.mrf.mxu0
    %v722 = vadd.f32 0.0, %v721
    %v723 = vpop.f32.mrf.mxu0
    %v724 = vpop.f32.mrf.mxu0
    %v725 = vadd.f32 0.0, %v724
    %v726 = vpop.f32.mrf.mxu0
    %727 = vdwg.mxu0
    %vm728 = vcmask 130048
    %729 = vst.msk [vmem:[#allocation2] sm:$0xff] %vm728, %v335
    %730 = vst.msk [vmem:[#allocation2 + $0x10] sm:$0xff] %vm728, %v338
    %731 = vst.msk [vmem:[#allocation2 + $0x20] sm:$0xff] %vm728, %v388
    %732 = vst.msk [vmem:[#allocation2 + $0x30] sm:$0xff] %vm728, %v391
    %733 = vst.msk [vmem:[#allocation2 + $0x40] sm:$0xff] %vm728, %v441
    %734 = vst.msk [vmem:[#allocation2 + $0x50] sm:$0xff] %vm728, %v444
    %735 = vst.msk [vmem:[#allocation2 + $0x60] sm:$0xff] %vm728, %v494
    %736 = vst.msk [vmem:[#allocation2 + $0x70] sm:$0xff] %vm728, %v497
    %737 = vst.msk [vmem:[#allocation3] sm:$0xff] %vm728, %v563
    %738 = vst.msk [vmem:[#allocation3 + $0x10] sm:$0xff] %vm728, %v566
    %739 = vst.msk [vmem:[#allocation3 + $0x20] sm:$0xff] %vm728, %v616
    %740 = vst.msk [vmem:[#allocation3 + $0x30] sm:$0xff] %vm728, %v619
    %741 = vst.msk [vmem:[#allocation3 + $0x40] sm:$0xff] %vm728, %v669
    %742 = vst.msk [vmem:[#allocation3 + $0x50] sm:$0xff] %vm728, %v672
    %743 = vst.msk [vmem:[#allocation3 + $0x60] sm:$0xff] %vm728, %v722
    %744 = vst.msk [vmem:[#allocation3 + $0x70] sm:$0xff] %vm728, %v725
    %v745 = vld [vmem:[%s1] sm:$0xff]
    %v746 = vld [vmem:[%s1 + $0x8] sm:$0xff]
    %v747 = vpack.c.bf16 %v746, %v745
    %v748 = vld [vmem:[%s3] sm:$0xf]
    %v749 = vld [vmem:[%s3 + $0x4] sm:$0xf]
    %v750 = vld [vmem:[%s3 + $0x8] sm:$0xf]
    %v751 = vld [vmem:[%s3 + $0xc] sm:$0xf]
    %v752 = vld [vmem:[%s3 + $0x10] sm:$0xf]
    %v753 = vld [vmem:[%s3 + $0x14] sm:$0xf]
    %v754 = vld [vmem:[%s3 + $0x18] sm:$0xf]
    %v755 = vld [vmem:[%s3 + $0x1c] sm:$0xf]
    %v758 = vunpack.c.l.b16 %v748
    %v759 = vunpack.c.l.b16 %v749
    %v760 = vpack.c.b16 %v759, %v758
    %v763 = vsel %vm728, %v747, 0
    %765 = vmatprep.subr.bf16.mxu0 0
    %766 = vmatpush1.bf16.msra.mxu0 0
    %767 = vmatprep.subr.bf16.mxu0 0
    %768 = vmatpush1.bf16.msra.mxu0 0
    %769 = vmatprep.subr.bf16.mxu0 0
    %770 = vmatpush1.bf16.msra.mxu0 0
    %771 = vmatprep.subr.bf16.mxu0 0
    %772 = vmatpush1.bf16.msra.mxu0 0
    %773 = vmatprep.subr.bf16.mxu0 0
    %774 = vmatpush1.bf16.msra.mxu0 0
    %775 = vmatprep.subr.bf16.mxu0 0
    %776 = vmatpush1.bf16.msra.mxu0 0
    %777 = vmatprep.subr.bf16.mxu0 0
    %778 = vmatpush1.bf16.msra.mxu0 0
    %779 = vmatprep.subr.bf16.mxu0 0
    %780 = vmatpush1.bf16.msra.mxu0 %v760
    %781 = vmatprep.subr.bf16.mxu0 0
    %782 = vmatpush2.bf16.msra.mxu0 0
    %783 = vmatprep.subr.bf16.mxu0 0
    %784 = vmatpush2.bf16.msra.mxu0 0
    %785 = vmatprep.subr.bf16.mxu0 0
    %786 = vmatpush2.bf16.msra.mxu0 0
    %787 = vmatprep.subr.bf16.mxu0 0
    %788 = vmatpush2.bf16.msra.mxu0 0
    %789 = vmatprep.subr.bf16.mxu0 0
    %790 = vmatpush2.bf16.msra.mxu0 0
    %791 = vmatprep.subr.bf16.mxu0 0
    %792 = vmatpush2.bf16.msra.mxu0 0
    %793 = vmatprep.subr.bf16.mxu0 0
    %794 = vmatpush2.bf16.msra.mxu0 0
    %795 = vmatprep.subr.bf16.mxu0 0
    %796 = vmatpush2.bf16.msra.mxu0 0
    %797 = vmatprep.mubr.bf16.mxu0 0
    %798 = vmatmul.mubr.bf16.gmra.mxu0 %v763
    %v799 = vpop.f32.mrf.mxu0
    %v800 = vadd.f32 0.0, %v799
    %v801 = vpop.f32.mrf.mxu0
    %v802 = vpop.f32.mrf.mxu0
    %v803 = vadd.f32 0.0, %v802
    %v804 = vpop.f32.mrf.mxu0
    %805 = vdwg.mxu0
    %v808 = vunpack.c.l.b16 %v750
    %v809 = vunpack.c.l.b16 %v751
    %v810 = vpack.c.b16 %v809, %v808
    %812 = vmatprep.subr.bf16.mxu0 0
    %813 = vmatpush1.bf16.msra.mxu0 0
    %814 = vmatprep.subr.bf16.mxu0 0
    %815 = vmatpush1.bf16.msra.mxu0 0
    %816 = vmatprep.subr.bf16.mxu0 0
    %817 = vmatpush1.bf16.msra.mxu0 0
    %818 = vmatprep.subr.bf16.mxu0 0
    %819 = vmatpush1.bf16.msra.mxu0 0
    %820 = vmatprep.subr.bf16.mxu0 0
    %821 = vmatpush1.bf16.msra.mxu0 0
    %822 = vmatprep.subr.bf16.mxu0 0
    %823 = vmatpush1.bf16.msra.mxu0 0
    %824 = vmatprep.subr.bf16.mxu0 0
    %825 = vmatpush1.bf16.msra.mxu0 0
    %826 = vmatprep.subr.bf16.mxu0 0
    %827 = vmatpush1.bf16.msra.mxu0 %v810
    %828 = vmatprep.subr.bf16.mxu0 0
    %829 = vmatpush2.bf16.msra.mxu0 0
    %830 = vmatprep.subr.bf16.mxu0 0
    %831 = vmatpush2.bf16.msra.mxu0 0
    %832 = vmatprep.subr.bf16.mxu0 0
    %833 = vmatpush2.bf16.msra.mxu0 0
    %834 = vmatprep.subr.bf16.mxu0 0
    %835 = vmatpush2.bf16.msra.mxu0 0
    %836 = vmatprep.subr.bf16.mxu0 0
    %837 = vmatpush2.bf16.msra.mxu0 0
    %838 = vmatprep.subr.bf16.mxu0 0
    %839 = vmatpush2.bf16.msra.mxu0 0
    %840 = vmatprep.subr.bf16.mxu0 0
    %841 = vmatpush2.bf16.msra.mxu0 0
    %842 = vmatprep.subr.bf16.mxu0 0
    %843 = vmatpush2.bf16.msra.mxu0 0
    %844 = vmatprep.mubr.bf16.mxu0 0
    %845 = vmatmul.mubr.bf16.gmra.mxu0 %v763
    %v846 = vpop.f32.mrf.mxu0
    %v847 = vadd.f32 0.0, %v846
    %v848 = vpop.f32.mrf.mxu0
    %v849 = vpop.f32.mrf.mxu0
    %v850 = vadd.f32 0.0, %v849
    %v851 = vpop.f32.mrf.mxu0
    %852 = vdwg.mxu0
    %v855 = vunpack.c.l.b16 %v752
    %v856 = vunpack.c.l.b16 %v753
    %v857 = vpack.c.b16 %v856, %v855
    %859 = vmatprep.subr.bf16.mxu0 0
    %860 = vmatpush1.bf16.msra.mxu0 0
    %861 = vmatprep.subr.bf16.mxu0 0
    %862 = vmatpush1.bf16.msra.mxu0 0
    %863 = vmatprep.subr.bf16.mxu0 0
    %864 = vmatpush1.bf16.msra.mxu0 0
    %865 = vmatprep.subr.bf16.mxu0 0
    %866 = vmatpush1.bf16.msra.mxu0 0
    %867 = vmatprep.subr.bf16.mxu0 0
    %868 = vmatpush1.bf16.msra.mxu0 0
    %869 = vmatprep.subr.bf16.mxu0 0
    %870 = vmatpush1.bf16.msra.mxu0 0
    %871 = vmatprep.subr.bf16.mxu0 0
    %872 = vmatpush1.bf16.msra.mxu0 0
    %873 = vmatprep.subr.bf16.mxu0 0
    %874 = vmatpush1.bf16.msra.mxu0 %v857
    %875 = vmatprep.subr.bf16.mxu0 0
    %876 = vmatpush2.bf16.msra.mxu0 0
    %877 = vmatprep.subr.bf16.mxu0 0
    %878 = vmatpush2.bf16.msra.mxu0 0
    %879 = vmatprep.subr.bf16.mxu0 0
    %880 = vmatpush2.bf16.msra.mxu0 0
    %881 = vmatprep.subr.bf16.mxu0 0
    %882 = vmatpush2.bf16.msra.mxu0 0
    %883 = vmatprep.subr.bf16.mxu0 0
    %884 = vmatpush2.bf16.msra.mxu0 0
    %885 = vmatprep.subr.bf16.mxu0 0
    %886 = vmatpush2.bf16.msra.mxu0 0
    %887 = vmatprep.subr.bf16.mxu0 0
    %888 = vmatpush2.bf16.msra.mxu0 0
    %889 = vmatprep.subr.bf16.mxu0 0
    %890 = vmatpush2.bf16.msra.mxu0 0
    %891 = vmatprep.mubr.bf16.mxu0 0
    %892 = vmatmul.mubr.bf16.gmra.mxu0 %v763
    %v893 = vpop.f32.mrf.mxu0
    %v894 = vadd.f32 0.0, %v893
    %v895 = vpop.f32.mrf.mxu0
    %v896 = vpop.f32.mrf.mxu0
    %v897 = vadd.f32 0.0, %v896
    %v898 = vpop.f32.mrf.mxu0
    %899 = vdwg.mxu0
    %v902 = vunpack.c.l.b16 %v754
    %v903 = vunpack.c.l.b16 %v755
    %v904 = vpack.c.b16 %v903, %v902
    %906 = vmatprep.subr.bf16.mxu0 0
    %907 = vmatpush1.bf16.msra.mxu0 0
    %908 = vmatprep.subr.bf16.mxu0 0
    %909 = vmatpush1.bf16.msra.mxu0 0
    %910 = vmatprep.subr.bf16.mxu0 0
    %911 = vmatpush1.bf16.msra.mxu0 0
    %912 = vmatprep.subr.bf16.mxu0 0
    %913 = vmatpush1.bf16.msra.mxu0 0
    %914 = vmatprep.subr.bf16.mxu0 0
    %915 = vmatpush1.bf16.msra.mxu0 0
    %916 = vmatprep.subr.bf16.mxu0 0
    %917 = vmatpush1.bf16.msra.mxu0 0
    %918 = vmatprep.subr.bf16.mxu0 0
    %919 = vmatpush1.bf16.msra.mxu0 0
    %920 = vmatprep.subr.bf16.mxu0 0
    %921 = vmatpush1.bf16.msra.mxu0 %v904
    %922 = vmatprep.subr.bf16.mxu0 0
    %923 = vmatpush2.bf16.msra.mxu0 0
    %924 = vmatprep.subr.bf16.mxu0 0
    %925 = vmatpush2.bf16.msra.mxu0 0
    %926 = vmatprep.subr.bf16.mxu0 0
    %927 = vmatpush2.bf16.msra.mxu0 0
    %928 = vmatprep.subr.bf16.mxu0 0
    %929 = vmatpush2.bf16.msra.mxu0 0
    %930 = vmatprep.subr.bf16.mxu0 0
    %931 = vmatpush2.bf16.msra.mxu0 0
    %932 = vmatprep.subr.bf16.mxu0 0
    %933 = vmatpush2.bf16.msra.mxu0 0
    %934 = vmatprep.subr.bf16.mxu0 0
    %935 = vmatpush2.bf16.msra.mxu0 0
    %936 = vmatprep.subr.bf16.mxu0 0
    %937 = vmatpush2.bf16.msra.mxu0 0
    %938 = vmatprep.mubr.bf16.mxu0 0
    %939 = vmatmul.mubr.bf16.gmra.mxu0 %v763
    %v940 = vpop.f32.mrf.mxu0
    %v941 = vadd.f32 0.0, %v940
    %v942 = vpop.f32.mrf.mxu0
    %v943 = vpop.f32.mrf.mxu0
    %v944 = vadd.f32 0.0, %v943
    %v945 = vpop.f32.mrf.mxu0
    %946 = vdwg.mxu0
    %v947 = vld [vmem:[%s5] sm:$0xf]
    %v948 = vld [vmem:[%s5 + $0x4] sm:$0xf]
    %v949 = vld [vmem:[%s5 + $0x8] sm:$0xf]
    %v950 = vld [vmem:[%s5 + $0xc] sm:$0xf]
    %v951 = vld [vmem:[%s5 + $0x10] sm:$0xf]
    %v952 = vld [vmem:[%s5 + $0x14] sm:$0xf]
    %v953 = vld [vmem:[%s5 + $0x18] sm:$0xf]
    %v954 = vld [vmem:[%s5 + $0x1c] sm:$0xf]
    %v957 = vunpack.c.l.b16 %v947
    %v958 = vunpack.c.l.b16 %v948
    %v959 = vpack.c.b16 %v958, %v957
    %961 = vmatprep.subr.bf16.mxu0 0
    %962 = vmatpush1.bf16.msra.mxu0 0
    %963 = vmatprep.subr.bf16.mxu0 0
    %964 = vmatpush1.bf16.msra.mxu0 0
    %965 = vmatprep.subr.bf16.mxu0 0
    %966 = vmatpush1.bf16.msra.mxu0 0
    %967 = vmatprep.subr.bf16.mxu0 0
    %968 = vmatpush1.bf16.msra.mxu0 0
    %969 = vmatprep.subr.bf16.mxu0 0
    %970 = vmatpush1.bf16.msra.mxu0 0
    %971 = vmatprep.subr.bf16.mxu0 0
    %972 = vmatpush1.bf16.msra.mxu0 0
    %973 = vmatprep.subr.bf16.mxu0 0
    %974 = vmatpush1.bf16.msra.mxu0 0
    %975 = vmatprep.subr.bf16.mxu0 0
    %976 = vmatpush1.bf16.msra.mxu0 %v959
    %977 = vmatprep.subr.bf16.mxu0 0
    %978 = vmatpush2.bf16.msra.mxu0 0
    %979 = vmatprep.subr.bf16.mxu0 0
    %980 = vmatpush2.bf16.msra.mxu0 0
    %981 = vmatprep.subr.bf16.mxu0 0
    %982 = vmatpush2.bf16.msra.mxu0 0
    %983 = vmatprep.subr.bf16.mxu0 0
    %984 = vmatpush2.bf16.msra.mxu0 0
    %985 = vmatprep.subr.bf16.mxu0 0
    %986 = vmatpush2.bf16.msra.mxu0 0
    %987 = vmatprep.subr.bf16.mxu0 0
    %988 = vmatpush2.bf16.msra.mxu0 0
    %989 = vmatprep.subr.bf16.mxu0 0
    %990 = vmatpush2.bf16.msra.mxu0 0
    %991 = vmatprep.subr.bf16.mxu0 0
    %992 = vmatpush2.bf16.msra.mxu0 0
    %993 = vmatprep.mubr.bf16.mxu0 0
    %994 = vmatmul.mubr.bf16.gmra.mxu0 %v763
    %v995 = vpop.f32.mrf.mxu0
    %v996 = vadd.f32 0.0, %v995
    %v997 = vpop.f32.mrf.mxu0
    %v998 = vpop.f32.mrf.mxu0
    %v999 = vadd.f32 0.0, %v998
    %v1000 = vpop.f32.mrf.mxu0
    %1001 = vdwg.mxu0
    %v1004 = vunpack.c.l.b16 %v949
    %v1005 = vunpack.c.l.b16 %v950
    %v1006 = vpack.c.b16 %v1005, %v1004
    %1008 = vmatprep.subr.bf16.mxu0 0
    %1009 = vmatpush1.bf16.msra.mxu0 0
    %1010 = vmatprep.subr.bf16.mxu0 0
    %1011 = vmatpush1.bf16.msra.mxu0 0
    %1012 = vmatprep.subr.bf16.mxu0 0
    %1013 = vmatpush1.bf16.msra.mxu0 0
    %1014 = vmatprep.subr.bf16.mxu0 0
    %1015 = vmatpush1.bf16.msra.mxu0 0
    %1016 = vmatprep.subr.bf16.mxu0 0
    %1017 = vmatpush1.bf16.msra.mxu0 0
    %1018 = vmatprep.subr.bf16.mxu0 0
    %1019 = vmatpush1.bf16.msra.mxu0 0
    %1020 = vmatprep.subr.bf16.mxu0 0
    %1021 = vmatpush1.bf16.msra.mxu0 0
    %1022 = vmatprep.subr.bf16.mxu0 0
    %1023 = vmatpush1.bf16.msra.mxu0 %v1006
    %1024 = vmatprep.subr.bf16.mxu0 0
    %1025 = vmatpush2.bf16.msra.mxu0 0
    %1026 = vmatprep.subr.bf16.mxu0 0
    %1027 = vmatpush2.bf16.msra.mxu0 0
    %1028 = vmatprep.subr.bf16.mxu0 0
    %1029 = vmatpush2.bf16.msra.mxu0 0
    %1030 = vmatprep.subr.bf16.mxu0 0
    %1031 = vmatpush2.bf16.msra.mxu0 0
    %1032 = vmatprep.subr.bf16.mxu0 0
    %1033 = vmatpush2.bf16.msra.mxu0 0
    %1034 = vmatprep.subr.bf16.mxu0 0
    %1035 = vmatpush2.bf16.msra.mxu0 0
    %1036 = vmatprep.subr.bf16.mxu0 0
    %1037 = vmatpush2.bf16.msra.mxu0 0
    %1038 = vmatprep.subr.bf16.mxu0 0
    %1039 = vmatpush2.bf16.msra.mxu0 0
    %1040 = vmatprep.mubr.bf16.mxu0 0
    %1041 = vmatmul.mubr.bf16.gmra.mxu0 %v763
    %v1042 = vpop.f32.mrf.mxu0
    %v1043 = vadd.f32 0.0, %v1042
    %v1044 = vpop.f32.mrf.mxu0
    %v1045 = vpop.f32.mrf.mxu0
    %v1046 = vadd.f32 0.0, %v1045
    %v1047 = vpop.f32.mrf.mxu0
    %1048 = vdwg.mxu0
    %v1051 = vunpack.c.l.b16 %v951
    %v1052 = vunpack.c.l.b16 %v952
    %v1053 = vpack.c.b16 %v1052, %v1051
    %1055 = vmatprep.subr.bf16.mxu0 0
    %1056 = vmatpush1.bf16.msra.mxu0 0
    %1057 = vmatprep.subr.bf16.mxu0 0
    %1058 = vmatpush1.bf16.msra.mxu0 0
    %1059 = vmatprep.subr.bf16.mxu0 0
    %1060 = vmatpush1.bf16.msra.mxu0 0
    %1061 = vmatprep.subr.bf16.mxu0 0
    %1062 = vmatpush1.bf16.msra.mxu0 0
    %1063 = vmatprep.subr.bf16.mxu0 0
    %1064 = vmatpush1.bf16.msra.mxu0 0
    %1065 = vmatprep.subr.bf16.mxu0 0
    %1066 = vmatpush1.bf16.msra.mxu0 0
    %1067 = vmatprep.subr.bf16.mxu0 0
    %1068 = vmatpush1.bf16.msra.mxu0 0
    %1069 = vmatprep.subr.bf16.mxu0 0
    %1070 = vmatpush1.bf16.msra.mxu0 %v1053
    %1071 = vmatprep.subr.bf16.mxu0 0
    %1072 = vmatpush2.bf16.msra.mxu0 0
    %1073 = vmatprep.subr.bf16.mxu0 0
    %1074 = vmatpush2.bf16.msra.mxu0 0
    %1075 = vmatprep.subr.bf16.mxu0 0
    %1076 = vmatpush2.bf16.msra.mxu0 0
    %1077 = vmatprep.subr.bf16.mxu0 0
    %1078 = vmatpush2.bf16.msra.mxu0 0
    %1079 = vmatprep.subr.bf16.mxu0 0
    %1080 = vmatpush2.bf16.msra.mxu0 0
    %1081 = vmatprep.subr.bf16.mxu0 0
    %1082 = vmatpush2.bf16.msra.mxu0 0
    %1083 = vmatprep.subr.bf16.mxu0 0
    %1084 = vmatpush2.bf16.msra.mxu0 0
    %1085 = vmatprep.subr.bf16.mxu0 0
    %1086 = vmatpush2.bf16.msra.mxu0 0
    %1087 = vmatprep.mubr.bf16.mxu0 0
    %1088 = vmatmul.mubr.bf16.gmra.mxu0 %v763
    %v1089 = vpop.f32.mrf.mxu0
    %v1090 = vadd.f32 0.0, %v1089
    %v1091 = vpop.f32.mrf.mxu0
    %v1092 = vpop.f32.mrf.mxu0
    %v1093 = vadd.f32 0.0, %v1092
    %v1094 = vpop.f32.mrf.mxu0
    %1095 = vdwg.mxu0
    %v1098 = vunpack.c.l.b16 %v953
    %v1099 = vunpack.c.l.b16 %v954
    %v1100 = vpack.c.b16 %v1099, %v1098
    %1102 = vmatprep.subr.bf16.mxu0 0
    %1103 = vmatpush1.bf16.msra.mxu0 0
    %1104 = vmatprep.subr.bf16.mxu0 0
    %1105 = vmatpush1.bf16.msra.mxu0 0
    %1106 = vmatprep.subr.bf16.mxu0 0
    %1107 = vmatpush1.bf16.msra.mxu0 0
    %1108 = vmatprep.subr.bf16.mxu0 0
    %1109 = vmatpush1.bf16.msra.mxu0 0
    %1110 = vmatprep.subr.bf16.mxu0 0
    %1111 = vmatpush1.bf16.msra.mxu0 0
    %1112 = vmatprep.subr.bf16.mxu0 0
    %1113 = vmatpush1.bf16.msra.mxu0 0
    %1114 = vmatprep.subr.bf16.mxu0 0
    %1115 = vmatpush1.bf16.msra.mxu0 0
    %1116 = vmatprep.subr.bf16.mxu0 0
    %1117 = vmatpush1.bf16.msra.mxu0 %v1100
    %1118 = vmatprep.subr.bf16.mxu0 0
    %1119 = vmatpush2.bf16.msra.mxu0 0
    %1120 = vmatprep.subr.bf16.mxu0 0
    %1121 = vmatpush2.bf16.msra.mxu0 0
    %1122 = vmatprep.subr.bf16.mxu0 0
    %1123 = vmatpush2.bf16.msra.mxu0 0
    %1124 = vmatprep.subr.bf16.mxu0 0
    %1125 = vmatpush2.bf16.msra.mxu0 0
    %1126 = vmatprep.subr.bf16.mxu0 0
    %1127 = vmatpush2.bf16.msra.mxu0 0
    %1128 = vmatprep.subr.bf16.mxu0 0
    %1129 = vmatpush2.bf16.msra.mxu0 0
    %1130 = vmatprep.subr.bf16.mxu0 0
    %1131 = vmatpush2.bf16.msra.mxu0 0
    %1132 = vmatprep.subr.bf16.mxu0 0
    %1133 = vmatpush2.bf16.msra.mxu0 0
    %1134 = vmatprep.mubr.bf16.mxu0 0
    %1135 = vmatmul.mubr.bf16.gmra.mxu0 %v763
    %v1136 = vpop.f32.mrf.mxu0
    %v1137 = vadd.f32 0.0, %v1136
    %v1138 = vpop.f32.mrf.mxu0
    %v1139 = vpop.f32.mrf.mxu0
    %v1140 = vadd.f32 0.0, %v1139
    %v1141 = vpop.f32.mrf.mxu0
    %1142 = vdwg.mxu0
    %v1143 = vld [vmem:[%s7] sm:$0xf]
    %v1144 = vld [vmem:[%s7 + $0x4] sm:$0xf]
    %v1145 = vld [vmem:[%s7 + $0x8] sm:$0xf]
    %v1146 = vld [vmem:[%s7 + $0xc] sm:$0xf]
    %v1147 = vld [vmem:[%s7 + $0x10] sm:$0xf]
    %v1148 = vld [vmem:[%s7 + $0x14] sm:$0xf]
    %v1149 = vld [vmem:[%s7 + $0x18] sm:$0xf]
    %v1150 = vld [vmem:[%s7 + $0x1c] sm:$0xf]
    %v1153 = vunpack.c.l.b16 %v1143
    %v1154 = vunpack.c.l.b16 %v1144
    %v1155 = vpack.c.b16 %v1154, %v1153
    %1157 = vmatprep.subr.bf16.mxu0 0
    %1158 = vmatpush1.bf16.msra.mxu0 0
    %1159 = vmatprep.subr.bf16.mxu0 0
    %1160 = vmatpush1.bf16.msra.mxu0 0
    %1161 = vmatprep.subr.bf16.mxu0 0
    %1162 = vmatpush1.bf16.msra.mxu0 0
    %1163 = vmatprep.subr.bf16.mxu0 0
    %1164 = vmatpush1.bf16.msra.mxu0 0
    %1165 = vmatprep.subr.bf16.mxu0 0
    %1166 = vmatpush1.bf16.msra.mxu0 0
    %1167 = vmatprep.subr.bf16.mxu0 0
    %1168 = vmatpush1.bf16.msra.mxu0 0
    %1169 = vmatprep.subr.bf16.mxu0 0
    %1170 = vmatpush1.bf16.msra.mxu0 0
    %1171 = vmatprep.subr.bf16.mxu0 0
    %1172 = vmatpush1.bf16.msra.mxu0 %v1155
    %1173 = vmatprep.subr.bf16.mxu0 0
    %1174 = vmatpush2.bf16.msra.mxu0 0
    %1175 = vmatprep.subr.bf16.mxu0 0
    %1176 = vmatpush2.bf16.msra.mxu0 0
    %1177 = vmatprep.subr.bf16.mxu0 0
    %1178 = vmatpush2.bf16.msra.mxu0 0
    %1179 = vmatprep.subr.bf16.mxu0 0
    %1180 = vmatpush2.bf16.msra.mxu0 0
    %1181 = vmatprep.subr.bf16.mxu0 0
    %1182 = vmatpush2.bf16.msra.mxu0 0
    %1183 = vmatprep.subr.bf16.mxu0 0
    %1184 = vmatpush2.bf16.msra.mxu0 0
    %1185 = vmatprep.subr.bf16.mxu0 0
    %1186 = vmatpush2.bf16.msra.mxu0 0
    %1187 = vmatprep.subr.bf16.mxu0 0
    %1188 = vmatpush2.bf16.msra.mxu0 0
    %1189 = vmatprep.mubr.bf16.mxu0 0
    %1190 = vmatmul.mubr.bf16.gmra.mxu0 %v763
    %v1191 = vpop.f32.mrf.mxu0
    %v1192 = vadd.f32 0.0, %v1191
    %v1193 = vpop.f32.mrf.mxu0
    %v1194 = vpop.f32.mrf.mxu0
    %v1195 = vadd.f32 0.0, %v1194
    %v1196 = vpop.f32.mrf.mxu0
    %1197 = vdwg.mxu0
    %v1200 = vunpack.c.l.b16 %v1145
    %v1201 = vunpack.c.l.b16 %v1146
    %v1202 = vpack.c.b16 %v1201, %v1200
    %1204 = vmatprep.subr.bf16.mxu0 0
    %1205 = vmatpush1.bf16.msra.mxu0 0
    %1206 = vmatprep.subr.bf16.mxu0 0
    %1207 = vmatpush1.bf16.msra.mxu0 0
    %1208 = vmatprep.subr.bf16.mxu0 0
    %1209 = vmatpush1.bf16.msra.mxu0 0
    %1210 = vmatprep.subr.bf16.mxu0 0
    %1211 = vmatpush1.bf16.msra.mxu0 0
    %1212 = vmatprep.subr.bf16.mxu0 0
    %1213 = vmatpush1.bf16.msra.mxu0 0
    %1214 = vmatprep.subr.bf16.mxu0 0
    %1215 = vmatpush1.bf16.msra.mxu0 0
    %1216 = vmatprep.subr.bf16.mxu0 0
    %1217 = vmatpush1.bf16.msra.mxu0 0
    %1218 = vmatprep.subr.bf16.mxu0 0
    %1219 = vmatpush1.bf16.msra.mxu0 %v1202
    %1220 = vmatprep.subr.bf16.mxu0 0
    %1221 = vmatpush2.bf16.msra.mxu0 0
    %1222 = vmatprep.subr.bf16.mxu0 0
    %1223 = vmatpush2.bf16.msra.mxu0 0
    %1224 = vmatprep.subr.bf16.mxu0 0
    %1225 = vmatpush2.bf16.msra.mxu0 0
    %1226 = vmatprep.subr.bf16.mxu0 0
    %1227 = vmatpush2.bf16.msra.mxu0 0
    %1228 = vmatprep.subr.bf16.mxu0 0
    %1229 = vmatpush2.bf16.msra.mxu0 0
    %1230 = vmatprep.subr.bf16.mxu0 0
    %1231 = vmatpush2.bf16.msra.mxu0 0
    %1232 = vmatprep.subr.bf16.mxu0 0
    %1233 = vmatpush2.bf16.msra.mxu0 0
    %1234 = vmatprep.subr.bf16.mxu0 0
    %1235 = vmatpush2.bf16.msra.mxu0 0
    %1236 = vmatprep.mubr.bf16.mxu0 0
    %1237 = vmatmul.mubr.bf16.gmra.mxu0 %v763
    %v1238 = vpop.f32.mrf.mxu0
    %v1239 = vadd.f32 0.0, %v1238
    %v1240 = vpop.f32.mrf.mxu0
    %v1241 = vpop.f32.mrf.mxu0
    %v1242 = vadd.f32 0.0, %v1241
    %v1243 = vpop.f32.mrf.mxu0
    %1244 = vdwg.mxu0
    %v1247 = vunpack.c.l.b16 %v1147
    %v1248 = vunpack.c.l.b16 %v1148
    %v1249 = vpack.c.b16 %v1248, %v1247
    %1251 = vmatprep.subr.bf16.mxu0 0
    %1252 = vmatpush1.bf16.msra.mxu0 0
    %1253 = vmatprep.subr.bf16.mxu0 0
    %1254 = vmatpush1.bf16.msra.mxu0 0
    %1255 = vmatprep.subr.bf16.mxu0 0
    %1256 = vmatpush1.bf16.msra.mxu0 0
    %1257 = vmatprep.subr.bf16.mxu0 0
    %1258 = vmatpush1.bf16.msra.mxu0 0
    %1259 = vmatprep.subr.bf16.mxu0 0
    %1260 = vmatpush1.bf16.msra.mxu0 0
    %1261 = vmatprep.subr.bf16.mxu0 0
    %1262 = vmatpush1.bf16.msra.mxu0 0
    %1263 = vmatprep.subr.bf16.mxu0 0
    %1264 = vmatpush1.bf16.msra.mxu0 0
    %1265 = vmatprep.subr.bf16.mxu0 0
    %1266 = vmatpush1.bf16.msra.mxu0 %v1249
    %1267 = vmatprep.subr.bf16.mxu0 0
    %1268 = vmatpush2.bf16.msra.mxu0 0
    %1269 = vmatprep.subr.bf16.mxu0 0
    %1270 = vmatpush2.bf16.msra.mxu0 0
    %1271 = vmatprep.subr.bf16.mxu0 0
    %1272 = vmatpush2.bf16.msra.mxu0 0
    %1273 = vmatprep.subr.bf16.mxu0 0
    %1274 = vmatpush2.bf16.msra.mxu0 0
    %1275 = vmatprep.subr.bf16.mxu0 0
    %1276 = vmatpush2.bf16.msra.mxu0 0
    %1277 = vmatprep.subr.bf16.mxu0 0
    %1278 = vmatpush2.bf16.msra.mxu0 0
    %1279 = vmatprep.subr.bf16.mxu0 0
    %1280 = vmatpush2.bf16.msra.mxu0 0
    %1281 = vmatprep.subr.bf16.mxu0 0
    %1282 = vmatpush2.bf16.msra.mxu0 0
    %1283 = vmatprep.mubr.bf16.mxu0 0
    %1284 = vmatmul.mubr.bf16.gmra.mxu0 %v763
    %v1285 = vpop.f32.mrf.mxu0
    %v1286 = vadd.f32 0.0, %v1285
    %v1287 = vpop.f32.mrf.mxu0
    %v1288 = vpop.f32.mrf.mxu0
    %v1289 = vadd.f32 0.0, %v1288
    %v1290 = vpop.f32.mrf.mxu0
    %1291 = vdwg.mxu0
    %v1294 = vunpack.c.l.b16 %v1149
    %v1295 = vunpack.c.l.b16 %v1150
    %v1296 = vpack.c.b16 %v1295, %v1294
    %1298 = vmatprep.subr.bf16.mxu0 0
    %1299 = vmatpush1.bf16.msra.mxu0 0
    %1300 = vmatprep.subr.bf16.mxu0 0
    %1301 = vmatpush1.bf16.msra.mxu0 0
    %1302 = vmatprep.subr.bf16.mxu0 0
    %1303 = vmatpush1.bf16.msra.mxu0 0
    %1304 = vmatprep.subr.bf16.mxu0 0
    %1305 = vmatpush1.bf16.msra.mxu0 0
    %1306 = vmatprep.subr.bf16.mxu0 0
    %1307 = vmatpush1.bf16.msra.mxu0 0
    %1308 = vmatprep.subr.bf16.mxu0 0
    %1309 = vmatpush1.bf16.msra.mxu0 0
    %1310 = vmatprep.subr.bf16.mxu0 0
    %1311 = vmatpush1.bf16.msra.mxu0 0
    %1312 = vmatprep.subr.bf16.mxu0 0
    %1313 = vmatpush1.bf16.msra.mxu0 %v1296
    %1314 = vmatprep.subr.bf16.mxu0 0
    %1315 = vmatpush2.bf16.msra.mxu0 0
    %1316 = vmatprep.subr.bf16.mxu0 0
    %1317 = vmatpush2.bf16.msra.mxu0 0
    %1318 = vmatprep.subr.bf16.mxu0 0
    %1319 = vmatpush2.bf16.msra.mxu0 0
    %1320 = vmatprep.subr.bf16.mxu0 0
    %1321 = vmatpush2.bf16.msra.mxu0 0
    %1322 = vmatprep.subr.bf16.mxu0 0
    %1323 = vmatpush2.bf16.msra.mxu0 0
    %1324 = vmatprep.subr.bf16.mxu0 0
    %1325 = vmatpush2.bf16.msra.mxu0 0
    %1326 = vmatprep.subr.bf16.mxu0 0
    %1327 = vmatpush2.bf16.msra.mxu0 0
    %1328 = vmatprep.subr.bf16.mxu0 0
    %1329 = vmatpush2.bf16.msra.mxu0 0
    %1330 = vmatprep.mubr.bf16.mxu0 0
    %1331 = vmatmul.mubr.bf16.gmra.mxu0 %v763
    %v1332 = vpop.f32.mrf.mxu0
    %v1333 = vadd.f32 0.0, %v1332
    %v1334 = vpop.f32.mrf.mxu0
    %v1335 = vpop.f32.mrf.mxu0
    %v1336 = vadd.f32 0.0, %v1335
    %v1337 = vpop.f32.mrf.mxu0
    %1338 = vdwg.mxu0
    %1339 = vst.msk [vmem:[#allocation2 + $0x8] sm:$0xff] %vm728, %v996
    %1340 = vst.msk [vmem:[#allocation2 + $0x18] sm:$0xff] %vm728, %v999
    %1341 = vst.msk [vmem:[#allocation2 + $0x28] sm:$0xff] %vm728, %v1043
    %1342 = vst.msk [vmem:[#allocation2 + $0x38] sm:$0xff] %vm728, %v1046
    %1343 = vst.msk [vmem:[#allocation2 + $0x48] sm:$0xff] %vm728, %v1090
    %1344 = vst.msk [vmem:[#allocation2 + $0x58] sm:$0xff] %vm728, %v1093
    %1345 = vst.msk [vmem:[#allocation2 + $0x68] sm:$0xff] %vm728, %v1137
    %1346 = vst.msk [vmem:[#allocation2 + $0x78] sm:$0xff] %vm728, %v1140
    %1347 = vst.msk [vmem:[#allocation3 + $0x8] sm:$0xff] %vm728, %v1192
    %1348 = vst.msk [vmem:[#allocation3 + $0x18] sm:$0xff] %vm728, %v1195
    %1349 = vst.msk [vmem:[#allocation3 + $0x28] sm:$0xff] %vm728, %v1239
    %1350 = vst.msk [vmem:[#allocation3 + $0x38] sm:$0xff] %vm728, %v1242
    %1351 = vst.msk [vmem:[#allocation3 + $0x48] sm:$0xff] %vm728, %v1286
    %1352 = vst.msk [vmem:[#allocation3 + $0x58] sm:$0xff] %vm728, %v1289
    %1353 = vst.msk [vmem:[#allocation3 + $0x68] sm:$0xff] %vm728, %v1333
    %1354 = vst.msk [vmem:[#allocation3 + $0x78] sm:$0xff] %vm728, %v1336
    %v1355 = vld [vmem:[#allocation2] sm:$0xff]
    %v1356 = vld [vmem:[#allocation2 + $0x8] sm:$0xff]
    %v1357 = vld [vmem:[#allocation2 + $0x10] sm:$0xff]
    %v1358 = vld [vmem:[#allocation2 + $0x18] sm:$0xff]
    %v1359 = vld [vmem:[#allocation2 + $0x20] sm:$0xff]
    %v1360 = vld [vmem:[#allocation2 + $0x28] sm:$0xff]
    %v1361 = vld [vmem:[#allocation2 + $0x30] sm:$0xff]
    %v1362 = vld [vmem:[#allocation2 + $0x38] sm:$0xff]
    %v1363 = vld [vmem:[#allocation2 + $0x40] sm:$0xff]
    %v1364 = vld [vmem:[#allocation2 + $0x48] sm:$0xff]
    %v1365 = vld [vmem:[#allocation2 + $0x50] sm:$0xff]
    %v1366 = vld [vmem:[#allocation2 + $0x58] sm:$0xff]
    %v1367 = vld [vmem:[#allocation2 + $0x60] sm:$0xff]
    %v1368 = vld [vmem:[#allocation2 + $0x68] sm:$0xff]
    %v1369 = vld [vmem:[#allocation2 + $0x70] sm:$0xff]
    %v1370 = vld [vmem:[#allocation2 + $0x78] sm:$0xff]
    %v1371 = vpack.c.bf16 %v1356, %v1355
    %v1372 = vpack.c.bf16 %v1358, %v1357
    %v1373 = vpack.c.bf16 %v1360, %v1359
    %v1374 = vpack.c.bf16 %v1362, %v1361
    %v1375 = vpack.c.bf16 %v1364, %v1363
    %v1376 = vpack.c.bf16 %v1366, %v1365
    %v1377 = vpack.c.bf16 %v1368, %v1367
    %v1378 = vpack.c.bf16 %v1370, %v1369
    %v1379 = vld [vmem:[#allocation3] sm:$0xff]
    %v1380 = vld [vmem:[#allocation3 + $0x8] sm:$0xff]
    %v1381 = vld [vmem:[#allocation3 + $0x10] sm:$0xff]
    %v1382 = vld [vmem:[#allocation3 + $0x18] sm:$0xff]
    %v1383 = vld [vmem:[#allocation3 + $0x20] sm:$0xff]
    %v1384 = vld [vmem:[#allocation3 + $0x28] sm:$0xff]
    %v1385 = vld [vmem:[#allocation3 + $0x30] sm:$0xff]
    %v1386 = vld [vmem:[#allocation3 + $0x38] sm:$0xff]
    %v1387 = vld [vmem:[#allocation3 + $0x40] sm:$0xff]
    %v1388 = vld [vmem:[#allocation3 + $0x48] sm:$0xff]
    %v1389 = vld [vmem:[#allocation3 + $0x50] sm:$0xff]
    %v1390 = vld [vmem:[#allocation3 + $0x58] sm:$0xff]
    %v1391 = vld [vmem:[#allocation3 + $0x60] sm:$0xff]
    %v1392 = vld [vmem:[#allocation3 + $0x68] sm:$0xff]
    %v1393 = vld [vmem:[#allocation3 + $0x70] sm:$0xff]
    %v1394 = vld [vmem:[#allocation3 + $0x78] sm:$0xff]
    %v1395 = vpack.c.bf16 %v1380, %v1379
    %v1396 = vpack.c.bf16 %v1382, %v1381
    %v1397 = vpack.c.bf16 %v1384, %v1383
    %v1398 = vpack.c.bf16 %v1386, %v1385
    %v1399 = vpack.c.bf16 %v1388, %v1387
    %v1400 = vpack.c.bf16 %v1390, %v1389
    %v1401 = vpack.c.bf16 %v1392, %v1391
    %v1402 = vpack.c.bf16 %v1394, %v1393
    %v1403 = vpack.c.bf16 %v107, %v107
    %v1404 = vpack.c.bf16 %v110, %v110
    %v1405 = vpack.c.bf16 %v160, %v160
    %v1406 = vpack.c.bf16 %v163, %v163
    %v1407 = vpack.c.bf16 %v213, %v213
    %v1408 = vpack.c.bf16 %v216, %v216
    %v1409 = vpack.c.bf16 %v266, %v266
    %v1410 = vpack.c.bf16 %v269, %v269
    %v1412 = vsel %vm728, %v1403, 0
    %v1415 = vsel %vm728, %v1371, 0
    %1417 = vmatprep.subr.bf16.mxu0 0
    %1418 = vmatpush1.bf16.xpose.msra.mxu0 0
    %1419 = vmatprep.subr.bf16.mxu0 0
    %1420 = vmatpush1.bf16.xpose.msra.mxu0 0
    %1421 = vmatprep.subr.bf16.mxu0 0
    %1422 = vmatpush1.bf16.xpose.msra.mxu0 0
    %1423 = vmatprep.subr.bf16.mxu0 0
    %1424 = vmatpush1.bf16.xpose.msra.mxu0 0
    %1425 = vmatprep.subr.bf16.mxu0 0
    %1426 = vmatpush1.bf16.xpose.msra.mxu0 0
    %1427 = vmatprep.subr.bf16.mxu0 0
    %1428 = vmatpush1.bf16.xpose.msra.mxu0 0
    %1429 = vmatprep.subr.bf16.mxu0 0
    %1430 = vmatpush1.bf16.xpose.msra.mxu0 0
    %1431 = vmatprep.subr.bf16.mxu0 0
    %1432 = vmatpush1.bf16.xpose.msra.mxu0 %v1415
    %1433 = vmatprep.subr.bf16.mxu0 0
    %1434 = vmatpush2.bf16.xpose.msra.mxu0 0
    %1435 = vmatprep.subr.bf16.mxu0 0
    %1436 = vmatpush2.bf16.xpose.msra.mxu0 0
    %1437 = vmatprep.subr.bf16.mxu0 0
    %1438 = vmatpush2.bf16.xpose.msra.mxu0 0
    %1439 = vmatprep.subr.bf16.mxu0 0
    %1440 = vmatpush2.bf16.xpose.msra.mxu0 0
    %1441 = vmatprep.subr.bf16.mxu0 0
    %1442 = vmatpush2.bf16.xpose.msra.mxu0 0
    %1443 = vmatprep.subr.bf16.mxu0 0
    %1444 = vmatpush2.bf16.xpose.msra.mxu0 0
    %1445 = vmatprep.subr.bf16.mxu0 0
    %1446 = vmatpush2.bf16.xpose.msra.mxu0 0
    %1447 = vmatprep.subr.bf16.mxu0 0
    %1448 = vmatpush2.bf16.xpose.msra.mxu0 0
    %1449 = vmatprep.mubr.bf16.mxu0 0
    %1450 = vmatmul.mubr.bf16.gmra.mxu0 %v1412
    %v1451 = vpop.f32.mrf.mxu0
    %v1452 = vadd.f32 0.0, %v1451
    %v1453 = vpop.f32.mrf.mxu0
    %v1454 = vpop.f32.mrf.mxu0
    %v1455 = vpop.f32.mrf.mxu0
    %1456 = vdwg.mxu0
    %v1458 = vsel %vm728, %v1404, 0
    %v1461 = vsel %vm728, %v1372, 0
    %1463 = vmatprep.subr.bf16.mxu0 0
    %1464 = vmatpush1.bf16.xpose.msra.mxu0 0
    %1465 = vmatprep.subr.bf16.mxu0 0
    %1466 = vmatpush1.bf16.xpose.msra.mxu0 0
    %1467 = vmatprep.subr.bf16.mxu0 0
    %1468 = vmatpush1.bf16.xpose.msra.mxu0 0
    %1469 = vmatprep.subr.bf16.mxu0 0
    %1470 = vmatpush1.bf16.xpose.msra.mxu0 0
    %1471 = vmatprep.subr.bf16.mxu0 0
    %1472 = vmatpush1.bf16.xpose.msra.mxu0 0
    %1473 = vmatprep.subr.bf16.mxu0 0
    %1474 = vmatpush1.bf16.xpose.msra.mxu0 0
    %1475 = vmatprep.subr.bf16.mxu0 0
    %1476 = vmatpush1.bf16.xpose.msra.mxu0 0
    %1477 = vmatprep.subr.bf16.mxu0 0
    %1478 = vmatpush1.bf16.xpose.msra.mxu0 %v1461
    %1479 = vmatprep.subr.bf16.mxu0 0
    %1480 = vmatpush2.bf16.xpose.msra.mxu0 0
    %1481 = vmatprep.subr.bf16.mxu0 0
    %1482 = vmatpush2.bf16.xpose.msra.mxu0 0
    %1483 = vmatprep.subr.bf16.mxu0 0
    %1484 = vmatpush2.bf16.xpose.msra.mxu0 0
    %1485 = vmatprep.subr.bf16.mxu0 0
    %1486 = vmatpush2.bf16.xpose.msra.mxu0 0
    %1487 = vmatprep.subr.bf16.mxu0 0
    %1488 = vmatpush2.bf16.xpose.msra.mxu0 0
    %1489 = vmatprep.subr.bf16.mxu0 0
    %1490 = vmatpush2.bf16.xpose.msra.mxu0 0
    %1491 = vmatprep.subr.bf16.mxu0 0
    %1492 = vmatpush2.bf16.xpose.msra.mxu0 0
    %1493 = vmatprep.subr.bf16.mxu0 0
    %1494 = vmatpush2.bf16.xpose.msra.mxu0 0
    %1495 = vmatprep.mubr.bf16.mxu0 0
    %1496 = vmatmul.mubr.bf16.gmra.mxu0 %v1458
    %v1497 = vpop.f32.mrf.mxu0
    %v1498 = vadd.f32 0.0, %v1497
    %v1499 = vpop.f32.mrf.mxu0
    %v1500 = vpop.f32.mrf.mxu0
    %v1501 = vpop.f32.mrf.mxu0
    %1502 = vdwg.mxu0
    %v1504 = vsel %vm728, %v1405, 0
    %v1507 = vsel %vm728, %v1373, 0
    %1509 = vmatprep.subr.bf16.mxu0 0
    %1510 = vmatpush1.bf16.xpose.msra.mxu0 0
    %1511 = vmatprep.subr.bf16.mxu0 0
    %1512 = vmatpush1.bf16.xpose.msra.mxu0 0
    %1513 = vmatprep.subr.bf16.mxu0 0
    %1514 = vmatpush1.bf16.xpose.msra.mxu0 0
    %1515 = vmatprep.subr.bf16.mxu0 0
    %1516 = vmatpush1.bf16.xpose.msra.mxu0 0
    %1517 = vmatprep.subr.bf16.mxu0 0
    %1518 = vmatpush1.bf16.xpose.msra.mxu0 0
    %1519 = vmatprep.subr.bf16.mxu0 0
    %1520 = vmatpush1.bf16.xpose.msra.mxu0 0
    %1521 = vmatprep.subr.bf16.mxu0 0
    %1522 = vmatpush1.bf16.xpose.msra.mxu0 0
    %1523 = vmatprep.subr.bf16.mxu0 0
    %1524 = vmatpush1.bf16.xpose.msra.mxu0 %v1507
    %1525 = vmatprep.subr.bf16.mxu0 0
    %1526 = vmatpush2.bf16.xpose.msra.mxu0 0
    %1527 = vmatprep.subr.bf16.mxu0 0
    %1528 = vmatpush2.bf16.xpose.msra.mxu0 0
    %1529 = vmatprep.subr.bf16.mxu0 0
    %1530 = vmatpush2.bf16.xpose.msra.mxu0 0
    %1531 = vmatprep.subr.bf16.mxu0 0
    %1532 = vmatpush2.bf16.xpose.msra.mxu0 0
    %1533 = vmatprep.subr.bf16.mxu0 0
    %1534 = vmatpush2.bf16.xpose.msra.mxu0 0
    %1535 = vmatprep.subr.bf16.mxu0 0
    %1536 = vmatpush2.bf16.xpose.msra.mxu0 0
    %1537 = vmatprep.subr.bf16.mxu0 0
    %1538 = vmatpush2.bf16.xpose.msra.mxu0 0
    %1539 = vmatprep.subr.bf16.mxu0 0
    %1540 = vmatpush2.bf16.xpose.msra.mxu0 0
    %1541 = vmatprep.mubr.bf16.mxu0 0
    %1542 = vmatmul.mubr.bf16.gmra.mxu0 %v1504
    %v1543 = vpop.f32.mrf.mxu0
    %v1544 = vadd.f32 0.0, %v1543
    %v1545 = vpop.f32.mrf.mxu0
    %v1546 = vpop.f32.mrf.mxu0
    %v1547 = vpop.f32.mrf.mxu0
    %1548 = vdwg.mxu0
    %v1550 = vsel %vm728, %v1406, 0
    %v1553 = vsel %vm728, %v1374, 0
    %1555 = vmatprep.subr.bf16.mxu0 0
    %1556 = vmatpush1.bf16.xpose.msra.mxu0 0
    %1557 = vmatprep.subr.bf16.mxu0 0
    %1558 = vmatpush1.bf16.xpose.msra.mxu0 0
    %1559 = vmatprep.subr.bf16.mxu0 0
    %1560 = vmatpush1.bf16.xpose.msra.mxu0 0
    %1561 = vmatprep.subr.bf16.mxu0 0
    %1562 = vmatpush1.bf16.xpose.msra.mxu0 0
    %1563 = vmatprep.subr.bf16.mxu0 0
    %1564 = vmatpush1.bf16.xpose.msra.mxu0 0
    %1565 = vmatprep.subr.bf16.mxu0 0
    %1566 = vmatpush1.bf16.xpose.msra.mxu0 0
    %1567 = vmatprep.subr.bf16.mxu0 0
    %1568 = vmatpush1.bf16.xpose.msra.mxu0 0
    %1569 = vmatprep.subr.bf16.mxu0 0
    %1570 = vmatpush1.bf16.xpose.msra.mxu0 %v1553
    %1571 = vmatprep.subr.bf16.mxu0 0
    %1572 = vmatpush2.bf16.xpose.msra.mxu0 0
    %1573 = vmatprep.subr.bf16.mxu0 0
    %1574 = vmatpush2.bf16.xpose.msra.mxu0 0
    %1575 = vmatprep.subr.bf16.mxu0 0
    %1576 = vmatpush2.bf16.xpose.msra.mxu0 0
    %1577 = vmatprep.subr.bf16.mxu0 0
    %1578 = vmatpush2.bf16.xpose.msra.mxu0 0
    %1579 = vmatprep.subr.bf16.mxu0 0
    %1580 = vmatpush2.bf16.xpose.msra.mxu0 0
    %1581 = vmatprep.subr.bf16.mxu0 0
    %1582 = vmatpush2.bf16.xpose.msra.mxu0 0
    %1583 = vmatprep.subr.bf16.mxu0 0
    %1584 = vmatpush2.bf16.xpose.msra.mxu0 0
    %1585 = vmatprep.subr.bf16.mxu0 0
    %1586 = vmatpush2.bf16.xpose.msra.mxu0 0
    %1587 = vmatprep.mubr.bf16.mxu0 0
    %1588 = vmatmul.mubr.bf16.gmra.mxu0 %v1550
    %v1589 = vpop.f32.mrf.mxu0
    %v1590 = vadd.f32 0.0, %v1589
    %v1591 = vpop.f32.mrf.mxu0
    %v1592 = vpop.f32.mrf.mxu0
    %v1593 = vpop.f32.mrf.mxu0
    %1594 = vdwg.mxu0
    %v1596 = vsel %vm728, %v1407, 0
    %v1599 = vsel %vm728, %v1375, 0
    %1601 = vmatprep.subr.bf16.mxu0 0
    %1602 = vmatpush1.bf16.xpose.msra.mxu0 0
    %1603 = vmatprep.subr.bf16.mxu0 0
    %1604 = vmatpush1.bf16.xpose.msra.mxu0 0
    %1605 = vmatprep.subr.bf16.mxu0 0
    %1606 = vmatpush1.bf16.xpose.msra.mxu0 0
    %1607 = vmatprep.subr.bf16.mxu0 0
    %1608 = vmatpush1.bf16.xpose.msra.mxu0 0
    %1609 = vmatprep.subr.bf16.mxu0 0
    %1610 = vmatpush1.bf16.xpose.msra.mxu0 0
    %1611 = vmatprep.subr.bf16.mxu0 0
    %1612 = vmatpush1.bf16.xpose.msra.mxu0 0
    %1613 = vmatprep.subr.bf16.mxu0 0
    %1614 = vmatpush1.bf16.xpose.msra.mxu0 0
    %1615 = vmatprep.subr.bf16.mxu0 0
    %1616 = vmatpush1.bf16.xpose.msra.mxu0 %v1599
    %1617 = vmatprep.subr.bf16.mxu0 0
    %1618 = vmatpush2.bf16.xpose.msra.mxu0 0
    %1619 = vmatprep.subr.bf16.mxu0 0
    %1620 = vmatpush2.bf16.xpose.msra.mxu0 0
    %1621 = vmatprep.subr.bf16.mxu0 0
    %1622 = vmatpush2.bf16.xpose.msra.mxu0 0
    %1623 = vmatprep.subr.bf16.mxu0 0
    %1624 = vmatpush2.bf16.xpose.msra.mxu0 0
    %1625 = vmatprep.subr.bf16.mxu0 0
    %1626 = vmatpush2.bf16.xpose.msra.mxu0 0
    %1627 = vmatprep.subr.bf16.mxu0 0
    %1628 = vmatpush2.bf16.xpose.msra.mxu0 0
    %1629 = vmatprep.subr.bf16.mxu0 0
    %1630 = vmatpush2.bf16.xpose.msra.mxu0 0
    %1631 = vmatprep.subr.bf16.mxu0 0
    %1632 = vmatpush2.bf16.xpose.msra.mxu0 0
    %1633 = vmatprep.mubr.bf16.mxu0 0
    %1634 = vmatmul.mubr.bf16.gmra.mxu0 %v1596
    %v1635 = vpop.f32.mrf.mxu0
    %v1636 = vadd.f32 0.0, %v1635
    %v1637 = vpop.f32.mrf.mxu0
    %v1638 = vpop.f32.mrf.mxu0
    %v1639 = vpop.f32.mrf.mxu0
    %1640 = vdwg.mxu0
    %v1642 = vsel %vm728, %v1408, 0
    %v1645 = vsel %vm728, %v1376, 0
    %1647 = vmatprep.subr.bf16.mxu0 0
    %1648 = vmatpush1.bf16.xpose.msra.mxu0 0
    %1649 = vmatprep.subr.bf16.mxu0 0
    %1650 = vmatpush1.bf16.xpose.msra.mxu0 0
    %1651 = vmatprep.subr.bf16.mxu0 0
    %1652 = vmatpush1.bf16.xpose.msra.mxu0 0
    %1653 = vmatprep.subr.bf16.mxu0 0
    %1654 = vmatpush1.bf16.xpose.msra.mxu0 0
    %1655 = vmatprep.subr.bf16.mxu0 0
    %1656 = vmatpush1.bf16.xpose.msra.mxu0 0
    %1657 = vmatprep.subr.bf16.mxu0 0
    %1658 = vmatpush1.bf16.xpose.msra.mxu0 0
    %1659 = vmatprep.subr.bf16.mxu0 0
    %1660 = vmatpush1.bf16.xpose.msra.mxu0 0
    %1661 = vmatprep.subr.bf16.mxu0 0
    %1662 = vmatpush1.bf16.xpose.msra.mxu0 %v1645
    %1663 = vmatprep.subr.bf16.mxu0 0
    %1664 = vmatpush2.bf16.xpose.msra.mxu0 0
    %1665 = vmatprep.subr.bf16.mxu0 0
    %1666 = vmatpush2.bf16.xpose.msra.mxu0 0
    %1667 = vmatprep.subr.bf16.mxu0 0
    %1668 = vmatpush2.bf16.xpose.msra.mxu0 0
    %1669 = vmatprep.subr.bf16.mxu0 0
    %1670 = vmatpush2.bf16.xpose.msra.mxu0 0
    %1671 = vmatprep.subr.bf16.mxu0 0
    %1672 = vmatpush2.bf16.xpose.msra.mxu0 0
    %1673 = vmatprep.subr.bf16.mxu0 0
    %1674 = vmatpush2.bf16.xpose.msra.mxu0 0
    %1675 = vmatprep.subr.bf16.mxu0 0
    %1676 = vmatpush2.bf16.xpose.msra.mxu0 0
    %1677 = vmatprep.subr.bf16.mxu0 0
    %1678 = vmatpush2.bf16.xpose.msra.mxu0 0
    %1679 = vmatprep.mubr.bf16.mxu0 0
    %1680 = vmatmul.mubr.bf16.gmra.mxu0 %v1642
    %v1681 = vpop.f32.mrf.mxu0
    %v1682 = vadd.f32 0.0, %v1681
    %v1683 = vpop.f32.mrf.mxu0
    %v1684 = vpop.f32.mrf.mxu0
    %v1685 = vpop.f32.mrf.mxu0
    %1686 = vdwg.mxu0
    %v1688 = vsel %vm728, %v1409, 0
    %v1691 = vsel %vm728, %v1377, 0
    %1693 = vmatprep.subr.bf16.mxu0 0
    %1694 = vmatpush1.bf16.xpose.msra.mxu0 0
    %1695 = vmatprep.subr.bf16.mxu0 0
    %1696 = vmatpush1.bf16.xpose.msra.mxu0 0
    %1697 = vmatprep.subr.bf16.mxu0 0
    %1698 = vmatpush1.bf16.xpose.msra.mxu0 0
    %1699 = vmatprep.subr.bf16.mxu0 0
    %1700 = vmatpush1.bf16.xpose.msra.mxu0 0
    %1701 = vmatprep.subr.bf16.mxu0 0
    %1702 = vmatpush1.bf16.xpose.msra.mxu0 0
    %1703 = vmatprep.subr.bf16.mxu0 0
    %1704 = vmatpush1.bf16.xpose.msra.mxu0 0
    %1705 = vmatprep.subr.bf16.mxu0 0
    %1706 = vmatpush1.bf16.xpose.msra.mxu0 0
    %1707 = vmatprep.subr.bf16.mxu0 0
    %1708 = vmatpush1.bf16.xpose.msra.mxu0 %v1691
    %1709 = vmatprep.subr.bf16.mxu0 0
    %1710 = vmatpush2.bf16.xpose.msra.mxu0 0
    %1711 = vmatprep.subr.bf16.mxu0 0
    %1712 = vmatpush2.bf16.xpose.msra.mxu0 0
    %1713 = vmatprep.subr.bf16.mxu0 0
    %1714 = vmatpush2.bf16.xpose.msra.mxu0 0
    %1715 = vmatprep.subr.bf16.mxu0 0
    %1716 = vmatpush2.bf16.xpose.msra.mxu0 0
    %1717 = vmatprep.subr.bf16.mxu0 0
    %1718 = vmatpush2.bf16.xpose.msra.mxu0 0
    %1719 = vmatprep.subr.bf16.mxu0 0
    %1720 = vmatpush2.bf16.xpose.msra.mxu0 0
    %1721 = vmatprep.subr.bf16.mxu0 0
    %1722 = vmatpush2.bf16.xpose.msra.mxu0 0
    %1723 = vmatprep.subr.bf16.mxu0 0
    %1724 = vmatpush2.bf16.xpose.msra.mxu0 0
    %1725 = vmatprep.mubr.bf16.mxu0 0
    %1726 = vmatmul.mubr.bf16.gmra.mxu0 %v1688
    %v1727 = vpop.f32.mrf.mxu0
    %v1728 = vadd.f32 0.0, %v1727
    %v1729 = vpop.f32.mrf.mxu0
    %v1730 = vpop.f32.mrf.mxu0
    %v1731 = vpop.f32.mrf.mxu0
    %1732 = vdwg.mxu0
    %v1734 = vsel %vm728, %v1410, 0
    %v1737 = vsel %vm728, %v1378, 0
    %1739 = vmatprep.subr.bf16.mxu0 0
    %1740 = vmatpush1.bf16.xpose.msra.mxu0 0
    %1741 = vmatprep.subr.bf16.mxu0 0
    %1742 = vmatpush1.bf16.xpose.msra.mxu0 0
    %1743 = vmatprep.subr.bf16.mxu0 0
    %1744 = vmatpush1.bf16.xpose.msra.mxu0 0
    %1745 = vmatprep.subr.bf16.mxu0 0
    %1746 = vmatpush1.bf16.xpose.msra.mxu0 0
    %1747 = vmatprep.subr.bf16.mxu0 0
    %1748 = vmatpush1.bf16.xpose.msra.mxu0 0
    %1749 = vmatprep.subr.bf16.mxu0 0
    %1750 = vmatpush1.bf16.xpose.msra.mxu0 0
    %1751 = vmatprep.subr.bf16.mxu0 0
    %1752 = vmatpush1.bf16.xpose.msra.mxu0 0
    %1753 = vmatprep.subr.bf16.mxu0 0
    %1754 = vmatpush1.bf16.xpose.msra.mxu0 %v1737
    %1755 = vmatprep.subr.bf16.mxu0 0
    %1756 = vmatpush2.bf16.xpose.msra.mxu0 0
    %1757 = vmatprep.subr.bf16.mxu0 0
    %1758 = vmatpush2.bf16.xpose.msra.mxu0 0
    %1759 = vmatprep.subr.bf16.mxu0 0
    %1760 = vmatpush2.bf16.xpose.msra.mxu0 0
    %1761 = vmatprep.subr.bf16.mxu0 0
    %1762 = vmatpush2.bf16.xpose.msra.mxu0 0
    %1763 = vmatprep.subr.bf16.mxu0 0
    %1764 = vmatpush2.bf16.xpose.msra.mxu0 0
    %1765 = vmatprep.subr.bf16.mxu0 0
    %1766 = vmatpush2.bf16.xpose.msra.mxu0 0
    %1767 = vmatprep.subr.bf16.mxu0 0
    %1768 = vmatpush2.bf16.xpose.msra.mxu0 0
    %1769 = vmatprep.subr.bf16.mxu0 0
    %1770 = vmatpush2.bf16.xpose.msra.mxu0 0
    %1771 = vmatprep.mubr.bf16.mxu0 0
    %1772 = vmatmul.mubr.bf16.gmra.mxu0 %v1734
    %v1773 = vpop.f32.mrf.mxu0
    %v1774 = vadd.f32 0.0, %v1773
    %v1775 = vpop.f32.mrf.mxu0
    %v1776 = vpop.f32.mrf.mxu0
    %v1777 = vpop.f32.mrf.mxu0
    %1778 = vdwg.mxu0
    %v1779 = vsel %vm728, %v1452, -inf
    %1780 = vmax.xlane.f32.xlu0 %v1779
    %v1781 = vpop.xlane.xlu0 %1780
    %v1782 = vsel %vm728, %v1498, -inf
    %1783 = vmax.xlane.f32.xlu0 %v1782
    %v1784 = vpop.xlane.xlu0 %1783
    %v1785 = vsel %vm728, %v1544, -inf
    %1786 = vmax.xlane.f32.xlu0 %v1785
    %v1787 = vpop.xlane.xlu0 %1786
    %v1788 = vsel %vm728, %v1590, -inf
    %1789 = vmax.xlane.f32.xlu0 %v1788
    %v1790 = vpop.xlane.xlu0 %1789
    %v1791 = vsel %vm728, %v1636, -inf
    %1792 = vmax.xlane.f32.xlu0 %v1791
    %v1793 = vpop.xlane.xlu0 %1792
    %v1794 = vsel %vm728, %v1682, -inf
    %1795 = vmax.xlane.f32.xlu0 %v1794
    %v1796 = vpop.xlane.xlu0 %1795
    %v1797 = vsel %vm728, %v1728, -inf
    %1798 = vmax.xlane.f32.xlu0 %v1797
    %v1799 = vpop.xlane.xlu0 %1798
    %v1800 = vsel %vm728, %v1774, -inf
    %1801 = vmax.xlane.f32.xlu0 %v1800
    %v1802 = vpop.xlane.xlu0 %1801
    %v1803 = vsub.f32 %v1452, %v1781
    %v1804 = vsub.f32 %v1498, %v1784
    %v1805 = vsub.f32 %v1544, %v1787
    %v1806 = vsub.f32 %v1590, %v1790
    %v1807 = vsub.f32 %v1636, %v1793
    %v1808 = vsub.f32 %v1682, %v1796
    %v1809 = vsub.f32 %v1728, %v1799
    %v1810 = vsub.f32 %v1774, %v1802
    %v1811 = vmul.f32 %v1803, 1.442695
    %v1812 = vpow.pop %v1811
    %v1813 = vmul.f32 %v1804, 1.442695
    %v1814 = vpow.pop %v1813
    %v1815 = vmul.f32 %v1805, 1.442695
    %v1816 = vpow.pop %v1815
    %v1817 = vmul.f32 %v1806, 1.442695
    %v1818 = vpow.pop %v1817
    %v1819 = vmul.f32 %v1807, 1.442695
    %v1820 = vpow.pop %v1819
    %v1821 = vmul.f32 %v1808, 1.442695
    %v1822 = vpow.pop %v1821
    %v1823 = vmul.f32 %v1809, 1.442695
    %v1824 = vpow.pop %v1823
    %v1825 = vmul.f32 %v1810, 1.442695
    %v1826 = vpow.pop %v1825
    %v1827 = vsel %vm728, %v1812, 0.0
    %1828 = vadd.xlane.f32.xlu0 %v1827
    %v1829 = vpop.xlane.xlu0 %1828
    %v1830 = vsel %vm728, %v1814, 0.0
    %1831 = vadd.xlane.f32.xlu0 %v1830
    %v1832 = vpop.xlane.xlu0 %1831
    %v1833 = vsel %vm728, %v1816, 0.0
    %1834 = vadd.xlane.f32.xlu0 %v1833
    %v1835 = vpop.xlane.xlu0 %1834
    %v1836 = vsel %vm728, %v1818, 0.0
    %1837 = vadd.xlane.f32.xlu0 %v1836
    %v1838 = vpop.xlane.xlu0 %1837
    %v1839 = vsel %vm728, %v1820, 0.0
    %1840 = vadd.xlane.f32.xlu0 %v1839
    %v1841 = vpop.xlane.xlu0 %1840
    %v1842 = vsel %vm728, %v1822, 0.0
    %1843 = vadd.xlane.f32.xlu0 %v1842
    %v1844 = vpop.xlane.xlu0 %1843
    %v1845 = vsel %vm728, %v1824, 0.0
    %1846 = vadd.xlane.f32.xlu0 %v1845
    %v1847 = vpop.xlane.xlu0 %1846
    %v1848 = vsel %vm728, %v1826, 0.0
    %1849 = vadd.xlane.f32.xlu0 %v1848
    %v1850 = vpop.xlane.xlu0 %1849
    %v1851 = vrcp.pop %v1829
    %v1852 = vrcp.pop %v1832
    %v1853 = vrcp.pop %v1835
    %v1854 = vrcp.pop %v1838
    %v1855 = vrcp.pop %v1841
    %v1856 = vrcp.pop %v1844
    %v1857 = vrcp.pop %v1847
    %v1858 = vrcp.pop %v1850
    %v1859 = vpack.c.bf16 %v1812, %v1812
    %v1860 = vpack.c.bf16 %v1814, %v1814
    %v1861 = vpack.c.bf16 %v1816, %v1816
    %v1862 = vpack.c.bf16 %v1818, %v1818
    %v1863 = vpack.c.bf16 %v1820, %v1820
    %v1864 = vpack.c.bf16 %v1822, %v1822
    %v1865 = vpack.c.bf16 %v1824, %v1824
    %v1866 = vpack.c.bf16 %v1826, %v1826
    %v1868 = vsel %vm728, %v1859, 0
    %1870 = vmatprep.subr.bf16.mxu0 0
    %1871 = vmatpush1.bf16.msra.mxu0 0
    %1872 = vmatprep.subr.bf16.mxu0 0
    %1873 = vmatpush1.bf16.msra.mxu0 0
    %1874 = vmatprep.subr.bf16.mxu0 0
    %1875 = vmatpush1.bf16.msra.mxu0 0
    %1876 = vmatprep.subr.bf16.mxu0 0
    %1877 = vmatpush1.bf16.msra.mxu0 0
    %1878 = vmatprep.subr.bf16.mxu0 0
    %1879 = vmatpush1.bf16.msra.mxu0 0
    %1880 = vmatprep.subr.bf16.mxu0 0
    %1881 = vmatpush1.bf16.msra.mxu0 0
    %1882 = vmatprep.subr.bf16.mxu0 0
    %1883 = vmatpush1.bf16.msra.mxu0 0
    %1884 = vmatprep.subr.bf16.mxu0 0
    %1885 = vmatpush1.bf16.msra.mxu0 %v1395
    %1886 = vmatprep.subr.bf16.mxu0 0
    %1887 = vmatpush2.bf16.msra.mxu0 0
    %1888 = vmatprep.subr.bf16.mxu0 0
    %1889 = vmatpush2.bf16.msra.mxu0 0
    %1890 = vmatprep.subr.bf16.mxu0 0
    %1891 = vmatpush2.bf16.msra.mxu0 0
    %1892 = vmatprep.subr.bf16.mxu0 0
    %1893 = vmatpush2.bf16.msra.mxu0 0
    %1894 = vmatprep.subr.bf16.mxu0 0
    %1895 = vmatpush2.bf16.msra.mxu0 0
    %1896 = vmatprep.subr.bf16.mxu0 0
    %1897 = vmatpush2.bf16.msra.mxu0 0
    %1898 = vmatprep.subr.bf16.mxu0 0
    %1899 = vmatpush2.bf16.msra.mxu0 0
    %1900 = vmatprep.subr.bf16.mxu0 0
    %1901 = vmatpush2.bf16.msra.mxu0 0
    %1902 = vmatprep.mubr.bf16.mxu0 0
    %1903 = vmatmul.mubr.bf16.gmra.mxu0 %v1868
    %v1904 = vpop.f32.mrf.mxu0
    %v1905 = vadd.f32 0.0, %v1904
    %v1906 = vpop.f32.mrf.mxu0
    %v1907 = vpop.f32.mrf.mxu0
    %v1908 = vpop.f32.mrf.mxu0
    %1909 = vdwg.mxu0
    %v1911 = vsel %vm728, %v1860, 0
    %1913 = vmatprep.subr.bf16.mxu0 0
    %1914 = vmatpush1.bf16.msra.mxu0 0
    %1915 = vmatprep.subr.bf16.mxu0 0
    %1916 = vmatpush1.bf16.msra.mxu0 0
    %1917 = vmatprep.subr.bf16.mxu0 0
    %1918 = vmatpush1.bf16.msra.mxu0 0
    %1919 = vmatprep.subr.bf16.mxu0 0
    %1920 = vmatpush1.bf16.msra.mxu0 0
    %1921 = vmatprep.subr.bf16.mxu0 0
    %1922 = vmatpush1.bf16.msra.mxu0 0
    %1923 = vmatprep.subr.bf16.mxu0 0
    %1924 = vmatpush1.bf16.msra.mxu0 0
    %1925 = vmatprep.subr.bf16.mxu0 0
    %1926 = vmatpush1.bf16.msra.mxu0 0
    %1927 = vmatprep.subr.bf16.mxu0 0
    %1928 = vmatpush1.bf16.msra.mxu0 %v1396
    %1929 = vmatprep.subr.bf16.mxu0 0
    %1930 = vmatpush2.bf16.msra.mxu0 0
    %1931 = vmatprep.subr.bf16.mxu0 0
    %1932 = vmatpush2.bf16.msra.mxu0 0
    %1933 = vmatprep.subr.bf16.mxu0 0
    %1934 = vmatpush2.bf16.msra.mxu0 0
    %1935 = vmatprep.subr.bf16.mxu0 0
    %1936 = vmatpush2.bf16.msra.mxu0 0
    %1937 = vmatprep.subr.bf16.mxu0 0
    %1938 = vmatpush2.bf16.msra.mxu0 0
    %1939 = vmatprep.subr.bf16.mxu0 0
    %1940 = vmatpush2.bf16.msra.mxu0 0
    %1941 = vmatprep.subr.bf16.mxu0 0
    %1942 = vmatpush2.bf16.msra.mxu0 0
    %1943 = vmatprep.subr.bf16.mxu0 0
    %1944 = vmatpush2.bf16.msra.mxu0 0
    %1945 = vmatprep.mubr.bf16.mxu0 0
    %1946 = vmatmul.mubr.bf16.gmra.mxu0 %v1911
    %v1947 = vpop.f32.mrf.mxu0
    %v1948 = vadd.f32 0.0, %v1947
    %v1949 = vpop.f32.mrf.mxu0
    %v1950 = vpop.f32.mrf.mxu0
    %v1951 = vpop.f32.mrf.mxu0
    %1952 = vdwg.mxu0
    %v1954 = vsel %vm728, %v1861, 0
    %1956 = vmatprep.subr.bf16.mxu0 0
    %1957 = vmatpush1.bf16.msra.mxu0 0
    %1958 = vmatprep.subr.bf16.mxu0 0
    %1959 = vmatpush1.bf16.msra.mxu0 0
    %1960 = vmatprep.subr.bf16.mxu0 0
    %1961 = vmatpush1.bf16.msra.mxu0 0
    %1962 = vmatprep.subr.bf16.mxu0 0
    %1963 = vmatpush1.bf16.msra.mxu0 0
    %1964 = vmatprep.subr.bf16.mxu0 0
    %1965 = vmatpush1.bf16.msra.mxu0 0
    %1966 = vmatprep.subr.bf16.mxu0 0
    %1967 = vmatpush1.bf16.msra.mxu0 0
    %1968 = vmatprep.subr.bf16.mxu0 0
    %1969 = vmatpush1.bf16.msra.mxu0 0
    %1970 = vmatprep.subr.bf16.mxu0 0
    %1971 = vmatpush1.bf16.msra.mxu0 %v1397
    %1972 = vmatprep.subr.bf16.mxu0 0
    %1973 = vmatpush2.bf16.msra.mxu0 0
    %1974 = vmatprep.subr.bf16.mxu0 0
    %1975 = vmatpush2.bf16.msra.mxu0 0
    %1976 = vmatprep.subr.bf16.mxu0 0
    %1977 = vmatpush2.bf16.msra.mxu0 0
    %1978 = vmatprep.subr.bf16.mxu0 0
    %1979 = vmatpush2.bf16.msra.mxu0 0
    %1980 = vmatprep.subr.bf16.mxu0 0
    %1981 = vmatpush2.bf16.msra.mxu0 0
    %1982 = vmatprep.subr.bf16.mxu0 0
    %1983 = vmatpush2.bf16.msra.mxu0 0
    %1984 = vmatprep.subr.bf16.mxu0 0
    %1985 = vmatpush2.bf16.msra.mxu0 0
    %1986 = vmatprep.subr.bf16.mxu0 0
    %1987 = vmatpush2.bf16.msra.mxu0 0
    %1988 = vmatprep.mubr.bf16.mxu0 0
    %1989 = vmatmul.mubr.bf16.gmra.mxu0 %v1954
    %v1990 = vpop.f32.mrf.mxu0
    %v1991 = vadd.f32 0.0, %v1990
    %v1992 = vpop.f32.mrf.mxu0
    %v1993 = vpop.f32.mrf.mxu0
    %v1994 = vpop.f32.mrf.mxu0
    %1995 = vdwg.mxu0
    %v1997 = vsel %vm728, %v1862, 0
    %1999 = vmatprep.subr.bf16.mxu0 0
    %2000 = vmatpush1.bf16.msra.mxu0 0
    %2001 = vmatprep.subr.bf16.mxu0 0
    %2002 = vmatpush1.bf16.msra.mxu0 0
    %2003 = vmatprep.subr.bf16.mxu0 0
    %2004 = vmatpush1.bf16.msra.mxu0 0
    %2005 = vmatprep.subr.bf16.mxu0 0
    %2006 = vmatpush1.bf16.msra.mxu0 0
    %2007 = vmatprep.subr.bf16.mxu0 0
    %2008 = vmatpush1.bf16.msra.mxu0 0
    %2009 = vmatprep.subr.bf16.mxu0 0
    %2010 = vmatpush1.bf16.msra.mxu0 0
    %2011 = vmatprep.subr.bf16.mxu0 0
    %2012 = vmatpush1.bf16.msra.mxu0 0
    %2013 = vmatprep.subr.bf16.mxu0 0
    %2014 = vmatpush1.bf16.msra.mxu0 %v1398
    %2015 = vmatprep.subr.bf16.mxu0 0
    %2016 = vmatpush2.bf16.msra.mxu0 0
    %2017 = vmatprep.subr.bf16.mxu0 0
    %2018 = vmatpush2.bf16.msra.mxu0 0
    %2019 = vmatprep.subr.bf16.mxu0 0
    %2020 = vmatpush2.bf16.msra.mxu0 0
    %2021 = vmatprep.subr.bf16.mxu0 0
    %2022 = vmatpush2.bf16.msra.mxu0 0
    %2023 = vmatprep.subr.bf16.mxu0 0
    %2024 = vmatpush2.bf16.msra.mxu0 0
    %2025 = vmatprep.subr.bf16.mxu0 0
    %2026 = vmatpush2.bf16.msra.mxu0 0
    %2027 = vmatprep.subr.bf16.mxu0 0
    %2028 = vmatpush2.bf16.msra.mxu0 0
    %2029 = vmatprep.subr.bf16.mxu0 0
    %2030 = vmatpush2.bf16.msra.mxu0 0
    %2031 = vmatprep.mubr.bf16.mxu0 0
    %2032 = vmatmul.mubr.bf16.gmra.mxu0 %v1997
    %v2033 = vpop.f32.mrf.mxu0
    %v2034 = vadd.f32 0.0, %v2033
    %v2035 = vpop.f32.mrf.mxu0
    %v2036 = vpop.f32.mrf.mxu0
    %v2037 = vpop.f32.mrf.mxu0
    %2038 = vdwg.mxu0
    %v2040 = vsel %vm728, %v1863, 0
    %2042 = vmatprep.subr.bf16.mxu0 0
    %2043 = vmatpush1.bf16.msra.mxu0 0
    %2044 = vmatprep.subr.bf16.mxu0 0
    %2045 = vmatpush1.bf16.msra.mxu0 0
    %2046 = vmatprep.subr.bf16.mxu0 0
    %2047 = vmatpush1.bf16.msra.mxu0 0
    %2048 = vmatprep.subr.bf16.mxu0 0
    %2049 = vmatpush1.bf16.msra.mxu0 0
    %2050 = vmatprep.subr.bf16.mxu0 0
    %2051 = vmatpush1.bf16.msra.mxu0 0
    %2052 = vmatprep.subr.bf16.mxu0 0
    %2053 = vmatpush1.bf16.msra.mxu0 0
    %2054 = vmatprep.subr.bf16.mxu0 0
    %2055 = vmatpush1.bf16.msra.mxu0 0
    %2056 = vmatprep.subr.bf16.mxu0 0
    %2057 = vmatpush1.bf16.msra.mxu0 %v1399
    %2058 = vmatprep.subr.bf16.mxu0 0
    %2059 = vmatpush2.bf16.msra.mxu0 0
    %2060 = vmatprep.subr.bf16.mxu0 0
    %2061 = vmatpush2.bf16.msra.mxu0 0
    %2062 = vmatprep.subr.bf16.mxu0 0
    %2063 = vmatpush2.bf16.msra.mxu0 0
    %2064 = vmatprep.subr.bf16.mxu0 0
    %2065 = vmatpush2.bf16.msra.mxu0 0
    %2066 = vmatprep.subr.bf16.mxu0 0
    %2067 = vmatpush2.bf16.msra.mxu0 0
    %2068 = vmatprep.subr.bf16.mxu0 0
    %2069 = vmatpush2.bf16.msra.mxu0 0
    %2070 = vmatprep.subr.bf16.mxu0 0
    %2071 = vmatpush2.bf16.msra.mxu0 0
    %2072 = vmatprep.subr.bf16.mxu0 0
    %2073 = vmatpush2.bf16.msra.mxu0 0
    %2074 = vmatprep.mubr.bf16.mxu0 0
    %2075 = vmatmul.mubr.bf16.gmra.mxu0 %v2040
    %v2076 = vpop.f32.mrf.mxu0
    %v2077 = vadd.f32 0.0, %v2076
    %v2078 = vpop.f32.mrf.mxu0
    %v2079 = vpop.f32.mrf.mxu0
    %v2080 = vpop.f32.mrf.mxu0
    %2081 = vdwg.mxu0
    %v2083 = vsel %vm728, %v1864, 0
    %2085 = vmatprep.subr.bf16.mxu0 0
    %2086 = vmatpush1.bf16.msra.mxu0 0
    %2087 = vmatprep.subr.bf16.mxu0 0
    %2088 = vmatpush1.bf16.msra.mxu0 0
    %2089 = vmatprep.subr.bf16.mxu0 0
    %2090 = vmatpush1.bf16.msra.mxu0 0
    %2091 = vmatprep.subr.bf16.mxu0 0
    %2092 = vmatpush1.bf16.msra.mxu0 0
    %2093 = vmatprep.subr.bf16.mxu0 0
    %2094 = vmatpush1.bf16.msra.mxu0 0
    %2095 = vmatprep.subr.bf16.mxu0 0
    %2096 = vmatpush1.bf16.msra.mxu0 0
    %2097 = vmatprep.subr.bf16.mxu0 0
    %2098 = vmatpush1.bf16.msra.mxu0 0
    %2099 = vmatprep.subr.bf16.mxu0 0
    %2100 = vmatpush1.bf16.msra.mxu0 %v1400
    %2101 = vmatprep.subr.bf16.mxu0 0
    %2102 = vmatpush2.bf16.msra.mxu0 0
    %2103 = vmatprep.subr.bf16.mxu0 0
    %2104 = vmatpush2.bf16.msra.mxu0 0
    %2105 = vmatprep.subr.bf16.mxu0 0
    %2106 = vmatpush2.bf16.msra.mxu0 0
    %2107 = vmatprep.subr.bf16.mxu0 0
    %2108 = vmatpush2.bf16.msra.mxu0 0
    %2109 = vmatprep.subr.bf16.mxu0 0
    %2110 = vmatpush2.bf16.msra.mxu0 0
    %2111 = vmatprep.subr.bf16.mxu0 0
    %2112 = vmatpush2.bf16.msra.mxu0 0
    %2113 = vmatprep.subr.bf16.mxu0 0
    %2114 = vmatpush2.bf16.msra.mxu0 0
    %2115 = vmatprep.subr.bf16.mxu0 0
    %2116 = vmatpush2.bf16.msra.mxu0 0
    %2117 = vmatprep.mubr.bf16.mxu0 0
    %2118 = vmatmul.mubr.bf16.gmra.mxu0 %v2083
    %v2119 = vpop.f32.mrf.mxu0
    %v2120 = vadd.f32 0.0, %v2119
    %v2121 = vpop.f32.mrf.mxu0
    %v2122 = vpop.f32.mrf.mxu0
    %v2123 = vpop.f32.mrf.mxu0
    %2124 = vdwg.mxu0
    %v2126 = vsel %vm728, %v1865, 0
    %2128 = vmatprep.subr.bf16.mxu0 0
    %2129 = vmatpush1.bf16.msra.mxu0 0
    %2130 = vmatprep.subr.bf16.mxu0 0
    %2131 = vmatpush1.bf16.msra.mxu0 0
    %2132 = vmatprep.subr.bf16.mxu0 0
    %2133 = vmatpush1.bf16.msra.mxu0 0
    %2134 = vmatprep.subr.bf16.mxu0 0
    %2135 = vmatpush1.bf16.msra.mxu0 0
    %2136 = vmatprep.subr.bf16.mxu0 0
    %2137 = vmatpush1.bf16.msra.mxu0 0
    %2138 = vmatprep.subr.bf16.mxu0 0
    %2139 = vmatpush1.bf16.msra.mxu0 0
    %2140 = vmatprep.subr.bf16.mxu0 0
    %2141 = vmatpush1.bf16.msra.mxu0 0
    %2142 = vmatprep.subr.bf16.mxu0 0
    %2143 = vmatpush1.bf16.msra.mxu0 %v1401
    %2144 = vmatprep.subr.bf16.mxu0 0
    %2145 = vmatpush2.bf16.msra.mxu0 0
    %2146 = vmatprep.subr.bf16.mxu0 0
    %2147 = vmatpush2.bf16.msra.mxu0 0
    %2148 = vmatprep.subr.bf16.mxu0 0
    %2149 = vmatpush2.bf16.msra.mxu0 0
    %2150 = vmatprep.subr.bf16.mxu0 0
    %2151 = vmatpush2.bf16.msra.mxu0 0
    %2152 = vmatprep.subr.bf16.mxu0 0
    %2153 = vmatpush2.bf16.msra.mxu0 0
    %2154 = vmatprep.subr.bf16.mxu0 0
    %2155 = vmatpush2.bf16.msra.mxu0 0
    %2156 = vmatprep.subr.bf16.mxu0 0
    %2157 = vmatpush2.bf16.msra.mxu0 0
    %2158 = vmatprep.subr.bf16.mxu0 0
    %2159 = vmatpush2.bf16.msra.mxu0 0
    %2160 = vmatprep.mubr.bf16.mxu0 0
    %2161 = vmatmul.mubr.bf16.gmra.mxu0 %v2126
    %v2162 = vpop.f32.mrf.mxu0
    %v2163 = vadd.f32 0.0, %v2162
    %v2164 = vpop.f32.mrf.mxu0
    %v2165 = vpop.f32.mrf.mxu0
    %v2166 = vpop.f32.mrf.mxu0
    %2167 = vdwg.mxu0
    %v2169 = vsel %vm728, %v1866, 0
    %2171 = vmatprep.subr.bf16.mxu0 0
    %2172 = vmatpush1.bf16.msra.mxu0 0
    %2173 = vmatprep.subr.bf16.mxu0 0
    %2174 = vmatpush1.bf16.msra.mxu0 0
    %2175 = vmatprep.subr.bf16.mxu0 0
    %2176 = vmatpush1.bf16.msra.mxu0 0
    %2177 = vmatprep.subr.bf16.mxu0 0
    %2178 = vmatpush1.bf16.msra.mxu0 0
    %2179 = vmatprep.subr.bf16.mxu0 0
    %2180 = vmatpush1.bf16.msra.mxu0 0
    %2181 = vmatprep.subr.bf16.mxu0 0
    %2182 = vmatpush1.bf16.msra.mxu0 0
    %2183 = vmatprep.subr.bf16.mxu0 0
    %2184 = vmatpush1.bf16.msra.mxu0 0
    %2185 = vmatprep.subr.bf16.mxu0 0
    %2186 = vmatpush1.bf16.msra.mxu0 %v1402
    %2187 = vmatprep.subr.bf16.mxu0 0
    %2188 = vmatpush2.bf16.msra.mxu0 0
    %2189 = vmatprep.subr.bf16.mxu0 0
    %2190 = vmatpush2.bf16.msra.mxu0 0
    %2191 = vmatprep.subr.bf16.mxu0 0
    %2192 = vmatpush2.bf16.msra.mxu0 0
    %2193 = vmatprep.subr.bf16.mxu0 0
    %2194 = vmatpush2.bf16.msra.mxu0 0
    %2195 = vmatprep.subr.bf16.mxu0 0
    %2196 = vmatpush2.bf16.msra.mxu0 0
    %2197 = vmatprep.subr.bf16.mxu0 0
    %2198 = vmatpush2.bf16.msra.mxu0 0
    %2199 = vmatprep.subr.bf16.mxu0 0
    %2200 = vmatpush2.bf16.msra.mxu0 0
    %2201 = vmatprep.subr.bf16.mxu0 0
    %2202 = vmatpush2.bf16.msra.mxu0 0
    %2203 = vmatprep.mubr.bf16.mxu0 0
    %2204 = vmatmul.mubr.bf16.gmra.mxu0 %v2169
    %v2205 = vpop.f32.mrf.mxu0
    %v2206 = vadd.f32 0.0, %v2205
    %v2207 = vpop.f32.mrf.mxu0
    %v2208 = vpop.f32.mrf.mxu0
    %v2209 = vpop.f32.mrf.mxu0
    %2210 = vdwg.mxu0
    %v2211 = vmul.f32 %v1905, %v1851
    %v2212 = vmul.f32 %v1948, %v1852
    %v2213 = vmul.f32 %v1991, %v1853
    %v2214 = vmul.f32 %v2034, %v1854
    %v2215 = vmul.f32 %v2077, %v1855
    %v2216 = vmul.f32 %v2120, %v1856
    %v2217 = vmul.f32 %v2163, %v1857
    %v2218 = vmul.f32 %v2206, %v1858
    %v2219 = vpack.c.bf16 %v2212, %v2211
    %v2220 = vpack.c.bf16 %v2214, %v2213
    %v2221 = vpack.c.bf16 %v2216, %v2215
    %v2222 = vpack.c.bf16 %v2218, %v2217
    %v2223 = vld [vmem:[%s8] sm:$0xf]
    %v2224 = vld [vmem:[%s8 + $0x4] sm:$0xf]
    %v2225 = vld [vmem:[%s8 + $0x8] sm:$0xf]
    %v2226 = vld [vmem:[%s8 + $0xc] sm:$0xf]
    %v2227 = vld [vmem:[%s8 + $0x10] sm:$0xf]
    %v2228 = vld [vmem:[%s8 + $0x14] sm:$0xf]
    %v2229 = vld [vmem:[%s8 + $0x18] sm:$0xf]
    %v2230 = vld [vmem:[%s8 + $0x1c] sm:$0xf]
    %v2233 = vunpack.c.l.b16 %v2223
    %v2234 = vunpack.c.l.b16 %v2224
    %v2235 = vpack.c.b16 %v2234, %v2233
    %v2238 = vsel %vm728, %v2219, 0
    %2240 = vmatprep.subr.bf16.mxu0 0
    %2241 = vmatpush1.bf16.msra.mxu0 0
    %2242 = vmatprep.subr.bf16.mxu0 0
    %2243 = vmatpush1.bf16.msra.mxu0 0
    %2244 = vmatprep.subr.bf16.mxu0 0
    %2245 = vmatpush1.bf16.msra.mxu0 0
    %2246 = vmatprep.subr.bf16.mxu0 0
    %2247 = vmatpush1.bf16.msra.mxu0 0
    %2248 = vmatprep.subr.bf16.mxu0 0
    %2249 = vmatpush1.bf16.msra.mxu0 0
    %2250 = vmatprep.subr.bf16.mxu0 0
    %2251 = vmatpush1.bf16.msra.mxu0 0
    %2252 = vmatprep.subr.bf16.mxu0 0
    %2253 = vmatpush1.bf16.msra.mxu0 0
    %2254 = vmatprep.subr.bf16.mxu0 0
    %2255 = vmatpush1.bf16.msra.mxu0 %v2235
    %2256 = vmatprep.subr.bf16.mxu0 0
    %2257 = vmatpush2.bf16.msra.mxu0 0
    %2258 = vmatprep.subr.bf16.mxu0 0
    %2259 = vmatpush2.bf16.msra.mxu0 0
    %2260 = vmatprep.subr.bf16.mxu0 0
    %2261 = vmatpush2.bf16.msra.mxu0 0
    %2262 = vmatprep.subr.bf16.mxu0 0
    %2263 = vmatpush2.bf16.msra.mxu0 0
    %2264 = vmatprep.subr.bf16.mxu0 0
    %2265 = vmatpush2.bf16.msra.mxu0 0
    %2266 = vmatprep.subr.bf16.mxu0 0
    %2267 = vmatpush2.bf16.msra.mxu0 0
    %2268 = vmatprep.subr.bf16.mxu0 0
    %2269 = vmatpush2.bf16.msra.mxu0 0
    %2270 = vmatprep.subr.bf16.mxu0 0
    %2271 = vmatpush2.bf16.msra.mxu0 0
    %2272 = vmatprep.mubr.bf16.mxu0 0
    %2273 = vmatmul.mubr.bf16.gmra.mxu0 %v2238
    %v2274 = vpop.f32.mrf.mxu0
    %v2275 = vadd.f32 0.0, %v2274
    %v2276 = vpop.f32.mrf.mxu0
    %v2277 = vpop.f32.mrf.mxu0
    %v2278 = vadd.f32 0.0, %v2277
    %v2279 = vpop.f32.mrf.mxu0
    %2280 = vdwg.mxu0
    %v2283 = vunpack.c.l.b16 %v2225
    %v2284 = vunpack.c.l.b16 %v2226
    %v2285 = vpack.c.b16 %v2284, %v2283
    %v2288 = vsel %vm728, %v2220, 0
    %2290 = vmatprep.subr.bf16.mxu0 0
    %2291 = vmatpush1.bf16.msra.mxu0 0
    %2292 = vmatprep.subr.bf16.mxu0 0
    %2293 = vmatpush1.bf16.msra.mxu0 0
    %2294 = vmatprep.subr.bf16.mxu0 0
    %2295 = vmatpush1.bf16.msra.mxu0 0
    %2296 = vmatprep.subr.bf16.mxu0 0
    %2297 = vmatpush1.bf16.msra.mxu0 0
    %2298 = vmatprep.subr.bf16.mxu0 0
    %2299 = vmatpush1.bf16.msra.mxu0 0
    %2300 = vmatprep.subr.bf16.mxu0 0
    %2301 = vmatpush1.bf16.msra.mxu0 0
    %2302 = vmatprep.subr.bf16.mxu0 0
    %2303 = vmatpush1.bf16.msra.mxu0 0
    %2304 = vmatprep.subr.bf16.mxu0 0
    %2305 = vmatpush1.bf16.msra.mxu0 %v2285
    %2306 = vmatprep.subr.bf16.mxu0 0
    %2307 = vmatpush2.bf16.msra.mxu0 0
    %2308 = vmatprep.subr.bf16.mxu0 0
    %2309 = vmatpush2.bf16.msra.mxu0 0
    %2310 = vmatprep.subr.bf16.mxu0 0
    %2311 = vmatpush2.bf16.msra.mxu0 0
    %2312 = vmatprep.subr.bf16.mxu0 0
    %2313 = vmatpush2.bf16.msra.mxu0 0
    %2314 = vmatprep.subr.bf16.mxu0 0
    %2315 = vmatpush2.bf16.msra.mxu0 0
    %2316 = vmatprep.subr.bf16.mxu0 0
    %2317 = vmatpush2.bf16.msra.mxu0 0
    %2318 = vmatprep.subr.bf16.mxu0 0
    %2319 = vmatpush2.bf16.msra.mxu0 0
    %2320 = vmatprep.subr.bf16.mxu0 0
    %2321 = vmatpush2.bf16.msra.mxu0 0
    %2322 = vmatprep.mubr.bf16.mxu0 0
    %2323 = vmatmul.mubr.bf16.gmra.mxu0 %v2288
    %v2324 = vpop.f32.mrf.mxu0
    %v2325 = vadd.f32 0.0, %v2324
    %v2326 = vpop.f32.mrf.mxu0
    %v2327 = vpop.f32.mrf.mxu0
    %v2328 = vadd.f32 0.0, %v2327
    %v2329 = vpop.f32.mrf.mxu0
    %2330 = vdwg.mxu0
    %v2333 = vunpack.c.l.b16 %v2227
    %v2334 = vunpack.c.l.b16 %v2228
    %v2335 = vpack.c.b16 %v2334, %v2333
    %v2338 = vsel %vm728, %v2221, 0
    %2340 = vmatprep.subr.bf16.mxu0 0
    %2341 = vmatpush1.bf16.msra.mxu0 0
    %2342 = vmatprep.subr.bf16.mxu0 0
    %2343 = vmatpush1.bf16.msra.mxu0 0
    %2344 = vmatprep.subr.bf16.mxu0 0
    %2345 = vmatpush1.bf16.msra.mxu0 0
    %2346 = vmatprep.subr.bf16.mxu0 0
    %2347 = vmatpush1.bf16.msra.mxu0 0
    %2348 = vmatprep.subr.bf16.mxu0 0
    %2349 = vmatpush1.bf16.msra.mxu0 0
    %2350 = vmatprep.subr.bf16.mxu0 0
    %2351 = vmatpush1.bf16.msra.mxu0 0
    %2352 = vmatprep.subr.bf16.mxu0 0
    %2353 = vmatpush1.bf16.msra.mxu0 0
    %2354 = vmatprep.subr.bf16.mxu0 0
    %2355 = vmatpush1.bf16.msra.mxu0 %v2335
    %2356 = vmatprep.subr.bf16.mxu0 0
    %2357 = vmatpush2.bf16.msra.mxu0 0
    %2358 = vmatprep.subr.bf16.mxu0 0
    %2359 = vmatpush2.bf16.msra.mxu0 0
    %2360 = vmatprep.subr.bf16.mxu0 0
    %2361 = vmatpush2.bf16.msra.mxu0 0
    %2362 = vmatprep.subr.bf16.mxu0 0
    %2363 = vmatpush2.bf16.msra.mxu0 0
    %2364 = vmatprep.subr.bf16.mxu0 0
    %2365 = vmatpush2.bf16.msra.mxu0 0
    %2366 = vmatprep.subr.bf16.mxu0 0
    %2367 = vmatpush2.bf16.msra.mxu0 0
    %2368 = vmatprep.subr.bf16.mxu0 0
    %2369 = vmatpush2.bf16.msra.mxu0 0
    %2370 = vmatprep.subr.bf16.mxu0 0
    %2371 = vmatpush2.bf16.msra.mxu0 0
    %2372 = vmatprep.mubr.bf16.mxu0 0
    %2373 = vmatmul.mubr.bf16.gmra.mxu0 %v2338
    %v2374 = vpop.f32.mrf.mxu0
    %v2375 = vadd.f32 0.0, %v2374
    %v2376 = vpop.f32.mrf.mxu0
    %v2377 = vpop.f32.mrf.mxu0
    %v2378 = vadd.f32 0.0, %v2377
    %v2379 = vpop.f32.mrf.mxu0
    %2380 = vdwg.mxu0
    %v2383 = vunpack.c.l.b16 %v2229
    %v2384 = vunpack.c.l.b16 %v2230
    %v2385 = vpack.c.b16 %v2384, %v2383
    %v2388 = vsel %vm728, %v2222, 0
    %2390 = vmatprep.subr.bf16.mxu0 0
    %2391 = vmatpush1.bf16.msra.mxu0 0
    %2392 = vmatprep.subr.bf16.mxu0 0
    %2393 = vmatpush1.bf16.msra.mxu0 0
    %2394 = vmatprep.subr.bf16.mxu0 0
    %2395 = vmatpush1.bf16.msra.mxu0 0
    %2396 = vmatprep.subr.bf16.mxu0 0
    %2397 = vmatpush1.bf16.msra.mxu0 0
    %2398 = vmatprep.subr.bf16.mxu0 0
    %2399 = vmatpush1.bf16.msra.mxu0 0
    %2400 = vmatprep.subr.bf16.mxu0 0
    %2401 = vmatpush1.bf16.msra.mxu0 0
    %2402 = vmatprep.subr.bf16.mxu0 0
    %2403 = vmatpush1.bf16.msra.mxu0 0
    %2404 = vmatprep.subr.bf16.mxu0 0
    %2405 = vmatpush1.bf16.msra.mxu0 %v2385
    %2406 = vmatprep.subr.bf16.mxu0 0
    %2407 = vmatpush2.bf16.msra.mxu0 0
    %2408 = vmatprep.subr.bf16.mxu0 0
    %2409 = vmatpush2.bf16.msra.mxu0 0
    %2410 = vmatprep.subr.bf16.mxu0 0
    %2411 = vmatpush2.bf16.msra.mxu0 0
    %2412 = vmatprep.subr.bf16.mxu0 0
    %2413 = vmatpush2.bf16.msra.mxu0 0
    %2414 = vmatprep.subr.bf16.mxu0 0
    %2415 = vmatpush2.bf16.msra.mxu0 0
    %2416 = vmatprep.subr.bf16.mxu0 0
    %2417 = vmatpush2.bf16.msra.mxu0 0
    %2418 = vmatprep.subr.bf16.mxu0 0
    %2419 = vmatpush2.bf16.msra.mxu0 0
    %2420 = vmatprep.subr.bf16.mxu0 0
    %2421 = vmatpush2.bf16.msra.mxu0 0
    %2422 = vmatprep.mubr.bf16.mxu0 0
    %2423 = vmatmul.mubr.bf16.gmra.mxu0 %v2388
    %v2424 = vpop.f32.mrf.mxu0
    %v2425 = vadd.f32 0.0, %v2424
    %v2426 = vpop.f32.mrf.mxu0
    %v2427 = vpop.f32.mrf.mxu0
    %v2428 = vadd.f32 0.0, %v2427
    %v2429 = vpop.f32.mrf.mxu0
    %2430 = vdwg.mxu0
    %v2431 = vadd.f32 %v2275, %v2325
    %v2432 = vadd.f32 %v2431, %v2375
    %v2433 = vadd.f32 %v2432, %v2425
    %v2434 = vadd.f32 %v2278, %v2328
    %v2435 = vadd.f32 %v2434, %v2378
    %v2436 = vadd.f32 %v2435, %v2428
    %2437 = vst [vmem:[#allocation4] sm:$0xff] %v2433
    %2438 = vst [vmem:[#allocation4 + $0x10] sm:$0xff] %v2436
    %v2439 = vpack.c.bf16 %v800, %v800
    %v2440 = vpack.c.bf16 %v803, %v803
    %v2441 = vpack.c.bf16 %v847, %v847
    %v2442 = vpack.c.bf16 %v850, %v850
    %v2443 = vpack.c.bf16 %v894, %v894
    %v2444 = vpack.c.bf16 %v897, %v897
    %v2445 = vpack.c.bf16 %v941, %v941
    %v2446 = vpack.c.bf16 %v944, %v944
    %v2448 = vsel %vm728, %v2439, 0
    %2450 = vmatprep.subr.bf16.mxu0 0
    %2451 = vmatpush1.bf16.xpose.msra.mxu0 0
    %2452 = vmatprep.subr.bf16.mxu0 0
    %2453 = vmatpush1.bf16.xpose.msra.mxu0 0
    %2454 = vmatprep.subr.bf16.mxu0 0
    %2455 = vmatpush1.bf16.xpose.msra.mxu0 0
    %2456 = vmatprep.subr.bf16.mxu0 0
    %2457 = vmatpush1.bf16.xpose.msra.mxu0 0
    %2458 = vmatprep.subr.bf16.mxu0 0
    %2459 = vmatpush1.bf16.xpose.msra.mxu0 0
    %2460 = vmatprep.subr.bf16.mxu0 0
    %2461 = vmatpush1.bf16.xpose.msra.mxu0 0
    %2462 = vmatprep.subr.bf16.mxu0 0
    %2463 = vmatpush1.bf16.xpose.msra.mxu0 0
    %2464 = vmatprep.subr.bf16.mxu0 0
    %2465 = vmatpush1.bf16.xpose.msra.mxu0 %v1415
    %2466 = vmatprep.subr.bf16.mxu0 0
    %2467 = vmatpush2.bf16.xpose.msra.mxu0 0
    %2468 = vmatprep.subr.bf16.mxu0 0
    %2469 = vmatpush2.bf16.xpose.msra.mxu0 0
    %2470 = vmatprep.subr.bf16.mxu0 0
    %2471 = vmatpush2.bf16.xpose.msra.mxu0 0
    %2472 = vmatprep.subr.bf16.mxu0 0
    %2473 = vmatpush2.bf16.xpose.msra.mxu0 0
    %2474 = vmatprep.subr.bf16.mxu0 0
    %2475 = vmatpush2.bf16.xpose.msra.mxu0 0
    %2476 = vmatprep.subr.bf16.mxu0 0
    %2477 = vmatpush2.bf16.xpose.msra.mxu0 0
    %2478 = vmatprep.subr.bf16.mxu0 0
    %2479 = vmatpush2.bf16.xpose.msra.mxu0 0
    %2480 = vmatprep.subr.bf16.mxu0 0
    %2481 = vmatpush2.bf16.xpose.msra.mxu0 0
    %2482 = vmatprep.mubr.bf16.mxu0 0
    %2483 = vmatmul.mubr.bf16.gmra.mxu0 %v2448
    %v2484 = vpop.f32.mrf.mxu0
    %v2485 = vadd.f32 0.0, %v2484
    %v2486 = vpop.f32.mrf.mxu0
    %v2487 = vpop.f32.mrf.mxu0
    %v2488 = vpop.f32.mrf.mxu0
    %2489 = vdwg.mxu0
    %v2491 = vsel %vm728, %v2440, 0
    %2493 = vmatprep.subr.bf16.mxu0 0
    %2494 = vmatpush1.bf16.xpose.msra.mxu0 0
    %2495 = vmatprep.subr.bf16.mxu0 0
    %2496 = vmatpush1.bf16.xpose.msra.mxu0 0
    %2497 = vmatprep.subr.bf16.mxu0 0
    %2498 = vmatpush1.bf16.xpose.msra.mxu0 0
    %2499 = vmatprep.subr.bf16.mxu0 0
    %2500 = vmatpush1.bf16.xpose.msra.mxu0 0
    %2501 = vmatprep.subr.bf16.mxu0 0
    %2502 = vmatpush1.bf16.xpose.msra.mxu0 0
    %2503 = vmatprep.subr.bf16.mxu0 0
    %2504 = vmatpush1.bf16.xpose.msra.mxu0 0
    %2505 = vmatprep.subr.bf16.mxu0 0
    %2506 = vmatpush1.bf16.xpose.msra.mxu0 0
    %2507 = vmatprep.subr.bf16.mxu0 0
    %2508 = vmatpush1.bf16.xpose.msra.mxu0 %v1461
    %2509 = vmatprep.subr.bf16.mxu0 0
    %2510 = vmatpush2.bf16.xpose.msra.mxu0 0
    %2511 = vmatprep.subr.bf16.mxu0 0
    %2512 = vmatpush2.bf16.xpose.msra.mxu0 0
    %2513 = vmatprep.subr.bf16.mxu0 0
    %2514 = vmatpush2.bf16.xpose.msra.mxu0 0
    %2515 = vmatprep.subr.bf16.mxu0 0
    %2516 = vmatpush2.bf16.xpose.msra.mxu0 0
    %2517 = vmatprep.subr.bf16.mxu0 0
    %2518 = vmatpush2.bf16.xpose.msra.mxu0 0
    %2519 = vmatprep.subr.bf16.mxu0 0
    %2520 = vmatpush2.bf16.xpose.msra.mxu0 0
    %2521 = vmatprep.subr.bf16.mxu0 0
    %2522 = vmatpush2.bf16.xpose.msra.mxu0 0
    %2523 = vmatprep.subr.bf16.mxu0 0
    %2524 = vmatpush2.bf16.xpose.msra.mxu0 0
    %2525 = vmatprep.mubr.bf16.mxu0 0
    %2526 = vmatmul.mubr.bf16.gmra.mxu0 %v2491
    %v2527 = vpop.f32.mrf.mxu0
    %v2528 = vadd.f32 0.0, %v2527
    %v2529 = vpop.f32.mrf.mxu0
    %v2530 = vpop.f32.mrf.mxu0
    %v2531 = vpop.f32.mrf.mxu0
    %2532 = vdwg.mxu0
    %v2534 = vsel %vm728, %v2441, 0
    %2536 = vmatprep.subr.bf16.mxu0 0
    %2537 = vmatpush1.bf16.xpose.msra.mxu0 0
    %2538 = vmatprep.subr.bf16.mxu0 0
    %2539 = vmatpush1.bf16.xpose.msra.mxu0 0
    %2540 = vmatprep.subr.bf16.mxu0 0
    %2541 = vmatpush1.bf16.xpose.msra.mxu0 0
    %2542 = vmatprep.subr.bf16.mxu0 0
    %2543 = vmatpush1.bf16.xpose.msra.mxu0 0
    %2544 = vmatprep.subr.bf16.mxu0 0
    %2545 = vmatpush1.bf16.xpose.msra.mxu0 0
    %2546 = vmatprep.subr.bf16.mxu0 0
    %2547 = vmatpush1.bf16.xpose.msra.mxu0 0
    %2548 = vmatprep.subr.bf16.mxu0 0
    %2549 = vmatpush1.bf16.xpose.msra.mxu0 0
    %2550 = vmatprep.subr.bf16.mxu0 0
    %2551 = vmatpush1.bf16.xpose.msra.mxu0 %v1507
    %2552 = vmatprep.subr.bf16.mxu0 0
    %2553 = vmatpush2.bf16.xpose.msra.mxu0 0
    %2554 = vmatprep.subr.bf16.mxu0 0
    %2555 = vmatpush2.bf16.xpose.msra.mxu0 0
    %2556 = vmatprep.subr.bf16.mxu0 0
    %2557 = vmatpush2.bf16.xpose.msra.mxu0 0
    %2558 = vmatprep.subr.bf16.mxu0 0
    %2559 = vmatpush2.bf16.xpose.msra.mxu0 0
    %2560 = vmatprep.subr.bf16.mxu0 0
    %2561 = vmatpush2.bf16.xpose.msra.mxu0 0
    %2562 = vmatprep.subr.bf16.mxu0 0
    %2563 = vmatpush2.bf16.xpose.msra.mxu0 0
    %2564 = vmatprep.subr.bf16.mxu0 0
    %2565 = vmatpush2.bf16.xpose.msra.mxu0 0
    %2566 = vmatprep.subr.bf16.mxu0 0
    %2567 = vmatpush2.bf16.xpose.msra.mxu0 0
    %2568 = vmatprep.mubr.bf16.mxu0 0
    %2569 = vmatmul.mubr.bf16.gmra.mxu0 %v2534
    %v2570 = vpop.f32.mrf.mxu0
    %v2571 = vadd.f32 0.0, %v2570
    %v2572 = vpop.f32.mrf.mxu0
    %v2573 = vpop.f32.mrf.mxu0
    %v2574 = vpop.f32.mrf.mxu0
    %2575 = vdwg.mxu0
    %v2577 = vsel %vm728, %v2442, 0
    %2579 = vmatprep.subr.bf16.mxu0 0
    %2580 = vmatpush1.bf16.xpose.msra.mxu0 0
    %2581 = vmatprep.subr.bf16.mxu0 0
    %2582 = vmatpush1.bf16.xpose.msra.mxu0 0
    %2583 = vmatprep.subr.bf16.mxu0 0
    %2584 = vmatpush1.bf16.xpose.msra.mxu0 0
    %2585 = vmatprep.subr.bf16.mxu0 0
    %2586 = vmatpush1.bf16.xpose.msra.mxu0 0
    %2587 = vmatprep.subr.bf16.mxu0 0
    %2588 = vmatpush1.bf16.xpose.msra.mxu0 0
    %2589 = vmatprep.subr.bf16.mxu0 0
    %2590 = vmatpush1.bf16.xpose.msra.mxu0 0
    %2591 = vmatprep.subr.bf16.mxu0 0
    %2592 = vmatpush1.bf16.xpose.msra.mxu0 0
    %2593 = vmatprep.subr.bf16.mxu0 0
    %2594 = vmatpush1.bf16.xpose.msra.mxu0 %v1553
    %2595 = vmatprep.subr.bf16.mxu0 0
    %2596 = vmatpush2.bf16.xpose.msra.mxu0 0
    %2597 = vmatprep.subr.bf16.mxu0 0
    %2598 = vmatpush2.bf16.xpose.msra.mxu0 0
    %2599 = vmatprep.subr.bf16.mxu0 0
    %2600 = vmatpush2.bf16.xpose.msra.mxu0 0
    %2601 = vmatprep.subr.bf16.mxu0 0
    %2602 = vmatpush2.bf16.xpose.msra.mxu0 0
    %2603 = vmatprep.subr.bf16.mxu0 0
    %2604 = vmatpush2.bf16.xpose.msra.mxu0 0
    %2605 = vmatprep.subr.bf16.mxu0 0
    %2606 = vmatpush2.bf16.xpose.msra.mxu0 0
    %2607 = vmatprep.subr.bf16.mxu0 0
    %2608 = vmatpush2.bf16.xpose.msra.mxu0 0
    %2609 = vmatprep.subr.bf16.mxu0 0
    %2610 = vmatpush2.bf16.xpose.msra.mxu0 0
    %2611 = vmatprep.mubr.bf16.mxu0 0
    %2612 = vmatmul.mubr.bf16.gmra.mxu0 %v2577
    %v2613 = vpop.f32.mrf.mxu0
    %v2614 = vadd.f32 0.0, %v2613
    %v2615 = vpop.f32.mrf.mxu0
    %v2616 = vpop.f32.mrf.mxu0
    %v2617 = vpop.f32.mrf.mxu0
    %2618 = vdwg.mxu0
    %v2620 = vsel %vm728, %v2443, 0
    %2622 = vmatprep.subr.bf16.mxu0 0
    %2623 = vmatpush1.bf16.xpose.msra.mxu0 0
    %2624 = vmatprep.subr.bf16.mxu0 0
    %2625 = vmatpush1.bf16.xpose.msra.mxu0 0
    %2626 = vmatprep.subr.bf16.mxu0 0
    %2627 = vmatpush1.bf16.xpose.msra.mxu0 0
    %2628 = vmatprep.subr.bf16.mxu0 0
    %2629 = vmatpush1.bf16.xpose.msra.mxu0 0
    %2630 = vmatprep.subr.bf16.mxu0 0
    %2631 = vmatpush1.bf16.xpose.msra.mxu0 0
    %2632 = vmatprep.subr.bf16.mxu0 0
    %2633 = vmatpush1.bf16.xpose.msra.mxu0 0
    %2634 = vmatprep.subr.bf16.mxu0 0
    %2635 = vmatpush1.bf16.xpose.msra.mxu0 0
    %2636 = vmatprep.subr.bf16.mxu0 0
    %2637 = vmatpush1.bf16.xpose.msra.mxu0 %v1599
    %2638 = vmatprep.subr.bf16.mxu0 0
    %2639 = vmatpush2.bf16.xpose.msra.mxu0 0
    %2640 = vmatprep.subr.bf16.mxu0 0
    %2641 = vmatpush2.bf16.xpose.msra.mxu0 0
    %2642 = vmatprep.subr.bf16.mxu0 0
    %2643 = vmatpush2.bf16.xpose.msra.mxu0 0
    %2644 = vmatprep.subr.bf16.mxu0 0
    %2645 = vmatpush2.bf16.xpose.msra.mxu0 0
    %2646 = vmatprep.subr.bf16.mxu0 0
    %2647 = vmatpush2.bf16.xpose.msra.mxu0 0
    %2648 = vmatprep.subr.bf16.mxu0 0
    %2649 = vmatpush2.bf16.xpose.msra.mxu0 0
    %2650 = vmatprep.subr.bf16.mxu0 0
    %2651 = vmatpush2.bf16.xpose.msra.mxu0 0
    %2652 = vmatprep.subr.bf16.mxu0 0
    %2653 = vmatpush2.bf16.xpose.msra.mxu0 0
    %2654 = vmatprep.mubr.bf16.mxu0 0
    %2655 = vmatmul.mubr.bf16.gmra.mxu0 %v2620
    %v2656 = vpop.f32.mrf.mxu0
    %v2657 = vadd.f32 0.0, %v2656
    %v2658 = vpop.f32.mrf.mxu0
    %v2659 = vpop.f32.mrf.mxu0
    %v2660 = vpop.f32.mrf.mxu0
    %2661 = vdwg.mxu0
    %v2663 = vsel %vm728, %v2444, 0
    %2665 = vmatprep.subr.bf16.mxu0 0
    %2666 = vmatpush1.bf16.xpose.msra.mxu0 0
    %2667 = vmatprep.subr.bf16.mxu0 0
    %2668 = vmatpush1.bf16.xpose.msra.mxu0 0
    %2669 = vmatprep.subr.bf16.mxu0 0
    %2670 = vmatpush1.bf16.xpose.msra.mxu0 0
    %2671 = vmatprep.subr.bf16.mxu0 0
    %2672 = vmatpush1.bf16.xpose.msra.mxu0 0
    %2673 = vmatprep.subr.bf16.mxu0 0
    %2674 = vmatpush1.bf16.xpose.msra.mxu0 0
    %2675 = vmatprep.subr.bf16.mxu0 0
    %2676 = vmatpush1.bf16.xpose.msra.mxu0 0
    %2677 = vmatprep.subr.bf16.mxu0 0
    %2678 = vmatpush1.bf16.xpose.msra.mxu0 0
    %2679 = vmatprep.subr.bf16.mxu0 0
    %2680 = vmatpush1.bf16.xpose.msra.mxu0 %v1645
    %2681 = vmatprep.subr.bf16.mxu0 0
    %2682 = vmatpush2.bf16.xpose.msra.mxu0 0
    %2683 = vmatprep.subr.bf16.mxu0 0
    %2684 = vmatpush2.bf16.xpose.msra.mxu0 0
    %2685 = vmatprep.subr.bf16.mxu0 0
    %2686 = vmatpush2.bf16.xpose.msra.mxu0 0
    %2687 = vmatprep.subr.bf16.mxu0 0
    %2688 = vmatpush2.bf16.xpose.msra.mxu0 0
    %2689 = vmatprep.subr.bf16.mxu0 0
    %2690 = vmatpush2.bf16.xpose.msra.mxu0 0
    %2691 = vmatprep.subr.bf16.mxu0 0
    %2692 = vmatpush2.bf16.xpose.msra.mxu0 0
    %2693 = vmatprep.subr.bf16.mxu0 0
    %2694 = vmatpush2.bf16.xpose.msra.mxu0 0
    %2695 = vmatprep.subr.bf16.mxu0 0
    %2696 = vmatpush2.bf16.xpose.msra.mxu0 0
    %2697 = vmatprep.mubr.bf16.mxu0 0
    %2698 = vmatmul.mubr.bf16.gmra.mxu0 %v2663
    %v2699 = vpop.f32.mrf.mxu0
    %v2700 = vadd.f32 0.0, %v2699
    %v2701 = vpop.f32.mrf.mxu0
    %v2702 = vpop.f32.mrf.mxu0
    %v2703 = vpop.f32.mrf.mxu0
    %2704 = vdwg.mxu0
    %v2706 = vsel %vm728, %v2445, 0
    %2708 = vmatprep.subr.bf16.mxu0 0
    %2709 = vmatpush1.bf16.xpose.msra.mxu0 0
    %2710 = vmatprep.subr.bf16.mxu0 0
    %2711 = vmatpush1.bf16.xpose.msra.mxu0 0
    %2712 = vmatprep.subr.bf16.mxu0 0
    %2713 = vmatpush1.bf16.xpose.msra.mxu0 0
    %2714 = vmatprep.subr.bf16.mxu0 0
    %2715 = vmatpush1.bf16.xpose.msra.mxu0 0
    %2716 = vmatprep.subr.bf16.mxu0 0
    %2717 = vmatpush1.bf16.xpose.msra.mxu0 0
    %2718 = vmatprep.subr.bf16.mxu0 0
    %2719 = vmatpush1.bf16.xpose.msra.mxu0 0
    %2720 = vmatprep.subr.bf16.mxu0 0
    %2721 = vmatpush1.bf16.xpose.msra.mxu0 0
    %2722 = vmatprep.subr.bf16.mxu0 0
    %2723 = vmatpush1.bf16.xpose.msra.mxu0 %v1691
    %2724 = vmatprep.subr.bf16.mxu0 0
    %2725 = vmatpush2.bf16.xpose.msra.mxu0 0
    %2726 = vmatprep.subr.bf16.mxu0 0
    %2727 = vmatpush2.bf16.xpose.msra.mxu0 0
    %2728 = vmatprep.subr.bf16.mxu0 0
    %2729 = vmatpush2.bf16.xpose.msra.mxu0 0
    %2730 = vmatprep.subr.bf16.mxu0 0
    %2731 = vmatpush2.bf16.xpose.msra.mxu0 0
    %2732 = vmatprep.subr.bf16.mxu0 0
    %2733 = vmatpush2.bf16.xpose.msra.mxu0 0
    %2734 = vmatprep.subr.bf16.mxu0 0
    %2735 = vmatpush2.bf16.xpose.msra.mxu0 0
    %2736 = vmatprep.subr.bf16.mxu0 0
    %2737 = vmatpush2.bf16.xpose.msra.mxu0 0
    %2738 = vmatprep.subr.bf16.mxu0 0
    %2739 = vmatpush2.bf16.xpose.msra.mxu0 0
    %2740 = vmatprep.mubr.bf16.mxu0 0
    %2741 = vmatmul.mubr.bf16.gmra.mxu0 %v2706
    %v2742 = vpop.f32.mrf.mxu0
    %v2743 = vadd.f32 0.0, %v2742
    %v2744 = vpop.f32.mrf.mxu0
    %v2745 = vpop.f32.mrf.mxu0
    %v2746 = vpop.f32.mrf.mxu0
    %2747 = vdwg.mxu0
    %v2749 = vsel %vm728, %v2446, 0
    %2751 = vmatprep.subr.bf16.mxu0 0
    %2752 = vmatpush1.bf16.xpose.msra.mxu0 0
    %2753 = vmatprep.subr.bf16.mxu0 0
    %2754 = vmatpush1.bf16.xpose.msra.mxu0 0
    %2755 = vmatprep.subr.bf16.mxu0 0
    %2756 = vmatpush1.bf16.xpose.msra.mxu0 0
    %2757 = vmatprep.subr.bf16.mxu0 0
    %2758 = vmatpush1.bf16.xpose.msra.mxu0 0
    %2759 = vmatprep.subr.bf16.mxu0 0
    %2760 = vmatpush1.bf16.xpose.msra.mxu0 0
    %2761 = vmatprep.subr.bf16.mxu0 0
    %2762 = vmatpush1.bf16.xpose.msra.mxu0 0
    %2763 = vmatprep.subr.bf16.mxu0 0
    %2764 = vmatpush1.bf16.xpose.msra.mxu0 0
    %2765 = vmatprep.subr.bf16.mxu0 0
    %2766 = vmatpush1.bf16.xpose.msra.mxu0 %v1737
    %2767 = vmatprep.subr.bf16.mxu0 0
    %2768 = vmatpush2.bf16.xpose.msra.mxu0 0
    %2769 = vmatprep.subr.bf16.mxu0 0
    %2770 = vmatpush2.bf16.xpose.msra.mxu0 0
    %2771 = vmatprep.subr.bf16.mxu0 0
    %2772 = vmatpush2.bf16.xpose.msra.mxu0 0
    %2773 = vmatprep.subr.bf16.mxu0 0
    %2774 = vmatpush2.bf16.xpose.msra.mxu0 0
    %2775 = vmatprep.subr.bf16.mxu0 0
    %2776 = vmatpush2.bf16.xpose.msra.mxu0 0
    %2777 = vmatprep.subr.bf16.mxu0 0
    %2778 = vmatpush2.bf16.xpose.msra.mxu0 0
    %2779 = vmatprep.subr.bf16.mxu0 0
    %2780 = vmatpush2.bf16.xpose.msra.mxu0 0
    %2781 = vmatprep.subr.bf16.mxu0 0
    %2782 = vmatpush2.bf16.xpose.msra.mxu0 0
    %2783 = vmatprep.mubr.bf16.mxu0 0
    %2784 = vmatmul.mubr.bf16.gmra.mxu0 %v2749
    %v2785 = vpop.f32.mrf.mxu0
    %v2786 = vadd.f32 0.0, %v2785
    %v2787 = vpop.f32.mrf.mxu0
    %v2788 = vpop.f32.mrf.mxu0
    %v2789 = vpop.f32.mrf.mxu0
    %2790 = vdwg.mxu0
    %v2791 = vsel %vm728, %v2485, -inf
    %2792 = vmax.xlane.f32.xlu0 %v2791
    %v2793 = vpop.xlane.xlu0 %2792
    %v2794 = vsel %vm728, %v2528, -inf
    %2795 = vmax.xlane.f32.xlu0 %v2794
    %v2796 = vpop.xlane.xlu0 %2795
    %v2797 = vsel %vm728, %v2571, -inf
    %2798 = vmax.xlane.f32.xlu0 %v2797
    %v2799 = vpop.xlane.xlu0 %2798
    %v2800 = vsel %vm728, %v2614, -inf
    %2801 = vmax.xlane.f32.xlu0 %v2800
    %v2802 = vpop.xlane.xlu0 %2801
    %v2803 = vsel %vm728, %v2657, -inf
    %2804 = vmax.xlane.f32.xlu0 %v2803
    %v2805 = vpop.xlane.xlu0 %2804
    %v2806 = vsel %vm728, %v2700, -inf
    %2807 = vmax.xlane.f32.xlu0 %v2806
    %v2808 = vpop.xlane.xlu0 %2807
    %v2809 = vsel %vm728, %v2743, -inf
    %2810 = vmax.xlane.f32.xlu0 %v2809
    %v2811 = vpop.xlane.xlu0 %2810
    %v2812 = vsel %vm728, %v2786, -inf
    %2813 = vmax.xlane.f32.xlu0 %v2812
    %v2814 = vpop.xlane.xlu0 %2813
    %v2815 = vsub.f32 %v2485, %v2793
    %v2816 = vsub.f32 %v2528, %v2796
    %v2817 = vsub.f32 %v2571, %v2799
    %v2818 = vsub.f32 %v2614, %v2802
    %v2819 = vsub.f32 %v2657, %v2805
    %v2820 = vsub.f32 %v2700, %v2808
    %v2821 = vsub.f32 %v2743, %v2811
    %v2822 = vsub.f32 %v2786, %v2814
    %v2823 = vmul.f32 %v2815, 1.442695
    %v2824 = vpow.pop %v2823
    %v2825 = vmul.f32 %v2816, 1.442695
    %v2826 = vpow.pop %v2825
    %v2827 = vmul.f32 %v2817, 1.442695
    %v2828 = vpow.pop %v2827
    %v2829 = vmul.f32 %v2818, 1.442695
    %v2830 = vpow.pop %v2829
    %v2831 = vmul.f32 %v2819, 1.442695
    %v2832 = vpow.pop %v2831
    %v2833 = vmul.f32 %v2820, 1.442695
    %v2834 = vpow.pop %v2833
    %v2835 = vmul.f32 %v2821, 1.442695
    %v2836 = vpow.pop %v2835
    %v2837 = vmul.f32 %v2822, 1.442695
    %v2838 = vpow.pop %v2837
    %v2839 = vsel %vm728, %v2824, 0.0
    %2840 = vadd.xlane.f32.xlu0 %v2839
    %v2841 = vpop.xlane.xlu0 %2840
    %v2842 = vsel %vm728, %v2826, 0.0
    %2843 = vadd.xlane.f32.xlu0 %v2842
    %v2844 = vpop.xlane.xlu0 %2843
    %v2845 = vsel %vm728, %v2828, 0.0
    %2846 = vadd.xlane.f32.xlu0 %v2845
    %v2847 = vpop.xlane.xlu0 %2846
    %v2848 = vsel %vm728, %v2830, 0.0
    %2849 = vadd.xlane.f32.xlu0 %v2848
    %v2850 = vpop.xlane.xlu0 %2849
    %v2851 = vsel %vm728, %v2832, 0.0
    %2852 = vadd.xlane.f32.xlu0 %v2851
    %v2853 = vpop.xlane.xlu0 %2852
    %v2854 = vsel %vm728, %v2834, 0.0
    %2855 = vadd.xlane.f32.xlu0 %v2854
    %v2856 = vpop.xlane.xlu0 %2855
    %v2857 = vsel %vm728, %v2836, 0.0
    %2858 = vadd.xlane.f32.xlu0 %v2857
    %v2859 = vpop.xlane.xlu0 %2858
    %v2860 = vsel %vm728, %v2838, 0.0
    %2861 = vadd.xlane.f32.xlu0 %v2860
    %v2862 = vpop.xlane.xlu0 %2861
    %v2863 = vrcp.pop %v2841
    %v2864 = vrcp.pop %v2844
    %v2865 = vrcp.pop %v2847
    %v2866 = vrcp.pop %v2850
    %v2867 = vrcp.pop %v2853
    %v2868 = vrcp.pop %v2856
    %v2869 = vrcp.pop %v2859
    %v2870 = vrcp.pop %v2862
    %v2871 = vpack.c.bf16 %v2824, %v2824
    %v2872 = vpack.c.bf16 %v2826, %v2826
    %v2873 = vpack.c.bf16 %v2828, %v2828
    %v2874 = vpack.c.bf16 %v2830, %v2830
    %v2875 = vpack.c.bf16 %v2832, %v2832
    %v2876 = vpack.c.bf16 %v2834, %v2834
    %v2877 = vpack.c.bf16 %v2836, %v2836
    %v2878 = vpack.c.bf16 %v2838, %v2838
    %v2880 = vsel %vm728, %v2871, 0
    %2882 = vmatprep.subr.bf16.mxu0 0
    %2883 = vmatpush1.bf16.msra.mxu0 0
    %2884 = vmatprep.subr.bf16.mxu0 0
    %2885 = vmatpush1.bf16.msra.mxu0 0
    %2886 = vmatprep.subr.bf16.mxu0 0
    %2887 = vmatpush1.bf16.msra.mxu0 0
    %2888 = vmatprep.subr.bf16.mxu0 0
    %2889 = vmatpush1.bf16.msra.mxu0 0
    %2890 = vmatprep.subr.bf16.mxu0 0
    %2891 = vmatpush1.bf16.msra.mxu0 0
    %2892 = vmatprep.subr.bf16.mxu0 0
    %2893 = vmatpush1.bf16.msra.mxu0 0
    %2894 = vmatprep.subr.bf16.mxu0 0
    %2895 = vmatpush1.bf16.msra.mxu0 0
    %2896 = vmatprep.subr.bf16.mxu0 0
    %2897 = vmatpush1.bf16.msra.mxu0 %v1395
    %2898 = vmatprep.subr.bf16.mxu0 0
    %2899 = vmatpush2.bf16.msra.mxu0 0
    %2900 = vmatprep.subr.bf16.mxu0 0
    %2901 = vmatpush2.bf16.msra.mxu0 0
    %2902 = vmatprep.subr.bf16.mxu0 0
    %2903 = vmatpush2.bf16.msra.mxu0 0
    %2904 = vmatprep.subr.bf16.mxu0 0
    %2905 = vmatpush2.bf16.msra.mxu0 0
    %2906 = vmatprep.subr.bf16.mxu0 0
    %2907 = vmatpush2.bf16.msra.mxu0 0
    %2908 = vmatprep.subr.bf16.mxu0 0
    %2909 = vmatpush2.bf16.msra.mxu0 0
    %2910 = vmatprep.subr.bf16.mxu0 0
    %2911 = vmatpush2.bf16.msra.mxu0 0
    %2912 = vmatprep.subr.bf16.mxu0 0
    %2913 = vmatpush2.bf16.msra.mxu0 0
    %2914 = vmatprep.mubr.bf16.mxu0 0
    %2915 = vmatmul.mubr.bf16.gmra.mxu0 %v2880
    %v2916 = vpop.f32.mrf.mxu0
    %v2917 = vadd.f32 0.0, %v2916
    %v2918 = vpop.f32.mrf.mxu0
    %v2919 = vpop.f32.mrf.mxu0
    %v2920 = vpop.f32.mrf.mxu0
    %2921 = vdwg.mxu0
    %v2923 = vsel %vm728, %v2872, 0
    %2925 = vmatprep.subr.bf16.mxu0 0
    %2926 = vmatpush1.bf16.msra.mxu0 0
    %2927 = vmatprep.subr.bf16.mxu0 0
    %2928 = vmatpush1.bf16.msra.mxu0 0
    %2929 = vmatprep.subr.bf16.mxu0 0
    %2930 = vmatpush1.bf16.msra.mxu0 0
    %2931 = vmatprep.subr.bf16.mxu0 0
    %2932 = vmatpush1.bf16.msra.mxu0 0
    %2933 = vmatprep.subr.bf16.mxu0 0
    %2934 = vmatpush1.bf16.msra.mxu0 0
    %2935 = vmatprep.subr.bf16.mxu0 0
    %2936 = vmatpush1.bf16.msra.mxu0 0
    %2937 = vmatprep.subr.bf16.mxu0 0
    %2938 = vmatpush1.bf16.msra.mxu0 0
    %2939 = vmatprep.subr.bf16.mxu0 0
    %2940 = vmatpush1.bf16.msra.mxu0 %v1396
    %2941 = vmatprep.subr.bf16.mxu0 0
    %2942 = vmatpush2.bf16.msra.mxu0 0
    %2943 = vmatprep.subr.bf16.mxu0 0
    %2944 = vmatpush2.bf16.msra.mxu0 0
    %2945 = vmatprep.subr.bf16.mxu0 0
    %2946 = vmatpush2.bf16.msra.mxu0 0
    %2947 = vmatprep.subr.bf16.mxu0 0
    %2948 = vmatpush2.bf16.msra.mxu0 0
    %2949 = vmatprep.subr.bf16.mxu0 0
    %2950 = vmatpush2.bf16.msra.mxu0 0
    %2951 = vmatprep.subr.bf16.mxu0 0
    %2952 = vmatpush2.bf16.msra.mxu0 0
    %2953 = vmatprep.subr.bf16.mxu0 0
    %2954 = vmatpush2.bf16.msra.mxu0 0
    %2955 = vmatprep.subr.bf16.mxu0 0
    %2956 = vmatpush2.bf16.msra.mxu0 0
    %2957 = vmatprep.mubr.bf16.mxu0 0
    %2958 = vmatmul.mubr.bf16.gmra.mxu0 %v2923
    %v2959 = vpop.f32.mrf.mxu0
    %v2960 = vadd.f32 0.0, %v2959
    %v2961 = vpop.f32.mrf.mxu0
    %v2962 = vpop.f32.mrf.mxu0
    %v2963 = vpop.f32.mrf.mxu0
    %2964 = vdwg.mxu0
    %v2966 = vsel %vm728, %v2873, 0
    %2968 = vmatprep.subr.bf16.mxu0 0
    %2969 = vmatpush1.bf16.msra.mxu0 0
    %2970 = vmatprep.subr.bf16.mxu0 0
    %2971 = vmatpush1.bf16.msra.mxu0 0
    %2972 = vmatprep.subr.bf16.mxu0 0
    %2973 = vmatpush1.bf16.msra.mxu0 0
    %2974 = vmatprep.subr.bf16.mxu0 0
    %2975 = vmatpush1.bf16.msra.mxu0 0
    %2976 = vmatprep.subr.bf16.mxu0 0
    %2977 = vmatpush1.bf16.msra.mxu0 0
    %2978 = vmatprep.subr.bf16.mxu0 0
    %2979 = vmatpush1.bf16.msra.mxu0 0
    %2980 = vmatprep.subr.bf16.mxu0 0
    %2981 = vmatpush1.bf16.msra.mxu0 0
    %2982 = vmatprep.subr.bf16.mxu0 0
    %2983 = vmatpush1.bf16.msra.mxu0 %v1397
    %2984 = vmatprep.subr.bf16.mxu0 0
    %2985 = vmatpush2.bf16.msra.mxu0 0
    %2986 = vmatprep.subr.bf16.mxu0 0
    %2987 = vmatpush2.bf16.msra.mxu0 0
    %2988 = vmatprep.subr.bf16.mxu0 0
    %2989 = vmatpush2.bf16.msra.mxu0 0
    %2990 = vmatprep.subr.bf16.mxu0 0
    %2991 = vmatpush2.bf16.msra.mxu0 0
    %2992 = vmatprep.subr.bf16.mxu0 0
    %2993 = vmatpush2.bf16.msra.mxu0 0
    %2994 = vmatprep.subr.bf16.mxu0 0
    %2995 = vmatpush2.bf16.msra.mxu0 0
    %2996 = vmatprep.subr.bf16.mxu0 0
    %2997 = vmatpush2.bf16.msra.mxu0 0
    %2998 = vmatprep.subr.bf16.mxu0 0
    %2999 = vmatpush2.bf16.msra.mxu0 0
    %3000 = vmatprep.mubr.bf16.mxu0 0
    %3001 = vmatmul.mubr.bf16.gmra.mxu0 %v2966
    %v3002 = vpop.f32.mrf.mxu0
    %v3003 = vadd.f32 0.0, %v3002
    %v3004 = vpop.f32.mrf.mxu0
    %v3005 = vpop.f32.mrf.mxu0
    %v3006 = vpop.f32.mrf.mxu0
    %3007 = vdwg.mxu0
    %v3009 = vsel %vm728, %v2874, 0
    %3011 = vmatprep.subr.bf16.mxu0 0
    %3012 = vmatpush1.bf16.msra.mxu0 0
    %3013 = vmatprep.subr.bf16.mxu0 0
    %3014 = vmatpush1.bf16.msra.mxu0 0
    %3015 = vmatprep.subr.bf16.mxu0 0
    %3016 = vmatpush1.bf16.msra.mxu0 0
    %3017 = vmatprep.subr.bf16.mxu0 0
    %3018 = vmatpush1.bf16.msra.mxu0 0
    %3019 = vmatprep.subr.bf16.mxu0 0
    %3020 = vmatpush1.bf16.msra.mxu0 0
    %3021 = vmatprep.subr.bf16.mxu0 0
    %3022 = vmatpush1.bf16.msra.mxu0 0
    %3023 = vmatprep.subr.bf16.mxu0 0
    %3024 = vmatpush1.bf16.msra.mxu0 0
    %3025 = vmatprep.subr.bf16.mxu0 0
    %3026 = vmatpush1.bf16.msra.mxu0 %v1398
    %3027 = vmatprep.subr.bf16.mxu0 0
    %3028 = vmatpush2.bf16.msra.mxu0 0
    %3029 = vmatprep.subr.bf16.mxu0 0
    %3030 = vmatpush2.bf16.msra.mxu0 0
    %3031 = vmatprep.subr.bf16.mxu0 0
    %3032 = vmatpush2.bf16.msra.mxu0 0
    %3033 = vmatprep.subr.bf16.mxu0 0
    %3034 = vmatpush2.bf16.msra.mxu0 0
    %3035 = vmatprep.subr.bf16.mxu0 0
    %3036 = vmatpush2.bf16.msra.mxu0 0
    %3037 = vmatprep.subr.bf16.mxu0 0
    %3038 = vmatpush2.bf16.msra.mxu0 0
    %3039 = vmatprep.subr.bf16.mxu0 0
    %3040 = vmatpush2.bf16.msra.mxu0 0
    %3041 = vmatprep.subr.bf16.mxu0 0
    %3042 = vmatpush2.bf16.msra.mxu0 0
    %3043 = vmatprep.mubr.bf16.mxu0 0
    %3044 = vmatmul.mubr.bf16.gmra.mxu0 %v3009
    %v3045 = vpop.f32.mrf.mxu0
    %v3046 = vadd.f32 0.0, %v3045
    %v3047 = vpop.f32.mrf.mxu0
    %v3048 = vpop.f32.mrf.mxu0
    %v3049 = vpop.f32.mrf.mxu0
    %3050 = vdwg.mxu0
    %v3052 = vsel %vm728, %v2875, 0
    %3054 = vmatprep.subr.bf16.mxu0 0
    %3055 = vmatpush1.bf16.msra.mxu0 0
    %3056 = vmatprep.subr.bf16.mxu0 0
    %3057 = vmatpush1.bf16.msra.mxu0 0
    %3058 = vmatprep.subr.bf16.mxu0 0
    %3059 = vmatpush1.bf16.msra.mxu0 0
    %3060 = vmatprep.subr.bf16.mxu0 0
    %3061 = vmatpush1.bf16.msra.mxu0 0
    %3062 = vmatprep.subr.bf16.mxu0 0
    %3063 = vmatpush1.bf16.msra.mxu0 0
    %3064 = vmatprep.subr.bf16.mxu0 0
    %3065 = vmatpush1.bf16.msra.mxu0 0
    %3066 = vmatprep.subr.bf16.mxu0 0
    %3067 = vmatpush1.bf16.msra.mxu0 0
    %3068 = vmatprep.subr.bf16.mxu0 0
    %3069 = vmatpush1.bf16.msra.mxu0 %v1399
    %3070 = vmatprep.subr.bf16.mxu0 0
    %3071 = vmatpush2.bf16.msra.mxu0 0
    %3072 = vmatprep.subr.bf16.mxu0 0
    %3073 = vmatpush2.bf16.msra.mxu0 0
    %3074 = vmatprep.subr.bf16.mxu0 0
    %3075 = vmatpush2.bf16.msra.mxu0 0
    %3076 = vmatprep.subr.bf16.mxu0 0
    %3077 = vmatpush2.bf16.msra.mxu0 0
    %3078 = vmatprep.subr.bf16.mxu0 0
    %3079 = vmatpush2.bf16.msra.mxu0 0
    %3080 = vmatprep.subr.bf16.mxu0 0
    %3081 = vmatpush2.bf16.msra.mxu0 0
    %3082 = vmatprep.subr.bf16.mxu0 0
    %3083 = vmatpush2.bf16.msra.mxu0 0
    %3084 = vmatprep.subr.bf16.mxu0 0
    %3085 = vmatpush2.bf16.msra.mxu0 0
    %3086 = vmatprep.mubr.bf16.mxu0 0
    %3087 = vmatmul.mubr.bf16.gmra.mxu0 %v3052
    %v3088 = vpop.f32.mrf.mxu0
    %v3089 = vadd.f32 0.0, %v3088
    %v3090 = vpop.f32.mrf.mxu0
    %v3091 = vpop.f32.mrf.mxu0
    %v3092 = vpop.f32.mrf.mxu0
    %3093 = vdwg.mxu0
    %v3095 = vsel %vm728, %v2876, 0
    %3097 = vmatprep.subr.bf16.mxu0 0
    %3098 = vmatpush1.bf16.msra.mxu0 0
    %3099 = vmatprep.subr.bf16.mxu0 0
    %3100 = vmatpush1.bf16.msra.mxu0 0
    %3101 = vmatprep.subr.bf16.mxu0 0
    %3102 = vmatpush1.bf16.msra.mxu0 0
    %3103 = vmatprep.subr.bf16.mxu0 0
    %3104 = vmatpush1.bf16.msra.mxu0 0
    %3105 = vmatprep.subr.bf16.mxu0 0
    %3106 = vmatpush1.bf16.msra.mxu0 0
    %3107 = vmatprep.subr.bf16.mxu0 0
    %3108 = vmatpush1.bf16.msra.mxu0 0
    %3109 = vmatprep.subr.bf16.mxu0 0
    %3110 = vmatpush1.bf16.msra.mxu0 0
    %3111 = vmatprep.subr.bf16.mxu0 0
    %3112 = vmatpush1.bf16.msra.mxu0 %v1400
    %3113 = vmatprep.subr.bf16.mxu0 0
    %3114 = vmatpush2.bf16.msra.mxu0 0
    %3115 = vmatprep.subr.bf16.mxu0 0
    %3116 = vmatpush2.bf16.msra.mxu0 0
    %3117 = vmatprep.subr.bf16.mxu0 0
    %3118 = vmatpush2.bf16.msra.mxu0 0
    %3119 = vmatprep.subr.bf16.mxu0 0
    %3120 = vmatpush2.bf16.msra.mxu0 0
    %3121 = vmatprep.subr.bf16.mxu0 0
    %3122 = vmatpush2.bf16.msra.mxu0 0
    %3123 = vmatprep.subr.bf16.mxu0 0
    %3124 = vmatpush2.bf16.msra.mxu0 0
    %3125 = vmatprep.subr.bf16.mxu0 0
    %3126 = vmatpush2.bf16.msra.mxu0 0
    %3127 = vmatprep.subr.bf16.mxu0 0
    %3128 = vmatpush2.bf16.msra.mxu0 0
    %3129 = vmatprep.mubr.bf16.mxu0 0
    %3130 = vmatmul.mubr.bf16.gmra.mxu0 %v3095
    %v3131 = vpop.f32.mrf.mxu0
    %v3132 = vadd.f32 0.0, %v3131
    %v3133 = vpop.f32.mrf.mxu0
    %v3134 = vpop.f32.mrf.mxu0
    %v3135 = vpop.f32.mrf.mxu0
    %3136 = vdwg.mxu0
    %v3138 = vsel %vm728, %v2877, 0
    %3140 = vmatprep.subr.bf16.mxu0 0
    %3141 = vmatpush1.bf16.msra.mxu0 0
    %3142 = vmatprep.subr.bf16.mxu0 0
    %3143 = vmatpush1.bf16.msra.mxu0 0
    %3144 = vmatprep.subr.bf16.mxu0 0
    %3145 = vmatpush1.bf16.msra.mxu0 0
    %3146 = vmatprep.subr.bf16.mxu0 0
    %3147 = vmatpush1.bf16.msra.mxu0 0
    %3148 = vmatprep.subr.bf16.mxu0 0
    %3149 = vmatpush1.bf16.msra.mxu0 0
    %3150 = vmatprep.subr.bf16.mxu0 0
    %3151 = vmatpush1.bf16.msra.mxu0 0
    %3152 = vmatprep.subr.bf16.mxu0 0
    %3153 = vmatpush1.bf16.msra.mxu0 0
    %3154 = vmatprep.subr.bf16.mxu0 0
    %3155 = vmatpush1.bf16.msra.mxu0 %v1401
    %3156 = vmatprep.subr.bf16.mxu0 0
    %3157 = vmatpush2.bf16.msra.mxu0 0
    %3158 = vmatprep.subr.bf16.mxu0 0
    %3159 = vmatpush2.bf16.msra.mxu0 0
    %3160 = vmatprep.subr.bf16.mxu0 0
    %3161 = vmatpush2.bf16.msra.mxu0 0
    %3162 = vmatprep.subr.bf16.mxu0 0
    %3163 = vmatpush2.bf16.msra.mxu0 0
    %3164 = vmatprep.subr.bf16.mxu0 0
    %3165 = vmatpush2.bf16.msra.mxu0 0
    %3166 = vmatprep.subr.bf16.mxu0 0
    %3167 = vmatpush2.bf16.msra.mxu0 0
    %3168 = vmatprep.subr.bf16.mxu0 0
    %3169 = vmatpush2.bf16.msra.mxu0 0
    %3170 = vmatprep.subr.bf16.mxu0 0
    %3171 = vmatpush2.bf16.msra.mxu0 0
    %3172 = vmatprep.mubr.bf16.mxu0 0
    %3173 = vmatmul.mubr.bf16.gmra.mxu0 %v3138
    %v3174 = vpop.f32.mrf.mxu0
    %v3175 = vadd.f32 0.0, %v3174
    %v3176 = vpop.f32.mrf.mxu0
    %v3177 = vpop.f32.mrf.mxu0
    %v3178 = vpop.f32.mrf.mxu0
    %3179 = vdwg.mxu0
    %v3181 = vsel %vm728, %v2878, 0
    %3183 = vmatprep.subr.bf16.mxu0 0
    %3184 = vmatpush1.bf16.msra.mxu0 0
    %3185 = vmatprep.subr.bf16.mxu0 0
    %3186 = vmatpush1.bf16.msra.mxu0 0
    %3187 = vmatprep.subr.bf16.mxu0 0
    %3188 = vmatpush1.bf16.msra.mxu0 0
    %3189 = vmatprep.subr.bf16.mxu0 0
    %3190 = vmatpush1.bf16.msra.mxu0 0
    %3191 = vmatprep.subr.bf16.mxu0 0
    %3192 = vmatpush1.bf16.msra.mxu0 0
    %3193 = vmatprep.subr.bf16.mxu0 0
    %3194 = vmatpush1.bf16.msra.mxu0 0
    %3195 = vmatprep.subr.bf16.mxu0 0
    %3196 = vmatpush1.bf16.msra.mxu0 0
    %3197 = vmatprep.subr.bf16.mxu0 0
    %3198 = vmatpush1.bf16.msra.mxu0 %v1402
    %3199 = vmatprep.subr.bf16.mxu0 0
    %3200 = vmatpush2.bf16.msra.mxu0 0
    %3201 = vmatprep.subr.bf16.mxu0 0
    %3202 = vmatpush2.bf16.msra.mxu0 0
    %3203 = vmatprep.subr.bf16.mxu0 0
    %3204 = vmatpush2.bf16.msra.mxu0 0
    %3205 = vmatprep.subr.bf16.mxu0 0
    %3206 = vmatpush2.bf16.msra.mxu0 0
    %3207 = vmatprep.subr.bf16.mxu0 0
    %3208 = vmatpush2.bf16.msra.mxu0 0
    %3209 = vmatprep.subr.bf16.mxu0 0
    %3210 = vmatpush2.bf16.msra.mxu0 0
    %3211 = vmatprep.subr.bf16.mxu0 0
    %3212 = vmatpush2.bf16.msra.mxu0 0
    %3213 = vmatprep.subr.bf16.mxu0 0
    %3214 = vmatpush2.bf16.msra.mxu0 0
    %3215 = vmatprep.mubr.bf16.mxu0 0
    %3216 = vmatmul.mubr.bf16.gmra.mxu0 %v3181
    %v3217 = vpop.f32.mrf.mxu0
    %v3218 = vadd.f32 0.0, %v3217
    %v3219 = vpop.f32.mrf.mxu0
    %v3220 = vpop.f32.mrf.mxu0
    %v3221 = vpop.f32.mrf.mxu0
    %3222 = vdwg.mxu0
    %v3223 = vmul.f32 %v2917, %v2863
    %v3224 = vmul.f32 %v2960, %v2864
    %v3225 = vmul.f32 %v3003, %v2865
    %v3226 = vmul.f32 %v3046, %v2866
    %v3227 = vmul.f32 %v3089, %v2867
    %v3228 = vmul.f32 %v3132, %v2868
    %v3229 = vmul.f32 %v3175, %v2869
    %v3230 = vmul.f32 %v3218, %v2870
    %v3231 = vpack.c.bf16 %v3224, %v3223
    %v3232 = vpack.c.bf16 %v3226, %v3225
    %v3233 = vpack.c.bf16 %v3228, %v3227
    %v3234 = vpack.c.bf16 %v3230, %v3229
    %v3235 = vld [vmem:[%s9] sm:$0xf]
    %v3236 = vld [vmem:[%s9 + $0x4] sm:$0xf]
    %v3237 = vld [vmem:[%s9 + $0x8] sm:$0xf]
    %v3238 = vld [vmem:[%s9 + $0xc] sm:$0xf]
    %v3239 = vld [vmem:[%s9 + $0x10] sm:$0xf]
    %v3240 = vld [vmem:[%s9 + $0x14] sm:$0xf]
    %v3241 = vld [vmem:[%s9 + $0x18] sm:$0xf]
    %v3242 = vld [vmem:[%s9 + $0x1c] sm:$0xf]
    %v3245 = vunpack.c.l.b16 %v3235
    %v3246 = vunpack.c.l.b16 %v3236
    %v3247 = vpack.c.b16 %v3246, %v3245
    %v3250 = vsel %vm728, %v3231, 0
    %3252 = vmatprep.subr.bf16.mxu0 0
    %3253 = vmatpush1.bf16.msra.mxu0 0
    %3254 = vmatprep.subr.bf16.mxu0 0
    %3255 = vmatpush1.bf16.msra.mxu0 0
    %3256 = vmatprep.subr.bf16.mxu0 0
    %3257 = vmatpush1.bf16.msra.mxu0 0
    %3258 = vmatprep.subr.bf16.mxu0 0
    %3259 = vmatpush1.bf16.msra.mxu0 0
    %3260 = vmatprep.subr.bf16.mxu0 0
    %3261 = vmatpush1.bf16.msra.mxu0 0
    %3262 = vmatprep.subr.bf16.mxu0 0
    %3263 = vmatpush1.bf16.msra.mxu0 0
    %3264 = vmatprep.subr.bf16.mxu0 0
    %3265 = vmatpush1.bf16.msra.mxu0 0
    %3266 = vmatprep.subr.bf16.mxu0 0
    %3267 = vmatpush1.bf16.msra.mxu0 %v3247
    %3268 = vmatprep.subr.bf16.mxu0 0
    %3269 = vmatpush2.bf16.msra.mxu0 0
    %3270 = vmatprep.subr.bf16.mxu0 0
    %3271 = vmatpush2.bf16.msra.mxu0 0
    %3272 = vmatprep.subr.bf16.mxu0 0
    %3273 = vmatpush2.bf16.msra.mxu0 0
    %3274 = vmatprep.subr.bf16.mxu0 0
    %3275 = vmatpush2.bf16.msra.mxu0 0
    %3276 = vmatprep.subr.bf16.mxu0 0
    %3277 = vmatpush2.bf16.msra.mxu0 0
    %3278 = vmatprep.subr.bf16.mxu0 0
    %3279 = vmatpush2.bf16.msra.mxu0 0
    %3280 = vmatprep.subr.bf16.mxu0 0
    %3281 = vmatpush2.bf16.msra.mxu0 0
    %3282 = vmatprep.subr.bf16.mxu0 0
    %3283 = vmatpush2.bf16.msra.mxu0 0
    %3284 = vmatprep.mubr.bf16.mxu0 0
    %3285 = vmatmul.mubr.bf16.gmra.mxu0 %v3250
    %v3286 = vpop.f32.mrf.mxu0
    %v3287 = vadd.f32 0.0, %v3286
    %v3288 = vpop.f32.mrf.mxu0
    %v3289 = vpop.f32.mrf.mxu0
    %v3290 = vadd.f32 0.0, %v3289
    %v3291 = vpop.f32.mrf.mxu0
    %3292 = vdwg.mxu0
    %v3295 = vunpack.c.l.b16 %v3237
    %v3296 = vunpack.c.l.b16 %v3238
    %v3297 = vpack.c.b16 %v3296, %v3295
    %v3300 = vsel %vm728, %v3232, 0
    %3302 = vmatprep.subr.bf16.mxu0 0
    %3303 = vmatpush1.bf16.msra.mxu0 0
    %3304 = vmatprep.subr.bf16.mxu0 0
    %3305 = vmatpush1.bf16.msra.mxu0 0
    %3306 = vmatprep.subr.bf16.mxu0 0
    %3307 = vmatpush1.bf16.msra.mxu0 0
    %3308 = vmatprep.subr.bf16.mxu0 0
    %3309 = vmatpush1.bf16.msra.mxu0 0
    %3310 = vmatprep.subr.bf16.mxu0 0
    %3311 = vmatpush1.bf16.msra.mxu0 0
    %3312 = vmatprep.subr.bf16.mxu0 0
    %3313 = vmatpush1.bf16.msra.mxu0 0
    %3314 = vmatprep.subr.bf16.mxu0 0
    %3315 = vmatpush1.bf16.msra.mxu0 0
    %3316 = vmatprep.subr.bf16.mxu0 0
    %3317 = vmatpush1.bf16.msra.mxu0 %v3297
    %3318 = vmatprep.subr.bf16.mxu0 0
    %3319 = vmatpush2.bf16.msra.mxu0 0
    %3320 = vmatprep.subr.bf16.mxu0 0
    %3321 = vmatpush2.bf16.msra.mxu0 0
    %3322 = vmatprep.subr.bf16.mxu0 0
    %3323 = vmatpush2.bf16.msra.mxu0 0
    %3324 = vmatprep.subr.bf16.mxu0 0
    %3325 = vmatpush2.bf16.msra.mxu0 0
    %3326 = vmatprep.subr.bf16.mxu0 0
    %3327 = vmatpush2.bf16.msra.mxu0 0
    %3328 = vmatprep.subr.bf16.mxu0 0
    %3329 = vmatpush2.bf16.msra.mxu0 0
    %3330 = vmatprep.subr.bf16.mxu0 0
    %3331 = vmatpush2.bf16.msra.mxu0 0
    %3332 = vmatprep.subr.bf16.mxu0 0
    %3333 = vmatpush2.bf16.msra.mxu0 0
    %3334 = vmatprep.mubr.bf16.mxu0 0
    %3335 = vmatmul.mubr.bf16.gmra.mxu0 %v3300
    %v3336 = vpop.f32.mrf.mxu0
    %v3337 = vadd.f32 0.0, %v3336
    %v3338 = vpop.f32.mrf.mxu0
    %v3339 = vpop.f32.mrf.mxu0
    %v3340 = vadd.f32 0.0, %v3339
    %v3341 = vpop.f32.mrf.mxu0
    %3342 = vdwg.mxu0
    %v3345 = vunpack.c.l.b16 %v3239
    %v3346 = vunpack.c.l.b16 %v3240
    %v3347 = vpack.c.b16 %v3346, %v3345
    %v3350 = vsel %vm728, %v3233, 0
    %3352 = vmatprep.subr.bf16.mxu0 0
    %3353 = vmatpush1.bf16.msra.mxu0 0
    %3354 = vmatprep.subr.bf16.mxu0 0
    %3355 = vmatpush1.bf16.msra.mxu0 0
    %3356 = vmatprep.subr.bf16.mxu0 0
    %3357 = vmatpush1.bf16.msra.mxu0 0
    %3358 = vmatprep.subr.bf16.mxu0 0
    %3359 = vmatpush1.bf16.msra.mxu0 0
    %3360 = vmatprep.subr.bf16.mxu0 0
    %3361 = vmatpush1.bf16.msra.mxu0 0
    %3362 = vmatprep.subr.bf16.mxu0 0
    %3363 = vmatpush1.bf16.msra.mxu0 0
    %3364 = vmatprep.subr.bf16.mxu0 0
    %3365 = vmatpush1.bf16.msra.mxu0 0
    %3366 = vmatprep.subr.bf16.mxu0 0
    %3367 = vmatpush1.bf16.msra.mxu0 %v3347
    %3368 = vmatprep.subr.bf16.mxu0 0
    %3369 = vmatpush2.bf16.msra.mxu0 0
    %3370 = vmatprep.subr.bf16.mxu0 0
    %3371 = vmatpush2.bf16.msra.mxu0 0
    %3372 = vmatprep.subr.bf16.mxu0 0
    %3373 = vmatpush2.bf16.msra.mxu0 0
    %3374 = vmatprep.subr.bf16.mxu0 0
    %3375 = vmatpush2.bf16.msra.mxu0 0
    %3376 = vmatprep.subr.bf16.mxu0 0
    %3377 = vmatpush2.bf16.msra.mxu0 0
    %3378 = vmatprep.subr.bf16.mxu0 0
    %3379 = vmatpush2.bf16.msra.mxu0 0
    %3380 = vmatprep.subr.bf16.mxu0 0
    %3381 = vmatpush2.bf16.msra.mxu0 0
    %3382 = vmatprep.subr.bf16.mxu0 0
    %3383 = vmatpush2.bf16.msra.mxu0 0
    %3384 = vmatprep.mubr.bf16.mxu0 0
    %3385 = vmatmul.mubr.bf16.gmra.mxu0 %v3350
    %v3386 = vpop.f32.mrf.mxu0
    %v3387 = vadd.f32 0.0, %v3386
    %v3388 = vpop.f32.mrf.mxu0
    %v3389 = vpop.f32.mrf.mxu0
    %v3390 = vadd.f32 0.0, %v3389
    %v3391 = vpop.f32.mrf.mxu0
    %3392 = vdwg.mxu0
    %v3395 = vunpack.c.l.b16 %v3241
    %v3396 = vunpack.c.l.b16 %v3242
    %v3397 = vpack.c.b16 %v3396, %v3395
    %v3400 = vsel %vm728, %v3234, 0
    %3402 = vmatprep.subr.bf16.mxu0 0
    %3403 = vmatpush1.bf16.msra.mxu0 0
    %3404 = vmatprep.subr.bf16.mxu0 0
    %3405 = vmatpush1.bf16.msra.mxu0 0
    %3406 = vmatprep.subr.bf16.mxu0 0
    %3407 = vmatpush1.bf16.msra.mxu0 0
    %3408 = vmatprep.subr.bf16.mxu0 0
    %3409 = vmatpush1.bf16.msra.mxu0 0
    %3410 = vmatprep.subr.bf16.mxu0 0
    %3411 = vmatpush1.bf16.msra.mxu0 0
    %3412 = vmatprep.subr.bf16.mxu0 0
    %3413 = vmatpush1.bf16.msra.mxu0 0
    %3414 = vmatprep.subr.bf16.mxu0 0
    %3415 = vmatpush1.bf16.msra.mxu0 0
    %3416 = vmatprep.subr.bf16.mxu0 0
    %3417 = vmatpush1.bf16.msra.mxu0 %v3397
    %3418 = vmatprep.subr.bf16.mxu0 0
    %3419 = vmatpush2.bf16.msra.mxu0 0
    %3420 = vmatprep.subr.bf16.mxu0 0
    %3421 = vmatpush2.bf16.msra.mxu0 0
    %3422 = vmatprep.subr.bf16.mxu0 0
    %3423 = vmatpush2.bf16.msra.mxu0 0
    %3424 = vmatprep.subr.bf16.mxu0 0
    %3425 = vmatpush2.bf16.msra.mxu0 0
    %3426 = vmatprep.subr.bf16.mxu0 0
    %3427 = vmatpush2.bf16.msra.mxu0 0
    %3428 = vmatprep.subr.bf16.mxu0 0
    %3429 = vmatpush2.bf16.msra.mxu0 0
    %3430 = vmatprep.subr.bf16.mxu0 0
    %3431 = vmatpush2.bf16.msra.mxu0 0
    %3432 = vmatprep.subr.bf16.mxu0 0
    %3433 = vmatpush2.bf16.msra.mxu0 0
    %3434 = vmatprep.mubr.bf16.mxu0 0
    %3435 = vmatmul.mubr.bf16.gmra.mxu0 %v3400
    %v3436 = vpop.f32.mrf.mxu0
    %v3437 = vadd.f32 0.0, %v3436
    %v3438 = vpop.f32.mrf.mxu0
    %v3439 = vpop.f32.mrf.mxu0
    %v3440 = vadd.f32 0.0, %v3439
    %v3441 = vpop.f32.mrf.mxu0
    %3442 = vdwg.mxu0
    %v3443 = vadd.f32 %v3287, %v3337
    %v3444 = vadd.f32 %v3443, %v3387
    %v3445 = vadd.f32 %v3444, %v3437
    %v3446 = vadd.f32 %v3290, %v3340
    %v3447 = vadd.f32 %v3446, %v3390
    %v3448 = vadd.f32 %v3447, %v3440
    %3449 = vst [vmem:[#allocation4 + $0x8] sm:$0xff] %v3445
    %3450 = vst [vmem:[#allocation4 + $0x18] sm:$0xff] %v3448
    // Predicated region
    $region42: #{tpu_custom_call.1} parent=1 // pred_check
      _
    $region43: #{tpu_custom_call.1} parent=1 // pred_check_branch
      %3452 = sbr.rel (0) target = $region45
    $region44: #{tpu_custom_call.1} parent=1 // pred_region
      %s3454 = ssub.s32 512, 512
      %3455 = vsyncadd [#allocation5], %s3454
      %s3456 = sshll.u32 [#allocation4], 4
      %s3457 = int_to_ptr.vmem [resolvable:$true] %s3456
      %3462 = dma.vmem_to_hbm [thread:$0]  %s3457, 512, %s10, [#allocation5], 128, 128, 8
    $region45: #{tpu_custom_call.1} parent=1 // pred_fallthru
      _
    // Predicated region
    $region46: #{tpu_custom_call.1} parent=1 // pred_check
      _
    $region47: #{tpu_custom_call.1} parent=1 // pred_check_branch
      %3464 = sbr.rel (0) target = $region49
    $region48: #{tpu_custom_call.1} parent=1 // pred_region
      %3465 = dma.done [#allocation5], 512
    $region49: #{tpu_custom_call.1} parent=1 // pred_fallthru
      _
    %3466 = vsyncpa [#allocation5], 1

</llo_original>
